<compile_context>
chip_gen: v5e
topology: v5e:2x2
jax: 0.10.0
libtpu: 0.0.40
codegen_flags: <defaults>
</compile_context>

<pallas_src>
import jax
import jax.numpy as jnp
from jax.experimental import pallas as pl
from jax.experimental.pallas import tpu as pltpu


def _zero_halo(ref, zrow, zcol):
    """Zero the 1-pixel spatial halo of a (BT, H+2, W+2, C) staging scratch.

    Scratch is uninitialized at kernel entry and the batch grid axis may be
    sharded across TensorCores, so there is no safe "first iteration only" hook;
    re-zeroing the halo each step is O((H+W)*C) per buffer vs the O(H*W*C)
    interior write, i.e. cheap. The zero constants are built once per step and
    reused for all eight border stores.
    """
    _, hp, wp, _ = ref.shape
    ref[:, 0:1, :, :] = zrow
    ref[:, hp - 1:hp, :, :] = zrow
    ref[:, :, 0:1, :] = zcol
    ref[:, :, wp - 1:wp, :] = zcol


def _conv3x3_acc(src_ref, w_ref, H, W, C):
    """3x3 conv (stride 1) from a zero-haloed (BT, H+2, W+2, C) staging ref.

    Direct tap accumulation: 9 accumulating K=C MXU matmuls over shifted views
    of src_ref — no materialized im2col patch buffer. Returns (M, Cout) f32.
    """
    BT = src_ref.shape[0]
    M = BT * H * W
    acc = None
    for dy in range(3):
        for dx in range(3):
            tap = src_ref[:, dy:dy + H, dx:dx + W, :].reshape(M, C)
            part = jnp.dot(tap, w_ref[dy * 3 + dx],
                           preferred_element_type=jnp.float32)
            acc = part if acc is None else acc + part
    # TODO(synk): realize the dx = +/-1 shifts with pltpu.roll (XLU slot) plus an
    # edge mask to avoid sublane-shifted loads, which matters most on v5e.
    return acc


def residual_block_kernel(x_ref, w1_ref, w2_ref, out_ref, xp_ref, hp_ref):
    # x_ref  : (BT, H, W, Cin)       input batch tile (unpadded)
    # w1_ref : (9, Cin, Cout)        conv1 weights, tap-major (t = 3*kh + kw)
    # w2_ref : (9, Cout, Cout)       conv2 weights, tap-major
    # out_ref: (BT, H, W, Cout)
    # xp_ref : (BT, H+2, W+2, Cin)   padded staging for conv1 input (compute dtype)
    # hp_ref : (BT, H+2, W+2, Cout)  padded staging for conv2 input (compute dtype)
    BT, H, W, Cin = x_ref.shape
    Cout = out_ref.shape[3]
    M = BT * H * W
    cdt = w1_ref.dtype   # MXU operand dtype (bf16 fast path / f32 exact path)

    zrow = jnp.zeros((BT, 1, W + 2, Cin), cdt)
    zcol = jnp.zeros((BT, H + 2, 1, Cin), cdt)
    _zero_halo(xp_ref, zrow, zcol)
    _zero_halo(hp_ref, zrow, zcol)          # Cin == Cout (identity residual)

    # ---- conv1: 3x3 / stride 1 / pad 1 / no bias ----
    xp_ref[:, 1:H + 1, 1:W + 1, :] = x_ref[...].astype(cdt)
    h = _conv3x3_acc(xp_ref, w1_ref, H, W, Cin)              # (M, Cout) f32

    # ---- conv2 (no ReLU in between, matching the reference module) ----
    hp_ref[:, 1:H + 1, 1:W + 1, :] = h.reshape(BT, H, W, Cout).astype(cdt)
    o = _conv3x3_acc(hp_ref, w2_ref, H, W, Cout)             # (M, Cout) f32

    # ---- identity residual + ReLU, in f32 ----
    o = o + x_ref[...].reshape(M, Cin).astype(jnp.float32)
    out_ref[...] = jnp.maximum(o, 0.0).reshape(BT, H, W, Cout).astype(out_ref.dtype)
    # TODO(synk): batch_norm / dropout / downsample branches are disabled in the
    # default module config and are not implemented here.


def _vmem_capacity_bytes():
    try:
        cap = int(pltpu.get_tpu_info().vmem_capacity_bytes)
        if cap > 0:
            return cap
    except Exception:
        pass
    return 64 * 1024 * 1024          # conservative (v7x-sized) fallback


def residual_block_nhwc(x_nhwc, w1_oihw, w2_oihw, *,
                        compute_dtype=jnp.bfloat16, batch_tile=None):
    """relu(conv2(conv1(x)) + x) on NHWC activations (no layout round trips).

    compute_dtype=jnp.bfloat16 (default): bf16 MXU operands / staging with f32
    accumulation and f32 residual math. Pass jnp.float32 for exact parity with
    the PyTorch module.
    """
    N, H, W, Cin = x_nhwc.shape
    Cout = w1_oihw.shape[0]
    assert Cin == Cout, "identity residual requires in_channels == out_channels"
    assert w1_oihw.shape == (Cout, Cin, 3, 3) and w2_oihw.shape == (Cout, Cout, 3, 3)

    cdt = jnp.dtype(compute_dtype)
    out_dtype = x_nhwc.dtype
    # Casting activations in the wrapper halves HBM->VMEM DMA bytes for x on the
    # bf16 path; the residual then uses the rounded values (documented tolerance).
    x_in = x_nhwc if x_nhwc.dtype == cdt else x_nhwc.astype(cdt)

    # OIHW -> (kh, kw, cin, cout) -> (9, cin, cout): tap index t = 3*kh + kw
    # matches the in-kernel shifted-view order (cin on the contraction axis).
    w1 = jnp.transpose(w1_oihw, (2, 3, 1, 0)).reshape(9, Cin, Cout).astype(cdt)
    w2 = jnp.transpose(w2_oihw, (2, 3, 1, 0)).reshape(9, Cout, Cout).astype(cdt)

    in_isz = jnp.dtype(x_in.dtype).itemsize
    out_isz = jnp.dtype(out_dtype).itemsize
    c_isz = cdt.itemsize

    def step_vmem_bytes(bt):
        blk_in = 2 * bt * H * W * Cin * in_isz                # double-buffered in
        blk_out = 2 * bt * H * W * Cout * out_isz             # double-buffered out
        wts = 2 * 9 * (Cin + Cout) * Cout * c_isz
        stage = bt * (H + 2) * (W + 2) * (Cin + Cout) * c_isz  # xp + hp scratch
        live = 3 * bt * H * W * Cout * 4                      # f32 partial sums / taps
        return blk_in + blk_out + wts + stage + live

    phys = _vmem_capacity_bytes()
    if batch_tile is None:
        budget = phys // 2                                    # compiler headroom
        divisors = [d for d in range(1, N + 1) if N % d == 0]
        fitting = [d for d in divisors if d <= 8 and step_vmem_bytes(d) <= budget]
        bt = max(fitting) if fitting else 1
        # Keep >= 2 grid steps when possible so v7x's 2 TensorCores both get work.
        while N // bt < 2 and bt > 1:
            bt = max(d for d in divisors if d < bt)
    else:
        bt = batch_tile
    assert N % bt == 0
    # TODO(synk): for images too large even at bt=1 (v7x, 64 MiB VMEM), add a
    # spatial row-block grid axis with a manual-DMA 1-row halo.

    vmem_limit = int(min(0.85 * phys,
                         max(2 * step_vmem_bytes(bt), 32 * 1024 * 1024)))

    flops = 2 * N * H * W * 9 * (Cin * Cout + Cout * Cout) + 2 * N * H * W * Cout
    bytes_accessed = (N * H * W * Cin * in_isz + N * H * W * Cout * out_isz
                      + 9 * (Cin + Cout) * Cout * c_isz)

    return pl.pallas_call(
        residual_block_kernel,
        out_shape=jax.ShapeDtypeStruct((N, H, W, Cout), out_dtype),
        grid_spec=pltpu.PrefetchScalarGridSpec(
            num_scalar_prefetch=0,
            grid=(N // bt,),
            in_specs=[
                pl.BlockSpec((bt, H, W, Cin), lambda n: (n, 0, 0, 0)),
                pl.BlockSpec((9, Cin, Cout), lambda n: (0, 0, 0)),
                pl.BlockSpec((9, Cout, Cout), lambda n: (0, 0, 0)),
            ],
            out_specs=pl.BlockSpec((bt, H, W, Cout), lambda n: (n, 0, 0, 0)),
            scratch_shapes=[
                pltpu.VMEM((bt, H + 2, W + 2, Cin), cdt),
                pltpu.VMEM((bt, H + 2, W + 2, Cout), cdt),
            ],
        ),
        compiler_params=pltpu.CompilerParams(
            dimension_semantics=("parallel",),
            vmem_limit_bytes=vmem_limit,
        ),
        cost_estimate=pl.CostEstimate(
            flops=flops, transcendentals=0, bytes_accessed=bytes_accessed),
    )(x_in, w1, w2)
    # TODO(synk): for small channel counts (C << 128), pad channels upstream or
    # fold W*C onto the lane axis for lane-dense stores; kept native-C here.


def residual_block(x_nchw, w1_oihw, w2_oihw, *,
                   compute_dtype=jnp.bfloat16, batch_tile=None):
    """PyTorch-layout adapter (NCHW in / NCHW out). In an NHWC model call
    residual_block_nhwc directly and skip these two full-HBM transposes."""
    x_nhwc = jnp.transpose(x_nchw, (0, 2, 3, 1))
    out = residual_block_nhwc(x_nhwc, w1_oihw, w2_oihw,
                              compute_dtype=compute_dtype, batch_tile=batch_tile)
    return jnp.transpose(out, (0, 3, 1, 2))


def _reference(x_nchw, w1_oihw, w2_oihw):
    dn = ("NCHW", "OIHW", "NCHW")
    conv = lambda x, w: jax.lax.conv_general_dilated(
        x, w, window_strides=(1, 1), padding=((1, 1), (1, 1)),
        dimension_numbers=dn)
    out = conv(conv(x_nchw, w1_oihw), w2_oihw) + x_nchw
    return jnp.maximum(out, 0.0)


if __name__ == "__main__":
    key = jax.random.PRNGKey(0)
    kx, k1, k2 = jax.random.split(key, 3)

    N, C, H, W = 2, 4, 16, 16
    x = jax.random.normal(kx, (N, C, H, W), dtype=jnp.float32)
    # deterministic conv weights (PyTorch Conv2d shape: (out, in, 3, 3), bias=False)
    w1 = jax.random.normal(k1, (C, C, 3, 3), dtype=jnp.float32) * 0.1
    w2 = jax.random.normal(k2, (C, C, 3, 3), dtype=jnp.float32) * 0.1

    ref = jax.block_until_ready(_reference(x, w1, w2))

    # Exact path (f32 MXU operands): parity with the PyTorch module.
    out_f32 = jax.block_until_ready(
        residual_block(x, w1, w2, compute_dtype=jnp.float32))
    assert out_f32.shape == (N, C, H, W)
    assert jnp.allclose(out_f32, ref, atol=1e-4, rtol=1e-4), "f32 path mismatch"

    # Default fast path (bf16 MXU operands / staging, f32 accumulation).
    out_bf16 = jax.block_until_ready(residual_block(x, w1, w2))
    assert jnp.allclose(out_bf16, ref, atol=5e-2, rtol=5e-2), "bf16 path mismatch"

    print("KERNEL_OK")
</pallas_src>

<mosaic_0001>
module attributes {stable_mosaic.version = 11 : i64} {
  func.func @residual_block_kernel(%arg0: i32, %arg1: memref<1x16x16x4xf32, #tpu.memory_space<vmem>>, %arg2: memref<9x4x4xf32, #tpu.memory_space<vmem>>, %arg3: memref<9x4x4xf32, #tpu.memory_space<vmem>>, %arg4: memref<1x16x16x4xf32, #tpu.memory_space<vmem>>, %arg5: memref<1x18x18x4xf32, #tpu.memory_space<vmem>>, %arg6: memref<1x18x18x4xf32, #tpu.memory_space<vmem>>) attributes {dimension_semantics = [#tpu.dimension_semantics<parallel>], iteration_bounds = array<i64: 2>, scalar_prefetch = 0 : i64, scratch_operands = 2 : i64, tpu.core_type = #tpu.core_type<tc>, window_params = [{transform_indices = @transform_0, window_bounds = array<i64: 1, 16, 16, 4>}, {pipeline_mode = #tpu.pipeline_mode<synchronous>, transform_indices = @transform_1, window_bounds = array<i64: 9, 4, 4>}, {pipeline_mode = #tpu.pipeline_mode<synchronous>, transform_indices = @transform_2, window_bounds = array<i64: 9, 4, 4>}, {transform_indices = @transform_3, window_bounds = array<i64: 1, 16, 16, 4>}]} {
    %cst = arith.constant 0.000000e+00 : f32
    %0 = vector.broadcast %cst : f32 to vector<1x1x18x4xf32>
    %cst_0 = arith.constant 0.000000e+00 : f32
    %1 = vector.broadcast %cst_0 : f32 to vector<1x18x1x4xf32>
    %c0 = arith.constant 0 : index
    %c0_1 = arith.constant 0 : index
    %c0_2 = arith.constant 0 : index
    %c0_3 = arith.constant 0 : index
    %2 = vector.load %arg5[%c0, %c0_1, %c0_2, %c0_3] : memref<1x18x18x4xf32, #tpu.memory_space<vmem>>, vector<1x1x18x4xf32>
    tpu.vector_store %arg5[%c0, %c0_1, %c0_2, %c0_3], %0 {strides = array<i32>} : memref<1x18x18x4xf32, #tpu.memory_space<vmem>>, vector<1x1x18x4xf32>,
    %c0_4 = arith.constant 0 : index
    %c17 = arith.constant 17 : index
    %c0_5 = arith.constant 0 : index
    %c0_6 = arith.constant 0 : index
    %3 = vector.load %arg5[%c0_4, %c17, %c0_5, %c0_6] : memref<1x18x18x4xf32, #tpu.memory_space<vmem>>, vector<1x1x18x4xf32>
    tpu.vector_store %arg5[%c0_4, %c17, %c0_5, %c0_6], %0 {strides = array<i32>} : memref<1x18x18x4xf32, #tpu.memory_space<vmem>>, vector<1x1x18x4xf32>,
    %c0_7 = arith.constant 0 : index
    %c0_8 = arith.constant 0 : index
    %c0_9 = arith.constant 0 : index
    %c0_10 = arith.constant 0 : index
    %4 = vector.load %arg5[%c0_7, %c0_8, %c0_9, %c0_10] : memref<1x18x18x4xf32, #tpu.memory_space<vmem>>, vector<1x18x1x4xf32>
    tpu.vector_store %arg5[%c0_7, %c0_8, %c0_9, %c0_10], %1 {strides = array<i32>} : memref<1x18x18x4xf32, #tpu.memory_space<vmem>>, vector<1x18x1x4xf32>,
    %c0_11 = arith.constant 0 : index
    %c0_12 = arith.constant 0 : index
    %c17_13 = arith.constant 17 : index
    %c0_14 = arith.constant 0 : index
    %5 = vector.load %arg5[%c0_11, %c0_12, %c17_13, %c0_14] : memref<1x18x18x4xf32, #tpu.memory_space<vmem>>, vector<1x18x1x4xf32>
    tpu.vector_store %arg5[%c0_11, %c0_12, %c17_13, %c0_14], %1 {strides = array<i32>} : memref<1x18x18x4xf32, #tpu.memory_space<vmem>>, vector<1x18x1x4xf32>,
    %c0_15 = arith.constant 0 : index
    %c0_16 = arith.constant 0 : index
    %c0_17 = arith.constant 0 : index
    %c0_18 = arith.constant 0 : index
    %6 = vector.load %arg6[%c0_15, %c0_16, %c0_17, %c0_18] : memref<1x18x18x4xf32, #tpu.memory_space<vmem>>, vector<1x1x18x4xf32>
    tpu.vector_store %arg6[%c0_15, %c0_16, %c0_17, %c0_18], %0 {strides = array<i32>} : memref<1x18x18x4xf32, #tpu.memory_space<vmem>>, vector<1x1x18x4xf32>,
    %c0_19 = arith.constant 0 : index
    %c17_20 = arith.constant 17 : index
    %c0_21 = arith.constant 0 : index
    %c0_22 = arith.constant 0 : index
    %7 = vector.load %arg6[%c0_19, %c17_20, %c0_21, %c0_22] : memref<1x18x18x4xf32, #tpu.memory_space<vmem>>, vector<1x1x18x4xf32>
    tpu.vector_store %arg6[%c0_19, %c17_20, %c0_21, %c0_22], %0 {strides = array<i32>} : memref<1x18x18x4xf32, #tpu.memory_space<vmem>>, vector<1x1x18x4xf32>,
    %c0_23 = arith.constant 0 : index
    %c0_24 = arith.constant 0 : index
    %c0_25 = arith.constant 0 : index
    %c0_26 = arith.constant 0 : index
    %8 = vector.load %arg6[%c0_23, %c0_24, %c0_25, %c0_26] : memref<1x18x18x4xf32, #tpu.memory_space<vmem>>, vector<1x18x1x4xf32>
    tpu.vector_store %arg6[%c0_23, %c0_24, %c0_25, %c0_26], %1 {strides = array<i32>} : memref<1x18x18x4xf32, #tpu.memory_space<vmem>>, vector<1x18x1x4xf32>,
    %c0_27 = arith.constant 0 : index
    %c0_28 = arith.constant 0 : index
    %c17_29 = arith.constant 17 : index
    %c0_30 = arith.constant 0 : index
    %9 = vector.load %arg6[%c0_27, %c0_28, %c17_29, %c0_30] : memref<1x18x18x4xf32, #tpu.memory_space<vmem>>, vector<1x18x1x4xf32>
    tpu.vector_store %arg6[%c0_27, %c0_28, %c17_29, %c0_30], %1 {strides = array<i32>} : memref<1x18x18x4xf32, #tpu.memory_space<vmem>>, vector<1x18x1x4xf32>,
    %c0_31 = arith.constant 0 : index
    %c0_32 = arith.constant 0 : index
    %c0_33 = arith.constant 0 : index
    %c0_34 = arith.constant 0 : index
    %10 = vector.load %arg1[%c0_31, %c0_32, %c0_33, %c0_34] : memref<1x16x16x4xf32, #tpu.memory_space<vmem>>, vector<1x16x16x4xf32>
    %c0_35 = arith.constant 0 : index
    %c1 = arith.constant 1 : index
    %c1_36 = arith.constant 1 : index
    %c0_37 = arith.constant 0 : index
    %11 = vector.load %arg5[%c0_35, %c1, %c1_36, %c0_37] : memref<1x18x18x4xf32, #tpu.memory_space<vmem>>, vector<1x16x16x4xf32>
    tpu.vector_store %arg5[%c0_35, %c1, %c1_36, %c0_37], %10 {strides = array<i32>} : memref<1x18x18x4xf32, #tpu.memory_space<vmem>>, vector<1x16x16x4xf32>,
    %c0_38 = arith.constant 0 : index
    %c0_39 = arith.constant 0 : index
    %c0_40 = arith.constant 0 : index
    %c0_41 = arith.constant 0 : index
    %12 = vector.load %arg5[%c0_38, %c0_39, %c0_40, %c0_41] : memref<1x18x18x4xf32, #tpu.memory_space<vmem>>, vector<1x16x16x4xf32>
    %13 = vector.shape_cast %12 : vector<1x16x16x4xf32> to vector<256x4xf32>
    %c0_42 = arith.constant 0 : index
    %c0_43 = arith.constant 0 : index
    %c0_44 = arith.constant 0 : index
    %14 = vector.load %arg2[%c0_42, %c0_43, %c0_44] : memref<9x4x4xf32, #tpu.memory_space<vmem>>, vector<1x4x4xf32>
    %15 = vector.shape_cast %14 : vector<1x4x4xf32> to vector<4x4xf32>
    %cst_45 = arith.constant dense<0.000000e+00> : vector<256x4xf32>
    %16 = tpu.matmul %13, %15, %cst_45 {dimension_numbers = #tpu.dot_dimension_numbers<[1], [0], [0], [1], [0, 0, 1, 1], [], []>} : vector<256x4xf32>, vector<4x4xf32>, vector<256x4xf32> -> vector<256x4xf32>
    %c0_46 = arith.constant 0 : index
    %c0_47 = arith.constant 0 : index
    %c1_48 = arith.constant 1 : index
    %c0_49 = arith.constant 0 : index
    %17 = vector.load %arg5[%c0_46, %c0_47, %c1_48, %c0_49] : memref<1x18x18x4xf32, #tpu.memory_space<vmem>>, vector<1x16x16x4xf32>
    %18 = vector.shape_cast %17 : vector<1x16x16x4xf32> to vector<256x4xf32>
    %c1_50 = arith.constant 1 : index
    %c0_51 = arith.constant 0 : index
    %c0_52 = arith.constant 0 : index
    %19 = vector.load %arg2[%c1_50, %c0_51, %c0_52] : memref<9x4x4xf32, #tpu.memory_space<vmem>>, vector<1x4x4xf32>
    %20 = vector.shape_cast %19 : vector<1x4x4xf32> to vector<4x4xf32>
    %cst_53 = arith.constant dense<0.000000e+00> : vector<256x4xf32>
    %21 = tpu.matmul %18, %20, %cst_53 {dimension_numbers = #tpu.dot_dimension_numbers<[1], [0], [0], [1], [0, 0, 1, 1], [], []>} : vector<256x4xf32>, vector<4x4xf32>, vector<256x4xf32> -> vector<256x4xf32>
    %22 = arith.addf %16, %21 : vector<256x4xf32>
    %c0_54 = arith.constant 0 : index
    %c0_55 = arith.constant 0 : index
    %c2 = arith.constant 2 : index
    %c0_56 = arith.constant 0 : index
    %23 = vector.load %arg5[%c0_54, %c0_55, %c2, %c0_56] : memref<1x18x18x4xf32, #tpu.memory_space<vmem>>, vector<1x16x16x4xf32>
    %24 = vector.shape_cast %23 : vector<1x16x16x4xf32> to vector<256x4xf32>
    %c2_57 = arith.constant 2 : index
    %c0_58 = arith.constant 0 : index
    %c0_59 = arith.constant 0 : index
    %25 = vector.load %arg2[%c2_57, %c0_58, %c0_59] : memref<9x4x4xf32, #tpu.memory_space<vmem>>, vector<1x4x4xf32>
    %26 = vector.shape_cast %25 : vector<1x4x4xf32> to vector<4x4xf32>
    %cst_60 = arith.constant dense<0.000000e+00> : vector<256x4xf32>
    %27 = tpu.matmul %24, %26, %cst_60 {dimension_numbers = #tpu.dot_dimension_numbers<[1], [0], [0], [1], [0, 0, 1, 1], [], []>} : vector<256x4xf32>, vector<4x4xf32>, vector<256x4xf32> -> vector<256x4xf32>
    %28 = arith.addf %22, %27 : vector<256x4xf32>
    %c0_61 = arith.constant 0 : index
    %c1_62 = arith.constant 1 : index
    %c0_63 = arith.constant 0 : index
    %c0_64 = arith.constant 0 : index
    %29 = vector.load %arg5[%c0_61, %c1_62, %c0_63, %c0_64] : memref<1x18x18x4xf32, #tpu.memory_space<vmem>>, vector<1x16x16x4xf32>
    %30 = vector.shape_cast %29 : vector<1x16x16x4xf32> to vector<256x4xf32>
    %c3 = arith.constant 3 : index
    %c0_65 = arith.constant 0 : index
    %c0_66 = arith.constant 0 : index
    %31 = vector.load %arg2[%c3, %c0_65, %c0_66] : memref<9x4x4xf32, #tpu.memory_space<vmem>>, vector<1x4x4xf32>
    %32 = vector.shape_cast %31 : vector<1x4x4xf32> to vector<4x4xf32>
    %cst_67 = arith.constant dense<0.000000e+00> : vector<256x4xf32>
    %33 = tpu.matmul %30, %32, %cst_67 {dimension_numbers = #tpu.dot_dimension_numbers<[1], [0], [0], [1], [0, 0, 1, 1], [], []>} : vector<256x4xf32>, vector<4x4xf32>, vector<256x4xf32> -> vector<256x4xf32>
    %34 = arith.addf %28, %33 : vector<256x4xf32>
    %c0_68 = arith.constant 0 : index
    %c1_69 = arith.constant 1 : index
    %c1_70 = arith.constant 1 : index
    %c0_71 = arith.constant 0 : index
    %35 = vector.load %arg5[%c0_68, %c1_69, %c1_70, %c0_71] : memref<1x18x18x4xf32, #tpu.memory_space<vmem>>, vector<1x16x16x4xf32>
    %36 = vector.shape_cast %35 : vector<1x16x16x4xf32> to vector<256x4xf32>
    %c4 = arith.constant 4 : index
    %c0_72 = arith.constant 0 : index
    %c0_73 = arith.constant 0 : index
    %37 = vector.load %arg2[%c4, %c0_72, %c0_73] : memref<9x4x4xf32, #tpu.memory_space<vmem>>, vector<1x4x4xf32>
    %38 = vector.shape_cast %37 : vector<1x4x4xf32> to vector<4x4xf32>
    %cst_74 = arith.constant dense<0.000000e+00> : vector<256x4xf32>
    %39 = tpu.matmul %36, %38, %cst_74 {dimension_numbers = #tpu.dot_dimension_numbers<[1], [0], [0], [1], [0, 0, 1, 1], [], []>} : vector<256x4xf32>, vector<4x4xf32>, vector<256x4xf32> -> vector<256x4xf32>
    %40 = arith.addf %34, %39 : vector<256x4xf32>
    %c0_75 = arith.constant 0 : index
    %c1_76 = arith.constant 1 : index
    %c2_77 = arith.constant 2 : index
    %c0_78 = arith.constant 0 : index
    %41 = vector.load %arg5[%c0_75, %c1_76, %c2_77, %c0_78] : memref<1x18x18x4xf32, #tpu.memory_space<vmem>>, vector<1x16x16x4xf32>
    %42 = vector.shape_cast %41 : vector<1x16x16x4xf32> to vector<256x4xf32>
    %c5 = arith.constant 5 : index
    %c0_79 = arith.constant 0 : index
    %c0_80 = arith.constant 0 : index
    %43 = vector.load %arg2[%c5, %c0_79, %c0_80] : memref<9x4x4xf32, #tpu.memory_space<vmem>>, vector<1x4x4xf32>
    %44 = vector.shape_cast %43 : vector<1x4x4xf32> to vector<4x4xf32>
    %cst_81 = arith.constant dense<0.000000e+00> : vector<256x4xf32>
    %45 = tpu.matmul %42, %44, %cst_81 {dimension_numbers = #tpu.dot_dimension_numbers<[1], [0], [0], [1], [0, 0, 1, 1], [], []>} : vector<256x4xf32>, vector<4x4xf32>, vector<256x4xf32> -> vector<256x4xf32>
    %46 = arith.addf %40, %45 : vector<256x4xf32>
    %c0_82 = arith.constant 0 : index
    %c2_83 = arith.constant 2 : index
    %c0_84 = arith.constant 0 : index
    %c0_85 = arith.constant 0 : index
    %47 = vector.load %arg5[%c0_82, %c2_83, %c0_84, %c0_85] : memref<1x18x18x4xf32, #tpu.memory_space<vmem>>, vector<1x16x16x4xf32>
    %48 = vector.shape_cast %47 : vector<1x16x16x4xf32> to vector<256x4xf32>
    %c6 = arith.constant 6 : index
    %c0_86 = arith.constant 0 : index
    %c0_87 = arith.constant 0 : index
    %49 = vector.load %arg2[%c6, %c0_86, %c0_87] : memref<9x4x4xf32, #tpu.memory_space<vmem>>, vector<1x4x4xf32>
    %50 = vector.shape_cast %49 : vector<1x4x4xf32> to vector<4x4xf32>
    %cst_88 = arith.constant dense<0.000000e+00> : vector<256x4xf32>
    %51 = tpu.matmul %48, %50, %cst_88 {dimension_numbers = #tpu.dot_dimension_numbers<[1], [0], [0], [1], [0, 0, 1, 1], [], []>} : vector<256x4xf32>, vector<4x4xf32>, vector<256x4xf32> -> vector<256x4xf32>
    %52 = arith.addf %46, %51 : vector<256x4xf32>
    %c0_89 = arith.constant 0 : index
    %c2_90 = arith.constant 2 : index
    %c1_91 = arith.constant 1 : index
    %c0_92 = arith.constant 0 : index
    %53 = vector.load %arg5[%c0_89, %c2_90, %c1_91, %c0_92] : memref<1x18x18x4xf32, #tpu.memory_space<vmem>>, vector<1x16x16x4xf32>
    %54 = vector.shape_cast %53 : vector<1x16x16x4xf32> to vector<256x4xf32>
    %c7 = arith.constant 7 : index
    %c0_93 = arith.constant 0 : index
    %c0_94 = arith.constant 0 : index
    %55 = vector.load %arg2[%c7, %c0_93, %c0_94] : memref<9x4x4xf32, #tpu.memory_space<vmem>>, vector<1x4x4xf32>
    %56 = vector.shape_cast %55 : vector<1x4x4xf32> to vector<4x4xf32>
    %cst_95 = arith.constant dense<0.000000e+00> : vector<256x4xf32>
    %57 = tpu.matmul %54, %56, %cst_95 {dimension_numbers = #tpu.dot_dimension_numbers<[1], [0], [0], [1], [0, 0, 1, 1], [], []>} : vector<256x4xf32>, vector<4x4xf32>, vector<256x4xf32> -> vector<256x4xf32>
    %58 = arith.addf %52, %57 : vector<256x4xf32>
    %c0_96 = arith.constant 0 : index
    %c2_97 = arith.constant 2 : index
    %c2_98 = arith.constant 2 : index
    %c0_99 = arith.constant 0 : index
    %59 = vector.load %arg5[%c0_96, %c2_97, %c2_98, %c0_99] : memref<1x18x18x4xf32, #tpu.memory_space<vmem>>, vector<1x16x16x4xf32>
    %60 = vector.shape_cast %59 : vector<1x16x16x4xf32> to vector<256x4xf32>
    %c8 = arith.constant 8 : index
    %c0_100 = arith.constant 0 : index
    %c0_101 = arith.constant 0 : index
    %61 = vector.load %arg2[%c8, %c0_100, %c0_101] : memref<9x4x4xf32, #tpu.memory_space<vmem>>, vector<1x4x4xf32>
    %62 = vector.shape_cast %61 : vector<1x4x4xf32> to vector<4x4xf32>
    %cst_102 = arith.constant dense<0.000000e+00> : vector<256x4xf32>
    %63 = tpu.matmul %60, %62, %cst_102 {dimension_numbers = #tpu.dot_dimension_numbers<[1], [0], [0], [1], [0, 0, 1, 1], [], []>} : vector<256x4xf32>, vector<4x4xf32>, vector<256x4xf32> -> vector<256x4xf32>
    %64 = arith.addf %58, %63 : vector<256x4xf32>
    %65 = vector.shape_cast %64 : vector<256x4xf32> to vector<1x16x16x4xf32>
    %c0_103 = arith.constant 0 : index
    %c1_104 = arith.constant 1 : index
    %c1_105 = arith.constant 1 : index
    %c0_106 = arith.constant 0 : index
    %66 = vector.load %arg6[%c0_103, %c1_104, %c1_105, %c0_106] : memref<1x18x18x4xf32, #tpu.memory_space<vmem>>, vector<1x16x16x4xf32>
    tpu.vector_store %arg6[%c0_103, %c1_104, %c1_105, %c0_106], %65 {strides = array<i32>} : memref<1x18x18x4xf32, #tpu.memory_space<vmem>>, vector<1x16x16x4xf32>,
    %c0_107 = arith.constant 0 : index
    %c0_108 = arith.constant 0 : index
    %c0_109 = arith.constant 0 : index
    %c0_110 = arith.constant 0 : index
    %67 = vector.load %arg6[%c0_107, %c0_108, %c0_109, %c0_110] : memref<1x18x18x4xf32, #tpu.memory_space<vmem>>, vector<1x16x16x4xf32>
    %68 = vector.shape_cast %67 : vector<1x16x16x4xf32> to vector<256x4xf32>
    %c0_111 = arith.constant 0 : index
    %c0_112 = arith.constant 0 : index
    %c0_113 = arith.constant 0 : index
    %69 = vector.load %arg3[%c0_111, %c0_112, %c0_113] : memref<9x4x4xf32, #tpu.memory_space<vmem>>, vector<1x4x4xf32>
    %70 = vector.shape_cast %69 : vector<1x4x4xf32> to vector<4x4xf32>
    %cst_114 = arith.constant dense<0.000000e+00> : vector<256x4xf32>
    %71 = tpu.matmul %68, %70, %cst_114 {dimension_numbers = #tpu.dot_dimension_numbers<[1], [0], [0], [1], [0, 0, 1, 1], [], []>} : vector<256x4xf32>, vector<4x4xf32>, vector<256x4xf32> -> vector<256x4xf32>
    %c0_115 = arith.constant 0 : index
    %c0_116 = arith.constant 0 : index
    %c1_117 = arith.constant 1 : index
    %c0_118 = arith.constant 0 : index
    %72 = vector.load %arg6[%c0_115, %c0_116, %c1_117, %c0_118] : memref<1x18x18x4xf32, #tpu.memory_space<vmem>>, vector<1x16x16x4xf32>
    %73 = vector.shape_cast %72 : vector<1x16x16x4xf32> to vector<256x4xf32>
    %c1_119 = arith.constant 1 : index
    %c0_120 = arith.constant 0 : index
    %c0_121 = arith.constant 0 : index
    %74 = vector.load %arg3[%c1_119, %c0_120, %c0_121] : memref<9x4x4xf32, #tpu.memory_space<vmem>>, vector<1x4x4xf32>
    %75 = vector.shape_cast %74 : vector<1x4x4xf32> to vector<4x4xf32>
    %cst_122 = arith.constant dense<0.000000e+00> : vector<256x4xf32>
    %76 = tpu.matmul %73, %75, %cst_122 {dimension_numbers = #tpu.dot_dimension_numbers<[1], [0], [0], [1], [0, 0, 1, 1], [], []>} : vector<256x4xf32>, vector<4x4xf32>, vector<256x4xf32> -> vector<256x4xf32>
    %77 = arith.addf %71, %76 : vector<256x4xf32>
    %c0_123 = arith.constant 0 : index
    %c0_124 = arith.constant 0 : index
    %c2_125 = arith.constant 2 : index
    %c0_126 = arith.constant 0 : index
    %78 = vector.load %arg6[%c0_123, %c0_124, %c2_125, %c0_126] : memref<1x18x18x4xf32, #tpu.memory_space<vmem>>, vector<1x16x16x4xf32>
    %79 = vector.shape_cast %78 : vector<1x16x16x4xf32> to vector<256x4xf32>
    %c2_127 = arith.constant 2 : index
    %c0_128 = arith.constant 0 : index
    %c0_129 = arith.constant 0 : index
    %80 = vector.load %arg3[%c2_127, %c0_128, %c0_129] : memref<9x4x4xf32, #tpu.memory_space<vmem>>, vector<1x4x4xf32>
    %81 = vector.shape_cast %80 : vector<1x4x4xf32> to vector<4x4xf32>
    %cst_130 = arith.constant dense<0.000000e+00> : vector<256x4xf32>
    %82 = tpu.matmul %79, %81, %cst_130 {dimension_numbers = #tpu.dot_dimension_numbers<[1], [0], [0], [1], [0, 0, 1, 1], [], []>} : vector<256x4xf32>, vector<4x4xf32>, vector<256x4xf32> -> vector<256x4xf32>
    %83 = arith.addf %77, %82 : vector<256x4xf32>
    %c0_131 = arith.constant 0 : index
    %c1_132 = arith.constant 1 : index
    %c0_133 = arith.constant 0 : index
    %c0_134 = arith.constant 0 : index
    %84 = vector.load %arg6[%c0_131, %c1_132, %c0_133, %c0_134] : memref<1x18x18x4xf32, #tpu.memory_space<vmem>>, vector<1x16x16x4xf32>
    %85 = vector.shape_cast %84 : vector<1x16x16x4xf32> to vector<256x4xf32>
    %c3_135 = arith.constant 3 : index
    %c0_136 = arith.constant 0 : index
    %c0_137 = arith.constant 0 : index
    %86 = vector.load %arg3[%c3_135, %c0_136, %c0_137] : memref<9x4x4xf32, #tpu.memory_space<vmem>>, vector<1x4x4xf32>
    %87 = vector.shape_cast %86 : vector<1x4x4xf32> to vector<4x4xf32>
    %cst_138 = arith.constant dense<0.000000e+00> : vector<256x4xf32>
    %88 = tpu.matmul %85, %87, %cst_138 {dimension_numbers = #tpu.dot_dimension_numbers<[1], [0], [0], [1], [0, 0, 1, 1], [], []>} : vector<256x4xf32>, vector<4x4xf32>, vector<256x4xf32> -> vector<256x4xf32>
    %89 = arith.addf %83, %88 : vector<256x4xf32>
    %c0_139 = arith.constant 0 : index
    %c1_140 = arith.constant 1 : index
    %c1_141 = arith.constant 1 : index
    %c0_142 = arith.constant 0 : index
    %90 = vector.load %arg6[%c0_139, %c1_140, %c1_141, %c0_142] : memref<1x18x18x4xf32, #tpu.memory_space<vmem>>, vector<1x16x16x4xf32>
    %91 = vector.shape_cast %90 : vector<1x16x16x4xf32> to vector<256x4xf32>
    %c4_143 = arith.constant 4 : index
    %c0_144 = arith.constant 0 : index
    %c0_145 = arith.constant 0 : index
    %92 = vector.load %arg3[%c4_143, %c0_144, %c0_145] : memref<9x4x4xf32, #tpu.memory_space<vmem>>, vector<1x4x4xf32>
    %93 = vector.shape_cast %92 : vector<1x4x4xf32> to vector<4x4xf32>
    %cst_146 = arith.constant dense<0.000000e+00> : vector<256x4xf32>
    %94 = tpu.matmul %91, %93, %cst_146 {dimension_numbers = #tpu.dot_dimension_numbers<[1], [0], [0], [1], [0, 0, 1, 1], [], []>} : vector<256x4xf32>, vector<4x4xf32>, vector<256x4xf32> -> vector<256x4xf32>
    %95 = arith.addf %89, %94 : vector<256x4xf32>
    %c0_147 = arith.constant 0 : index
    %c1_148 = arith.constant 1 : index
    %c2_149 = arith.constant 2 : index
    %c0_150 = arith.constant 0 : index
    %96 = vector.load %arg6[%c0_147, %c1_148, %c2_149, %c0_150] : memref<1x18x18x4xf32, #tpu.memory_space<vmem>>, vector<1x16x16x4xf32>
    %97 = vector.shape_cast %96 : vector<1x16x16x4xf32> to vector<256x4xf32>
    %c5_151 = arith.constant 5 : index
    %c0_152 = arith.constant 0 : index
    %c0_153 = arith.constant 0 : index
    %98 = vector.load %arg3[%c5_151, %c0_152, %c0_153] : memref<9x4x4xf32, #tpu.memory_space<vmem>>, vector<1x4x4xf32>
    %99 = vector.shape_cast %98 : vector<1x4x4xf32> to vector<4x4xf32>
    %cst_154 = arith.constant dense<0.000000e+00> : vector<256x4xf32>
    %100 = tpu.matmul %97, %99, %cst_154 {dimension_numbers = #tpu.dot_dimension_numbers<[1], [0], [0], [1], [0, 0, 1, 1], [], []>} : vector<256x4xf32>, vector<4x4xf32>, vector<256x4xf32> -> vector<256x4xf32>
    %101 = arith.addf %95, %100 : vector<256x4xf32>
    %c0_155 = arith.constant 0 : index
    %c2_156 = arith.constant 2 : index
    %c0_157 = arith.constant 0 : index
    %c0_158 = arith.constant 0 : index
    %102 = vector.load %arg6[%c0_155, %c2_156, %c0_157, %c0_158] : memref<1x18x18x4xf32, #tpu.memory_space<vmem>>, vector<1x16x16x4xf32>
    %103 = vector.shape_cast %102 : vector<1x16x16x4xf32> to vector<256x4xf32>
    %c6_159 = arith.constant 6 : index
    %c0_160 = arith.constant 0 : index
    %c0_161 = arith.constant 0 : index
    %104 = vector.load %arg3[%c6_159, %c0_160, %c0_161] : memref<9x4x4xf32, #tpu.memory_space<vmem>>, vector<1x4x4xf32>
    %105 = vector.shape_cast %104 : vector<1x4x4xf32> to vector<4x4xf32>
    %cst_162 = arith.constant dense<0.000000e+00> : vector<256x4xf32>
    %106 = tpu.matmul %103, %105, %cst_162 {dimension_numbers = #tpu.dot_dimension_numbers<[1], [0], [0], [1], [0, 0, 1, 1], [], []>} : vector<256x4xf32>, vector<4x4xf32>, vector<256x4xf32> -> vector<256x4xf32>
    %107 = arith.addf %101, %106 : vector<256x4xf32>
    %c0_163 = arith.constant 0 : index
    %c2_164 = arith.constant 2 : index
    %c1_165 = arith.constant 1 : index
    %c0_166 = arith.constant 0 : index
    %108 = vector.load %arg6[%c0_163, %c2_164, %c1_165, %c0_166] : memref<1x18x18x4xf32, #tpu.memory_space<vmem>>, vector<1x16x16x4xf32>
    %109 = vector.shape_cast %108 : vector<1x16x16x4xf32> to vector<256x4xf32>
    %c7_167 = arith.constant 7 : index
    %c0_168 = arith.constant 0 : index
    %c0_169 = arith.constant 0 : index
    %110 = vector.load %arg3[%c7_167, %c0_168, %c0_169] : memref<9x4x4xf32, #tpu.memory_space<vmem>>, vector<1x4x4xf32>
    %111 = vector.shape_cast %110 : vector<1x4x4xf32> to vector<4x4xf32>
    %cst_170 = arith.constant dense<0.000000e+00> : vector<256x4xf32>
    %112 = tpu.matmul %109, %111, %cst_170 {dimension_numbers = #tpu.dot_dimension_numbers<[1], [0], [0], [1], [0, 0, 1, 1], [], []>} : vector<256x4xf32>, vector<4x4xf32>, vector<256x4xf32> -> vector<256x4xf32>
    %113 = arith.addf %107, %112 : vector<256x4xf32>
    %c0_171 = arith.constant 0 : index
    %c2_172 = arith.constant 2 : index
    %c2_173 = arith.constant 2 : index
    %c0_174 = arith.constant 0 : index
    %114 = vector.load %arg6[%c0_171, %c2_172, %c2_173, %c0_174] : memref<1x18x18x4xf32, #tpu.memory_space<vmem>>, vector<1x16x16x4xf32>
    %115 = vector.shape_cast %114 : vector<1x16x16x4xf32> to vector<256x4xf32>
    %c8_175 = arith.constant 8 : index
    %c0_176 = arith.constant 0 : index
    %c0_177 = arith.constant 0 : index
    %116 = vector.load %arg3[%c8_175, %c0_176, %c0_177] : memref<9x4x4xf32, #tpu.memory_space<vmem>>, vector<1x4x4xf32>
    %117 = vector.shape_cast %116 : vector<1x4x4xf32> to vector<4x4xf32>
    %cst_178 = arith.constant dense<0.000000e+00> : vector<256x4xf32>
    %118 = tpu.matmul %115, %117, %cst_178 {dimension_numbers = #tpu.dot_dimension_numbers<[1], [0], [0], [1], [0, 0, 1, 1], [], []>} : vector<256x4xf32>, vector<4x4xf32>, vector<256x4xf32> -> vector<256x4xf32>
    %119 = arith.addf %113, %118 : vector<256x4xf32>
    %c0_179 = arith.constant 0 : index
    %c0_180 = arith.constant 0 : index
    %c0_181 = arith.constant 0 : index
    %c0_182 = arith.constant 0 : index
    %120 = vector.load %arg1[%c0_179, %c0_180, %c0_181, %c0_182] : memref<1x16x16x4xf32, #tpu.memory_space<vmem>>, vector<1x16x16x4xf32>
    %121 = vector.shape_cast %120 : vector<1x16x16x4xf32> to vector<256x4xf32>
    %122 = arith.addf %119, %121 : vector<256x4xf32>
    %cst_183 = arith.constant 0.000000e+00 : f32
    %123 = vector.broadcast %cst_183 : f32 to vector<256x4xf32>
    %124 = arith.maximumf %122, %123 : vector<256x4xf32>
    %125 = vector.shape_cast %124 : vector<256x4xf32> to vector<1x16x16x4xf32>
    %c0_184 = arith.constant 0 : index
    %c0_185 = arith.constant 0 : index
    %c0_186 = arith.constant 0 : index
    %c0_187 = arith.constant 0 : index
    %126 = vector.load %arg4[%c0_184, %c0_185, %c0_186, %c0_187] : memref<1x16x16x4xf32, #tpu.memory_space<vmem>>, vector<1x16x16x4xf32>
    tpu.vector_store %arg4[%c0_184, %c0_185, %c0_186, %c0_187], %125 {strides = array<i32>} : memref<1x16x16x4xf32, #tpu.memory_space<vmem>>, vector<1x16x16x4xf32>,
    return
  }
  func.func @transform_0(%arg0: i32) -> (i32, i32, i32, i32) {
    %c0_i32 = arith.constant 0 : i32
    %c0_i32_0 = arith.constant 0 : i32
    %c0_i32_1 = arith.constant 0 : i32
    %c0_i32_2 = arith.constant 0 : i32
    return %arg0, %c0_i32, %c0_i32_0, %c0_i32_1 : i32, i32, i32, i32
  }
  func.func @transform_1(%arg0: i32) -> (i32, i32, i32) {
    %c0_i32 = arith.constant 0 : i32
    %c0_i32_0 = arith.constant 0 : i32
    %c0_i32_1 = arith.constant 0 : i32
    %c0_i32_2 = arith.constant 0 : i32
    return %c0_i32, %c0_i32_0, %c0_i32_1 : i32, i32, i32
  }
  func.func @transform_2(%arg0: i32) -> (i32, i32, i32) {
    %c0_i32 = arith.constant 0 : i32
    %c0_i32_0 = arith.constant 0 : i32
    %c0_i32_1 = arith.constant 0 : i32
    %c0_i32_2 = arith.constant 0 : i32
    return %c0_i32, %c0_i32_0, %c0_i32_1 : i32, i32, i32
  }
  func.func @transform_3(%arg0: i32) -> (i32, i32, i32, i32) {
    %c0_i32 = arith.constant 0 : i32
    %c0_i32_0 = arith.constant 0 : i32
    %c0_i32_1 = arith.constant 0 : i32
    %c0_i32_2 = arith.constant 0 : i32
    return %arg0, %c0_i32, %c0_i32_0, %c0_i32_1 : i32, i32, i32, i32
  }
}

</mosaic_0001>

<llo_original>
// kernel: tpu_custom_call.1
$region0: #{tpu_custom_call.1}
  #allocation0 [shape = 'u32[]', space=smem, size = 0x4, offset = 0x4, fixed_abs, tag = 'smem constant byte address 0x4 - core index']
  #allocation1 [shape = 'u32[72,128]{1,0:T(1,128)}', space=vmem, size = 0x9000, scoped, tag = 'internal scratch']
  #allocation2 [shape = 'f32[1,18,18,4]{3,2,1,0:T(8,128)}', space=vmem, size = 0x36000, scoped, tag = 'scratch operand']
  #allocation3 [shape = 'f32[1,18,18,4]{3,2,1,0:T(8,128)}', space=vmem, size = 0x36000, scoped, tag = 'scratch operand']
  %s0 = inlined_call_operand.vmem [shape: f32[2,16,16,4], index: 0, kind: input, shape index: {}]
  %s1 = inlined_call_operand.vmem [shape: f32[9,4,4], index: 1, kind: input, shape index: {}]
  %s2 = inlined_call_operand.vmem [shape: f32[9,4,4], index: 2, kind: input, shape index: {}]
  %s3 = inlined_call_operand.vmem [shape: f32[2,16,16,4], index: 3, kind: output, shape index: {}]
  %s4 = sld [smem:[#allocation0]]
  $region45: #{tpu_custom_call.1} parent=0
    _
  %s6 = ssub.s32 1, %s4
  %s7 = scalar_select 0, %s6, %s4
  loop: start=0, step=1, limit=4
  $region2: #{tpu_custom_call.1} parent=0 // loop_pre_header
    _
  $region3: #{tpu_custom_call.1} parent=0 // loop_header
    %s9 = sphi 0, %s13
    %p10 = scmp.ge.s32.totalorder %s9, 4
    %s19 = sphi 0, %s21
    %s22 = sphi 0, %s19
    %s23 = sphi 0, %s22
    %s39 = sphi 0, %s23
    %s43 = sphi 0, %s43
    %s45 = sphi 0, %s43
    %s46 = sphi 0, %s45
    %s60 = sphi 0, %s46
    %s64 = sphi 0, %s64
    %s66 = sphi 0, %s64
    %s67 = sphi 0, %s66
    %s81 = sphi 0, %s67
    %s87 = sphi 0, %s89
    %s90 = sphi 0, %s87
    %s91 = sphi 0, %s90
    %s107 = sphi 0, %s91
  $region4: #{tpu_custom_call.1} parent=0 // loop_header_branch
    %12 = sbr.rel (%p10) target = $region8
  $region5: #{tpu_custom_call.1} parent=0 // loop_body
    %s14 = ssub.s32 %s9, 1
    %s15 = ssub.s32 %s9, 2
    %s16 = sadd.s32 %s9, 1
    %s17 = ssub.s32 %s9, %s16
    %p18 = scmp.eq.s32.totalorder %s17, 0
    %s20 = sadd.s32 %s19, 1
    %s21 = scalar_select %p18, %s19, %s20
    %p24 = pneg %p18
    %p25 = scmp.eq.s32.totalorder %s9, 1
    %p26 = por %p24, %p25
    %p27 = scmp.ne.s32.totalorder %s19, %s22
    %p28 = scmp.eq.s32.totalorder %s9, 0
    %p29 = por %p27, %p28
    %p30 = scmp.ne.s32.totalorder %s19, %s22
    %p31 = scmp.eq.s32.totalorder %s14, 1
    %p32 = por %p30, %p31
    %p33 = scmp.ne.s32.totalorder %s22, %s23
    %p34 = scmp.eq.s32.totalorder %s14, 0
    %p35 = por %p33, %p34
    %p36 = scmp.ne.s32.totalorder %s22, %s23
    %p37 = scmp.eq.s32.totalorder %s15, 1
    %p38 = por %p36, %p37
    %p40 = scmp.ne.s32.totalorder %s23, %s39
    %p41 = scmp.eq.s32.totalorder %s15, 0
    %p42 = por %p40, %p41
    %s44 = sadd.s32 %s43, 1
    %p47 = scmp.eq.s32.totalorder %s9, 1
    %p48 = scmp.ne.s32.totalorder %s43, %s45
    %p49 = scmp.eq.s32.totalorder %s9, 0
    %p50 = por %p48, %p49
    %p51 = scmp.ne.s32.totalorder %s43, %s45
    %p52 = scmp.eq.s32.totalorder %s14, 1
    %p53 = por %p51, %p52
    %p54 = scmp.ne.s32.totalorder %s45, %s46
    %p55 = scmp.eq.s32.totalorder %s14, 0
    %p56 = por %p54, %p55
    %p57 = scmp.ne.s32.totalorder %s45, %s46
    %p58 = scmp.eq.s32.totalorder %s15, 1
    %p59 = por %p57, %p58
    %p61 = scmp.ne.s32.totalorder %s46, %s60
    %p62 = scmp.eq.s32.totalorder %s15, 0
    %p63 = por %p61, %p62
    %s65 = sadd.s32 %s64, 1
    %p68 = scmp.eq.s32.totalorder %s9, 1
    %p69 = scmp.ne.s32.totalorder %s64, %s66
    %p70 = scmp.eq.s32.totalorder %s9, 0
    %p71 = por %p69, %p70
    %p72 = scmp.ne.s32.totalorder %s64, %s66
    %p73 = scmp.eq.s32.totalorder %s14, 1
    %p74 = por %p72, %p73
    %p75 = scmp.ne.s32.totalorder %s66, %s67
    %p76 = scmp.eq.s32.totalorder %s14, 0
    %p77 = por %p75, %p76
    %p78 = scmp.ne.s32.totalorder %s66, %s67
    %p79 = scmp.eq.s32.totalorder %s15, 1
    %p80 = por %p78, %p79
    %p82 = scmp.ne.s32.totalorder %s67, %s81
    %p83 = scmp.eq.s32.totalorder %s15, 0
    %p84 = por %p82, %p83
    %s85 = ssub.s32 %s9, %s16
    %p86 = scmp.eq.s32.totalorder %s85, 0
    %s88 = sadd.s32 %s87, 1
    %s89 = scalar_select %p86, %s87, %s88
    %p92 = pneg %p86
    %p93 = scmp.eq.s32.totalorder %s9, 1
    %p94 = por %p92, %p93
    %p95 = scmp.ne.s32.totalorder %s87, %s90
    %p96 = scmp.eq.s32.totalorder %s9, 0
    %p97 = por %p95, %p96
    %p98 = scmp.ne.s32.totalorder %s87, %s90
    %p99 = scmp.eq.s32.totalorder %s14, 1
    %p100 = por %p98, %p99
    %p101 = scmp.ne.s32.totalorder %s90, %s91
    %p102 = scmp.eq.s32.totalorder %s14, 0
    %p103 = por %p101, %p102
    %p104 = scmp.ne.s32.totalorder %s90, %s91
    %p105 = scmp.eq.s32.totalorder %s15, 1
    %p106 = por %p104, %p105
    %p108 = scmp.ne.s32.totalorder %s91, %s107
    %p109 = scmp.eq.s32.totalorder %s15, 0
    %p110 = por %p108, %p109
    %p111 = scmp.le.s32.totalorder 1, %s9
    %p112 = scmp.lt.s32.totalorder %s9, 3
    %p113 = pnand %p111, %p112
    %p114 = pneg %p113
    // Predicated region
    $region9: #{tpu_custom_call.1} parent=5 // pred_check
      _
    $region10: #{tpu_custom_call.1} parent=5 // pred_check_branch
      %116 = sbr.rel (%p113) target = $region12
    $region11: #{tpu_custom_call.1} parent=5 // pred_region
      %s117 = ssub.s32 %s9, 1
      // Predicated region
      $region13: #{tpu_custom_call.1} parent=11 // pred_check
        %p118 = pneg %p56
      $region14: #{tpu_custom_call.1} parent=11 // pred_check_branch
        %120 = sbr.rel (%p118) target = $region16
      $region15: #{tpu_custom_call.1} parent=11 // pred_region
        _
      $region16: #{tpu_custom_call.1} parent=11 // pred_fallthru
        _
      // Predicated region
      $region17: #{tpu_custom_call.1} parent=11 // pred_check
        %p121 = pneg %p77
      $region18: #{tpu_custom_call.1} parent=11 // pred_check_branch
        %123 = sbr.rel (%p121) target = $region20
      $region19: #{tpu_custom_call.1} parent=11 // pred_region
        _
      $region20: #{tpu_custom_call.1} parent=11 // pred_fallthru
        _
    $region12: #{tpu_custom_call.1} parent=5 // pred_fallthru
      _
    %p124 = scmp.lt.s32.totalorder %s9, 2
    // Predicated region
    $region21: #{tpu_custom_call.1} parent=5 // pred_check
      %p125 = pneg %p124
    $region22: #{tpu_custom_call.1} parent=5 // pred_check_branch
      %127 = sbr.rel (%p125) target = $region24
    $region23: #{tpu_custom_call.1} parent=5 // pred_region
      // Predicated region
      $region25: #{tpu_custom_call.1} parent=23 // pred_check
        %p128 = pneg %p29
      $region26: #{tpu_custom_call.1} parent=23 // pred_check_branch
        %130 = sbr.rel (%p128) target = $region28
      $region27: #{tpu_custom_call.1} parent=23 // pred_region
        %p131 = scmp.lt.s32.totalorder %s9, 1
        %s132 = scalar_select %p131, %s9, 1
        %s133 = smul.addr %s132, 32
        %s134 = smul.addr %s133, 8
        %s135 = scalar_lea.vmem %s0, %s134
      $region28: #{tpu_custom_call.1} parent=23 // pred_fallthru
        _
    $region24: #{tpu_custom_call.1} parent=5 // pred_fallthru
      _
    %p136 = scmp.le.s32.totalorder 1, %s9
    %p137 = scmp.lt.s32.totalorder %s9, 3
    %p138 = pnand %p136, %p137
    %p139 = pneg %p138
    // Predicated region
    $region29: #{tpu_custom_call.1} parent=5 // pred_check
      _
    $region30: #{tpu_custom_call.1} parent=5 // pred_check_branch
      %141 = sbr.rel (%p138) target = $region32
    $region31: #{tpu_custom_call.1} parent=5 // pred_region
      %s142 = ssub.s32 %s9, 1
      %p143 = scmp.lt.s32.totalorder %s14, 1
      %s144 = scalar_select %p143, %s14, 1
      %s145 = smul.addr %s144, 32
      %s146 = smul.addr %s145, 8
      %s147 = scalar_lea.vmem %s0, %s146
      %p148 = pneg %p35
      %p149 = pneg %p32
      %p150 = pneg %p56
      %p151 = pneg %p53
      %p152 = pneg %p77
      %p153 = pneg %p74
      %p154 = pneg %p103
      %p155 = pneg %p100
      %p156 = scmp.lt.s32.totalorder %s14, 1
      %s157 = scalar_select %p156, %s14, 1
      %s158 = smul.addr %s157, 32
      %s159 = smul.addr %s158, 8
      %s160 = scalar_lea.vmem %s3, %s159
      %p161 = scmp.lt.s32.totalorder %s14, 1
      %s162 = scalar_select %p161, %s14, 1
      %s163 = smul.addr %s162, 32
      %s164 = smul.addr %s163, 8
      %s165 = scalar_lea.vmem %s0, %s164
      %p166 = scmp.lt.s32.totalorder %s14, 1
      %s167 = scalar_select %p166, %s14, 1
      %s168 = smul.addr %s167, 32
      %s169 = smul.addr %s168, 8
      %s170 = scalar_lea.vmem %s3, %s169
      %vm171 = vcmask 31744
      %172 = vst.msk [vmem:[#allocation2] sm:$0xff] %vm171, 0.0
      %173 = vst.msk [vmem:[#allocation2 + $0x8] sm:$0xff] %vm171, 0.0
      %vm174 = vcmask 25600
      %175 = vst.msk [vmem:[#allocation2 + $0x10] sm:$0x3] %vm174, 0.0
      %s176 = scalar_lea.vmem [#allocation2], 408
      %177 = vst.msk [vmem:[%s176] sm:$0xff] %vm171, 0.0
      %178 = vst.msk [vmem:[%s176 + $0x8] sm:$0xff] %vm171, 0.0
      %179 = vst.msk [vmem:[%s176 + $0x10] sm:$0x3] %vm174, 0.0
      %vm180 = vcmask 24576
      %181 = vst.msk [vmem:[#allocation2] sm:$0x1] %vm180, 0.0
      %182 = vst.msk [vmem:[#allocation2 + $0x18] sm:$0x1] %vm180, 0.0
      %183 = vst.msk [vmem:[#allocation2 + $0x30] sm:$0x1] %vm180, 0.0
      %184 = vst.msk [vmem:[#allocation2 + $0x48] sm:$0x1] %vm180, 0.0
      %185 = vst.msk [vmem:[#allocation2 + $0x60] sm:$0x1] %vm180, 0.0
      %186 = vst.msk [vmem:[#allocation2 + $0x78] sm:$0x1] %vm180, 0.0
      %187 = vst.msk [vmem:[#allocation2 + $0x90] sm:$0x1] %vm180, 0.0
      %188 = vst.msk [vmem:[#allocation2 + $0xa8] sm:$0x1] %vm180, 0.0
      %189 = vst.msk [vmem:[#allocation2 + $0xc0] sm:$0x1] %vm180, 0.0
      %190 = vst.msk [vmem:[#allocation2 + $0xd8] sm:$0x1] %vm180, 0.0
      %191 = vst.msk [vmem:[#allocation2 + $0xf0] sm:$0x1] %vm180, 0.0
      %192 = vst.msk [vmem:[#allocation2 + $0x108] sm:$0x1] %vm180, 0.0
      %193 = vst.msk [vmem:[#allocation2 + $0x120] sm:$0x1] %vm180, 0.0
      %194 = vst.msk [vmem:[#allocation2 + $0x138] sm:$0x1] %vm180, 0.0
      %195 = vst.msk [vmem:[#allocation2 + $0x150] sm:$0x1] %vm180, 0.0
      %196 = vst.msk [vmem:[#allocation2 + $0x168] sm:$0x1] %vm180, 0.0
      %197 = vst.msk [vmem:[#allocation2 + $0x180] sm:$0x1] %vm180, 0.0
      %198 = vst.msk [vmem:[#allocation2 + $0x198] sm:$0x1] %vm180, 0.0
      %199 = vst.msk [vmem:[#allocation2 + $0x11] sm:$0x1] %vm180, 0.0
      %200 = vst.msk [vmem:[#allocation2 + $0x29] sm:$0x1] %vm180, 0.0
      %201 = vst.msk [vmem:[#allocation2 + $0x41] sm:$0x1] %vm180, 0.0
      %202 = vst.msk [vmem:[#allocation2 + $0x59] sm:$0x1] %vm180, 0.0
      %203 = vst.msk [vmem:[#allocation2 + $0x71] sm:$0x1] %vm180, 0.0
      %204 = vst.msk [vmem:[#allocation2 + $0x89] sm:$0x1] %vm180, 0.0
      %205 = vst.msk [vmem:[#allocation2 + $0xa1] sm:$0x1] %vm180, 0.0
      %206 = vst.msk [vmem:[#allocation2 + $0xb9] sm:$0x1] %vm180, 0.0
      %207 = vst.msk [vmem:[#allocation2 + $0xd1] sm:$0x1] %vm180, 0.0
      %208 = vst.msk [vmem:[#allocation2 + $0xe9] sm:$0x1] %vm180, 0.0
      %209 = vst.msk [vmem:[#allocation2 + $0x101] sm:$0x1] %vm180, 0.0
      %210 = vst.msk [vmem:[#allocation2 + $0x119] sm:$0x1] %vm180, 0.0
      %211 = vst.msk [vmem:[#allocation2 + $0x131] sm:$0x1] %vm180, 0.0
      %212 = vst.msk [vmem:[#allocation2 + $0x149] sm:$0x1] %vm180, 0.0
      %213 = vst.msk [vmem:[#allocation2 + $0x161] sm:$0x1] %vm180, 0.0
      %214 = vst.msk [vmem:[#allocation2 + $0x179] sm:$0x1] %vm180, 0.0
      %215 = vst.msk [vmem:[#allocation2 + $0x191] sm:$0x1] %vm180, 0.0
      %216 = vst.msk [vmem:[#allocation2 + $0x1a9] sm:$0x1] %vm180, 0.0
      %217 = vst.msk [vmem:[#allocation3] sm:$0xff] %vm171, 0.0
      %218 = vst.msk [vmem:[#allocation3 + $0x8] sm:$0xff] %vm171, 0.0
      %219 = vst.msk [vmem:[#allocation3 + $0x10] sm:$0x3] %vm174, 0.0
      %s220 = scalar_lea.vmem [#allocation3], 408
      %221 = vst.msk [vmem:[%s220] sm:$0xff] %vm171, 0.0
      %222 = vst.msk [vmem:[%s220 + $0x8] sm:$0xff] %vm171, 0.0
      %223 = vst.msk [vmem:[%s220 + $0x10] sm:$0x3] %vm174, 0.0
      %224 = vst.msk [vmem:[#allocation3] sm:$0x1] %vm180, 0.0
      %225 = vst.msk [vmem:[#allocation3 + $0x18] sm:$0x1] %vm180, 0.0
      %226 = vst.msk [vmem:[#allocation3 + $0x30] sm:$0x1] %vm180, 0.0
      %227 = vst.msk [vmem:[#allocation3 + $0x48] sm:$0x1] %vm180, 0.0
      %228 = vst.msk [vmem:[#allocation3 + $0x60] sm:$0x1] %vm180, 0.0
      %229 = vst.msk [vmem:[#allocation3 + $0x78] sm:$0x1] %vm180, 0.0
      %230 = vst.msk [vmem:[#allocation3 + $0x90] sm:$0x1] %vm180, 0.0
      %231 = vst.msk [vmem:[#allocation3 + $0xa8] sm:$0x1] %vm180, 0.0
      %232 = vst.msk [vmem:[#allocation3 + $0xc0] sm:$0x1] %vm180, 0.0
      %233 = vst.msk [vmem:[#allocation3 + $0xd8] sm:$0x1] %vm180, 0.0
      %234 = vst.msk [vmem:[#allocation3 + $0xf0] sm:$0x1] %vm180, 0.0
      %235 = vst.msk [vmem:[#allocation3 + $0x108] sm:$0x1] %vm180, 0.0
      %236 = vst.msk [vmem:[#allocation3 + $0x120] sm:$0x1] %vm180, 0.0
      %237 = vst.msk [vmem:[#allocation3 + $0x138] sm:$0x1] %vm180, 0.0
      %238 = vst.msk [vmem:[#allocation3 + $0x150] sm:$0x1] %vm180, 0.0
      %239 = vst.msk [vmem:[#allocation3 + $0x168] sm:$0x1] %vm180, 0.0
      %240 = vst.msk [vmem:[#allocation3 + $0x180] sm:$0x1] %vm180, 0.0
      %241 = vst.msk [vmem:[#allocation3 + $0x198] sm:$0x1] %vm180, 0.0
      %242 = vst.msk [vmem:[#allocation3 + $0x11] sm:$0x1] %vm180, 0.0
      %243 = vst.msk [vmem:[#allocation3 + $0x29] sm:$0x1] %vm180, 0.0
      %244 = vst.msk [vmem:[#allocation3 + $0x41] sm:$0x1] %vm180, 0.0
      %245 = vst.msk [vmem:[#allocation3 + $0x59] sm:$0x1] %vm180, 0.0
      %246 = vst.msk [vmem:[#allocation3 + $0x71] sm:$0x1] %vm180, 0.0
      %247 = vst.msk [vmem:[#allocation3 + $0x89] sm:$0x1] %vm180, 0.0
      %248 = vst.msk [vmem:[#allocation3 + $0xa1] sm:$0x1] %vm180, 0.0
      %249 = vst.msk [vmem:[#allocation3 + $0xb9] sm:$0x1] %vm180, 0.0
      %250 = vst.msk [vmem:[#allocation3 + $0xd1] sm:$0x1] %vm180, 0.0
      %251 = vst.msk [vmem:[#allocation3 + $0xe9] sm:$0x1] %vm180, 0.0
      %252 = vst.msk [vmem:[#allocation3 + $0x101] sm:$0x1] %vm180, 0.0
      %253 = vst.msk [vmem:[#allocation3 + $0x119] sm:$0x1] %vm180, 0.0
      %254 = vst.msk [vmem:[#allocation3 + $0x131] sm:$0x1] %vm180, 0.0
      %255 = vst.msk [vmem:[#allocation3 + $0x149] sm:$0x1] %vm180, 0.0
      %256 = vst.msk [vmem:[#allocation3 + $0x161] sm:$0x1] %vm180, 0.0
      %257 = vst.msk [vmem:[#allocation3 + $0x179] sm:$0x1] %vm180, 0.0
      %258 = vst.msk [vmem:[#allocation3 + $0x191] sm:$0x1] %vm180, 0.0
      %259 = vst.msk [vmem:[#allocation3 + $0x1a9] sm:$0x1] %vm180, 0.0
      %v260 = vld [vmem:[%s165] sm:$0xff]
      %v261 = vld [vmem:[%s165 + $0x8] sm:$0xff]
      %v262 = vld [vmem:[%s165 + $0x10] sm:$0xff]
      %v263 = vld [vmem:[%s165 + $0x18] sm:$0xff]
      %v264 = vld [vmem:[%s165 + $0x20] sm:$0xff]
      %v265 = vld [vmem:[%s165 + $0x28] sm:$0xff]
      %v266 = vld [vmem:[%s165 + $0x30] sm:$0xff]
      %v267 = vld [vmem:[%s165 + $0x38] sm:$0xff]
      %v268 = vld [vmem:[%s165 + $0x40] sm:$0xff]
      %v269 = vld [vmem:[%s165 + $0x48] sm:$0xff]
      %v270 = vld [vmem:[%s165 + $0x50] sm:$0xff]
      %v271 = vld [vmem:[%s165 + $0x58] sm:$0xff]
      %v272 = vld [vmem:[%s165 + $0x60] sm:$0xff]
      %v273 = vld [vmem:[%s165 + $0x68] sm:$0xff]
      %v274 = vld [vmem:[%s165 + $0x70] sm:$0xff]
      %v275 = vld [vmem:[%s165 + $0x78] sm:$0xff]
      %v276 = vld [vmem:[%s165 + $0x80] sm:$0xff]
      %v277 = vld [vmem:[%s165 + $0x88] sm:$0xff]
      %v278 = vld [vmem:[%s165 + $0x90] sm:$0xff]
      %v279 = vld [vmem:[%s165 + $0x98] sm:$0xff]
      %v280 = vld [vmem:[%s165 + $0xa0] sm:$0xff]
      %v281 = vld [vmem:[%s165 + $0xa8] sm:$0xff]
      %v282 = vld [vmem:[%s165 + $0xb0] sm:$0xff]
      %v283 = vld [vmem:[%s165 + $0xb8] sm:$0xff]
      %v284 = vld [vmem:[%s165 + $0xc0] sm:$0xff]
      %v285 = vld [vmem:[%s165 + $0xc8] sm:$0xff]
      %v286 = vld [vmem:[%s165 + $0xd0] sm:$0xff]
      %v287 = vld [vmem:[%s165 + $0xd8] sm:$0xff]
      %v288 = vld [vmem:[%s165 + $0xe0] sm:$0xff]
      %v289 = vld [vmem:[%s165 + $0xe8] sm:$0xff]
      %v290 = vld [vmem:[%s165 + $0xf0] sm:$0xff]
      %v291 = vld [vmem:[%s165 + $0xf8] sm:$0xff]
      %s292 = scalar_lea.vmem [#allocation2], 24
      %293 = vst.msk [vmem:[%s292 + $0x1] sm:$0xff] %vm171, %v260
      %294 = vst.msk [vmem:[%s292 + $0x9] sm:$0xff] %vm171, %v261
      %295 = vst.msk [vmem:[%s292 + $0x19] sm:$0xff] %vm171, %v262
      %296 = vst.msk [vmem:[%s292 + $0x21] sm:$0xff] %vm171, %v263
      %297 = vst.msk [vmem:[%s292 + $0x31] sm:$0xff] %vm171, %v264
      %298 = vst.msk [vmem:[%s292 + $0x39] sm:$0xff] %vm171, %v265
      %299 = vst.msk [vmem:[%s292 + $0x49] sm:$0xff] %vm171, %v266
      %300 = vst.msk [vmem:[%s292 + $0x51] sm:$0xff] %vm171, %v267
      %301 = vst.msk [vmem:[%s292 + $0x61] sm:$0xff] %vm171, %v268
      %302 = vst.msk [vmem:[%s292 + $0x69] sm:$0xff] %vm171, %v269
      %303 = vst.msk [vmem:[%s292 + $0x79] sm:$0xff] %vm171, %v270
      %304 = vst.msk [vmem:[%s292 + $0x81] sm:$0xff] %vm171, %v271
      %305 = vst.msk [vmem:[%s292 + $0x91] sm:$0xff] %vm171, %v272
      %306 = vst.msk [vmem:[%s292 + $0x99] sm:$0xff] %vm171, %v273
      %307 = vst.msk [vmem:[%s292 + $0xa9] sm:$0xff] %vm171, %v274
      %308 = vst.msk [vmem:[%s292 + $0xb1] sm:$0xff] %vm171, %v275
      %309 = vst.msk [vmem:[%s292 + $0xc1] sm:$0xff] %vm171, %v276
      %310 = vst.msk [vmem:[%s292 + $0xc9] sm:$0xff] %vm171, %v277
      %311 = vst.msk [vmem:[%s292 + $0xd9] sm:$0xff] %vm171, %v278
      %312 = vst.msk [vmem:[%s292 + $0xe1] sm:$0xff] %vm171, %v279
      %313 = vst.msk [vmem:[%s292 + $0xf1] sm:$0xff] %vm171, %v280
      %314 = vst.msk [vmem:[%s292 + $0xf9] sm:$0xff] %vm171, %v281
      %315 = vst.msk [vmem:[%s292 + $0x109] sm:$0xff] %vm171, %v282
      %316 = vst.msk [vmem:[%s292 + $0x111] sm:$0xff] %vm171, %v283
      %317 = vst.msk [vmem:[%s292 + $0x121] sm:$0xff] %vm171, %v284
      %318 = vst.msk [vmem:[%s292 + $0x129] sm:$0xff] %vm171, %v285
      %319 = vst.msk [vmem:[%s292 + $0x139] sm:$0xff] %vm171, %v286
      %320 = vst.msk [vmem:[%s292 + $0x141] sm:$0xff] %vm171, %v287
      %321 = vst.msk [vmem:[%s292 + $0x151] sm:$0xff] %vm171, %v288
      %322 = vst.msk [vmem:[%s292 + $0x159] sm:$0xff] %vm171, %v289
      %323 = vst.msk [vmem:[%s292 + $0x169] sm:$0xff] %vm171, %v290
      %324 = vst.msk [vmem:[%s292 + $0x171] sm:$0xff] %vm171, %v291
      %v325 = vld [vmem:[#allocation2] sm:$0xff]
      %v326 = vld [vmem:[#allocation2 + $0x8] sm:$0xff]
      %v327 = vld [vmem:[#allocation2 + $0x18] sm:$0xff]
      %v328 = vld [vmem:[#allocation2 + $0x20] sm:$0xff]
      %v329 = vld [vmem:[#allocation2 + $0x30] sm:$0xff]
      %v330 = vld [vmem:[#allocation2 + $0x38] sm:$0xff]
      %v331 = vld [vmem:[#allocation2 + $0x48] sm:$0xff]
      %v332 = vld [vmem:[#allocation2 + $0x50] sm:$0xff]
      %v333 = vld [vmem:[#allocation2 + $0x60] sm:$0xff]
      %v334 = vld [vmem:[#allocation2 + $0x68] sm:$0xff]
      %v335 = vld [vmem:[#allocation2 + $0x78] sm:$0xff]
      %v336 = vld [vmem:[#allocation2 + $0x80] sm:$0xff]
      %v337 = vld [vmem:[#allocation2 + $0x90] sm:$0xff]
      %v338 = vld [vmem:[#allocation2 + $0x98] sm:$0xff]
      %v339 = vld [vmem:[#allocation2 + $0xa8] sm:$0xff]
      %v340 = vld [vmem:[#allocation2 + $0xb0] sm:$0xff]
      %v341 = vld [vmem:[#allocation2 + $0xc0] sm:$0xff]
      %v342 = vld [vmem:[#allocation2 + $0xc8] sm:$0xff]
      %v343 = vld [vmem:[#allocation2 + $0xd8] sm:$0xff]
      %v344 = vld [vmem:[#allocation2 + $0xe0] sm:$0xff]
      %v345 = vld [vmem:[#allocation2 + $0xf0] sm:$0xff]
      %v346 = vld [vmem:[#allocation2 + $0xf8] sm:$0xff]
      %v347 = vld [vmem:[#allocation2 + $0x108] sm:$0xff]
      %v348 = vld [vmem:[#allocation2 + $0x110] sm:$0xff]
      %v349 = vld [vmem:[#allocation2 + $0x120] sm:$0xff]
      %v350 = vld [vmem:[#allocation2 + $0x128] sm:$0xff]
      %v351 = vld [vmem:[#allocation2 + $0x138] sm:$0xff]
      %v352 = vld [vmem:[#allocation2 + $0x140] sm:$0xff]
      %v353 = vld [vmem:[#allocation2 + $0x150] sm:$0xff]
      %v354 = vld [vmem:[#allocation2 + $0x158] sm:$0xff]
      %v355 = vld [vmem:[#allocation2 + $0x168] sm:$0xff]
      %v356 = vld [vmem:[#allocation2 + $0x170] sm:$0xff]
      %v357 = vld [vmem:[%s1] sm:$0xf]
      %v358 = vld [vmem:[#allocation2 + $0x1] sm:$0xff]
      %v359 = vld [vmem:[#allocation2 + $0x9] sm:$0xff]
      %v360 = vld [vmem:[#allocation2 + $0x19] sm:$0xff]
      %v361 = vld [vmem:[#allocation2 + $0x21] sm:$0xff]
      %v362 = vld [vmem:[#allocation2 + $0x31] sm:$0xff]
      %v363 = vld [vmem:[#allocation2 + $0x39] sm:$0xff]
      %v364 = vld [vmem:[#allocation2 + $0x49] sm:$0xff]
      %v365 = vld [vmem:[#allocation2 + $0x51] sm:$0xff]
      %v366 = vld [vmem:[#allocation2 + $0x61] sm:$0xff]
      %v367 = vld [vmem:[#allocation2 + $0x69] sm:$0xff]
      %v368 = vld [vmem:[#allocation2 + $0x79] sm:$0xff]
      %v369 = vld [vmem:[#allocation2 + $0x81] sm:$0xff]
      %v370 = vld [vmem:[#allocation2 + $0x91] sm:$0xff]
      %v371 = vld [vmem:[#allocation2 + $0x99] sm:$0xff]
      %v372 = vld [vmem:[#allocation2 + $0xa9] sm:$0xff]
      %v373 = vld [vmem:[#allocation2 + $0xb1] sm:$0xff]
      %v374 = vld [vmem:[#allocation2 + $0xc1] sm:$0xff]
      %v375 = vld [vmem:[#allocation2 + $0xc9] sm:$0xff]
      %v376 = vld [vmem:[#allocation2 + $0xd9] sm:$0xff]
      %v377 = vld [vmem:[#allocation2 + $0xe1] sm:$0xff]
      %v378 = vld [vmem:[#allocation2 + $0xf1] sm:$0xff]
      %v379 = vld [vmem:[#allocation2 + $0xf9] sm:$0xff]
      %v380 = vld [vmem:[#allocation2 + $0x109] sm:$0xff]
      %v381 = vld [vmem:[#allocation2 + $0x111] sm:$0xff]
      %v382 = vld [vmem:[#allocation2 + $0x121] sm:$0xff]
      %v383 = vld [vmem:[#allocation2 + $0x129] sm:$0xff]
      %v384 = vld [vmem:[#allocation2 + $0x139] sm:$0xff]
      %v385 = vld [vmem:[#allocation2 + $0x141] sm:$0xff]
      %v386 = vld [vmem:[#allocation2 + $0x151] sm:$0xff]
      %v387 = vld [vmem:[#allocation2 + $0x159] sm:$0xff]
      %v388 = vld [vmem:[#allocation2 + $0x169] sm:$0xff]
      %v389 = vld [vmem:[#allocation2 + $0x171] sm:$0xff]
      %s390 = scalar_lea.vmem %s1, 4
      %v391 = vld [vmem:[%s390] sm:$0xf]
      %v393 = vsel %vm171, %v358, 0
      %v396 = vsel %vm171, %v359, 0
      %v399 = vsel %vm171, %v360, 0
      %v402 = vsel %vm171, %v361, 0
      %v405 = vsel %vm171, %v362, 0
      %v408 = vsel %vm171, %v363, 0
      %v411 = vsel %vm171, %v364, 0
      %v414 = vsel %vm171, %v365, 0
      %v417 = vsel %vm171, %v366, 0
      %v420 = vsel %vm171, %v367, 0
      %v423 = vsel %vm171, %v368, 0
      %v426 = vsel %vm171, %v369, 0
      %v429 = vsel %vm171, %v370, 0
      %v432 = vsel %vm171, %v371, 0
      %v435 = vsel %vm171, %v372, 0
      %v438 = vsel %vm171, %v373, 0
      %v441 = vsel %vm171, %v374, 0
      %v444 = vsel %vm171, %v375, 0
      %v447 = vsel %vm171, %v376, 0
      %v450 = vsel %vm171, %v377, 0
      %v453 = vsel %vm171, %v378, 0
      %v456 = vsel %vm171, %v379, 0
      %v459 = vsel %vm171, %v380, 0
      %v462 = vsel %vm171, %v381, 0
      %v465 = vsel %vm171, %v382, 0
      %v468 = vsel %vm171, %v383, 0
      %v471 = vsel %vm171, %v384, 0
      %v474 = vsel %vm171, %v385, 0
      %v477 = vsel %vm171, %v386, 0
      %v480 = vsel %vm171, %v387, 0
      %v483 = vsel %vm171, %v388, 0
      %v486 = vsel %vm171, %v389, 0
      %vm488 = vcmask 1043456
      %v490 = vsel %vm488, %v391, 0
      %492 = vmatpush.msra.mxu0 0.0
      %493 = vmatpush.msra.mxu0 0.0
      %494 = vmatpush.msra.mxu0 0.0
      %495 = vmatpush.msra.mxu0 0.0
      %496 = vmatpush.msra.mxu0 0.0
      %497 = vmatpush.msra.mxu0 0.0
      %498 = vmatpush.msra.mxu0 0.0
      %499 = vmatpush.msra.mxu0 0.0
      %500 = vmatpush.msra.mxu0 0.0
      %501 = vmatpush.msra.mxu0 0.0
      %502 = vmatpush.msra.mxu0 0.0
      %503 = vmatpush.msra.mxu0 0.0
      %504 = vmatpush.msra.mxu0 0.0
      %505 = vmatpush.msra.mxu0 0.0
      %506 = vmatpush.msra.mxu0 0.0
      %507 = vmatpush.msra.mxu0 %v490
      %508 = vmatmul.f32.gmra.mxu0 %v393
      %v509 = vpop.f32.mrf.mxu0
      %v510 = vadd.f32 0.0, %v509
      %511 = vmatmul.f32.gmra.mxu0 %v396
      %v512 = vpop.f32.mrf.mxu0
      %v513 = vadd.f32 0.0, %v512
      %514 = vmatmul.f32.gmra.mxu0 %v399
      %v515 = vpop.f32.mrf.mxu0
      %v516 = vadd.f32 0.0, %v515
      %517 = vmatmul.f32.gmra.mxu0 %v402
      %v518 = vpop.f32.mrf.mxu0
      %v519 = vadd.f32 0.0, %v518
      %520 = vmatmul.f32.gmra.mxu0 %v405
      %v521 = vpop.f32.mrf.mxu0
      %v522 = vadd.f32 0.0, %v521
      %523 = vmatmul.f32.gmra.mxu0 %v408
      %v524 = vpop.f32.mrf.mxu0
      %v525 = vadd.f32 0.0, %v524
      %526 = vmatmul.f32.gmra.mxu0 %v411
      %v527 = vpop.f32.mrf.mxu0
      %v528 = vadd.f32 0.0, %v527
      %529 = vmatmul.f32.gmra.mxu0 %v414
      %v530 = vpop.f32.mrf.mxu0
      %v531 = vadd.f32 0.0, %v530
      %532 = vmatmul.f32.gmra.mxu0 %v417
      %v533 = vpop.f32.mrf.mxu0
      %v534 = vadd.f32 0.0, %v533
      %535 = vmatmul.f32.gmra.mxu0 %v420
      %v536 = vpop.f32.mrf.mxu0
      %v537 = vadd.f32 0.0, %v536
      %538 = vmatmul.f32.gmra.mxu0 %v423
      %v539 = vpop.f32.mrf.mxu0
      %v540 = vadd.f32 0.0, %v539
      %541 = vmatmul.f32.gmra.mxu0 %v426
      %v542 = vpop.f32.mrf.mxu0
      %v543 = vadd.f32 0.0, %v542
      %544 = vmatmul.f32.gmra.mxu0 %v429
      %v545 = vpop.f32.mrf.mxu0
      %v546 = vadd.f32 0.0, %v545
      %547 = vmatmul.f32.gmra.mxu0 %v432
      %v548 = vpop.f32.mrf.mxu0
      %v549 = vadd.f32 0.0, %v548
      %550 = vmatmul.f32.gmra.mxu0 %v435
      %v551 = vpop.f32.mrf.mxu0
      %v552 = vadd.f32 0.0, %v551
      %553 = vmatmul.f32.gmra.mxu0 %v438
      %v554 = vpop.f32.mrf.mxu0
      %v555 = vadd.f32 0.0, %v554
      %556 = vmatmul.f32.gmra.mxu0 %v441
      %v557 = vpop.f32.mrf.mxu0
      %v558 = vadd.f32 0.0, %v557
      %559 = vmatmul.f32.gmra.mxu0 %v444
      %v560 = vpop.f32.mrf.mxu0
      %v561 = vadd.f32 0.0, %v560
      %562 = vmatmul.f32.gmra.mxu0 %v447
      %v563 = vpop.f32.mrf.mxu0
      %v564 = vadd.f32 0.0, %v563
      %565 = vmatmul.f32.gmra.mxu0 %v450
      %v566 = vpop.f32.mrf.mxu0
      %v567 = vadd.f32 0.0, %v566
      %568 = vmatmul.f32.gmra.mxu0 %v453
      %v569 = vpop.f32.mrf.mxu0
      %v570 = vadd.f32 0.0, %v569
      %571 = vmatmul.f32.gmra.mxu0 %v456
      %v572 = vpop.f32.mrf.mxu0
      %v573 = vadd.f32 0.0, %v572
      %574 = vmatmul.f32.gmra.mxu0 %v459
      %v575 = vpop.f32.mrf.mxu0
      %v576 = vadd.f32 0.0, %v575
      %577 = vmatmul.f32.gmra.mxu0 %v462
      %v578 = vpop.f32.mrf.mxu0
      %v579 = vadd.f32 0.0, %v578
      %580 = vmatmul.f32.gmra.mxu0 %v465
      %v581 = vpop.f32.mrf.mxu0
      %v582 = vadd.f32 0.0, %v581
      %583 = vmatmul.f32.gmra.mxu0 %v468
      %v584 = vpop.f32.mrf.mxu0
      %v585 = vadd.f32 0.0, %v584
      %586 = vmatmul.f32.gmra.mxu0 %v471
      %v587 = vpop.f32.mrf.mxu0
      %v588 = vadd.f32 0.0, %v587
      %589 = vmatmul.f32.gmra.mxu0 %v474
      %v590 = vpop.f32.mrf.mxu0
      %v591 = vadd.f32 0.0, %v590
      %592 = vmatmul.f32.gmra.mxu0 %v477
      %v593 = vpop.f32.mrf.mxu0
      %v594 = vadd.f32 0.0, %v593
      %595 = vmatmul.f32.gmra.mxu0 %v480
      %v596 = vpop.f32.mrf.mxu0
      %v597 = vadd.f32 0.0, %v596
      %598 = vmatmul.f32.gmra.mxu0 %v483
      %v599 = vpop.f32.mrf.mxu0
      %v600 = vadd.f32 0.0, %v599
      %601 = vmatmul.f32.gmra.mxu0 %v486
      %v602 = vpop.f32.mrf.mxu0
      %v603 = vadd.f32 0.0, %v602
      %604 = vdwg.mxu0
      %v606 = vsel %vm171, %v325, 0
      %v609 = vsel %vm171, %v326, 0
      %v612 = vsel %vm171, %v327, 0
      %v615 = vsel %vm171, %v328, 0
      %v618 = vsel %vm171, %v329, 0
      %v621 = vsel %vm171, %v330, 0
      %v624 = vsel %vm171, %v331, 0
      %v627 = vsel %vm171, %v332, 0
      %v630 = vsel %vm171, %v333, 0
      %v633 = vsel %vm171, %v334, 0
      %v636 = vsel %vm171, %v335, 0
      %v639 = vsel %vm171, %v336, 0
      %v642 = vsel %vm171, %v337, 0
      %v645 = vsel %vm171, %v338, 0
      %v648 = vsel %vm171, %v339, 0
      %v651 = vsel %vm171, %v340, 0
      %v654 = vsel %vm171, %v341, 0
      %v657 = vsel %vm171, %v342, 0
      %v660 = vsel %vm171, %v343, 0
      %v663 = vsel %vm171, %v344, 0
      %v666 = vsel %vm171, %v345, 0
      %v669 = vsel %vm171, %v346, 0
      %v672 = vsel %vm171, %v347, 0
      %v675 = vsel %vm171, %v348, 0
      %v678 = vsel %vm171, %v349, 0
      %v681 = vsel %vm171, %v350, 0
      %v684 = vsel %vm171, %v351, 0
      %v687 = vsel %vm171, %v352, 0
      %v690 = vsel %vm171, %v353, 0
      %v693 = vsel %vm171, %v354, 0
      %v696 = vsel %vm171, %v355, 0
      %v699 = vsel %vm171, %v356, 0
      %v702 = vsel %vm488, %v357, 0
      %704 = vmatpush.msra.mxu0 0.0
      %705 = vmatpush.msra.mxu0 0.0
      %706 = vmatpush.msra.mxu0 0.0
      %707 = vmatpush.msra.mxu0 0.0
      %708 = vmatpush.msra.mxu0 0.0
      %709 = vmatpush.msra.mxu0 0.0
      %710 = vmatpush.msra.mxu0 0.0
      %711 = vmatpush.msra.mxu0 0.0
      %712 = vmatpush.msra.mxu0 0.0
      %713 = vmatpush.msra.mxu0 0.0
      %714 = vmatpush.msra.mxu0 0.0
      %715 = vmatpush.msra.mxu0 0.0
      %716 = vmatpush.msra.mxu0 0.0
      %717 = vmatpush.msra.mxu0 0.0
      %718 = vmatpush.msra.mxu0 0.0
      %719 = vmatpush.msra.mxu0 %v702
      %720 = vmatmul.f32.gmra.mxu0 %v606
      %v721 = vpop.f32.mrf.mxu0
      %v722 = vadd.f32 %v510, %v721
      %723 = vmatmul.f32.gmra.mxu0 %v609
      %v724 = vpop.f32.mrf.mxu0
      %v725 = vadd.f32 %v513, %v724
      %726 = vmatmul.f32.gmra.mxu0 %v612
      %v727 = vpop.f32.mrf.mxu0
      %v728 = vadd.f32 %v516, %v727
      %729 = vmatmul.f32.gmra.mxu0 %v615
      %v730 = vpop.f32.mrf.mxu0
      %v731 = vadd.f32 %v519, %v730
      %732 = vmatmul.f32.gmra.mxu0 %v618
      %v733 = vpop.f32.mrf.mxu0
      %v734 = vadd.f32 %v522, %v733
      %735 = vmatmul.f32.gmra.mxu0 %v621
      %v736 = vpop.f32.mrf.mxu0
      %v737 = vadd.f32 %v525, %v736
      %738 = vmatmul.f32.gmra.mxu0 %v624
      %v739 = vpop.f32.mrf.mxu0
      %v740 = vadd.f32 %v528, %v739
      %741 = vmatmul.f32.gmra.mxu0 %v627
      %v742 = vpop.f32.mrf.mxu0
      %v743 = vadd.f32 %v531, %v742
      %744 = vmatmul.f32.gmra.mxu0 %v630
      %v745 = vpop.f32.mrf.mxu0
      %v746 = vadd.f32 %v534, %v745
      %747 = vmatmul.f32.gmra.mxu0 %v633
      %v748 = vpop.f32.mrf.mxu0
      %v749 = vadd.f32 %v537, %v748
      %750 = vmatmul.f32.gmra.mxu0 %v636
      %v751 = vpop.f32.mrf.mxu0
      %v752 = vadd.f32 %v540, %v751
      %753 = vmatmul.f32.gmra.mxu0 %v639
      %v754 = vpop.f32.mrf.mxu0
      %v755 = vadd.f32 %v543, %v754
      %756 = vmatmul.f32.gmra.mxu0 %v642
      %v757 = vpop.f32.mrf.mxu0
      %v758 = vadd.f32 %v546, %v757
      %759 = vmatmul.f32.gmra.mxu0 %v645
      %v760 = vpop.f32.mrf.mxu0
      %v761 = vadd.f32 %v549, %v760
      %762 = vmatmul.f32.gmra.mxu0 %v648
      %v763 = vpop.f32.mrf.mxu0
      %v764 = vadd.f32 %v552, %v763
      %765 = vmatmul.f32.gmra.mxu0 %v651
      %v766 = vpop.f32.mrf.mxu0
      %v767 = vadd.f32 %v555, %v766
      %768 = vmatmul.f32.gmra.mxu0 %v654
      %v769 = vpop.f32.mrf.mxu0
      %v770 = vadd.f32 %v558, %v769
      %771 = vmatmul.f32.gmra.mxu0 %v657
      %v772 = vpop.f32.mrf.mxu0
      %v773 = vadd.f32 %v561, %v772
      %774 = vmatmul.f32.gmra.mxu0 %v660
      %v775 = vpop.f32.mrf.mxu0
      %v776 = vadd.f32 %v564, %v775
      %777 = vmatmul.f32.gmra.mxu0 %v663
      %v778 = vpop.f32.mrf.mxu0
      %v779 = vadd.f32 %v567, %v778
      %780 = vmatmul.f32.gmra.mxu0 %v666
      %v781 = vpop.f32.mrf.mxu0
      %v782 = vadd.f32 %v570, %v781
      %783 = vmatmul.f32.gmra.mxu0 %v669
      %v784 = vpop.f32.mrf.mxu0
      %v785 = vadd.f32 %v573, %v784
      %786 = vmatmul.f32.gmra.mxu0 %v672
      %v787 = vpop.f32.mrf.mxu0
      %v788 = vadd.f32 %v576, %v787
      %789 = vmatmul.f32.gmra.mxu0 %v675
      %v790 = vpop.f32.mrf.mxu0
      %v791 = vadd.f32 %v579, %v790
      %792 = vmatmul.f32.gmra.mxu0 %v678
      %v793 = vpop.f32.mrf.mxu0
      %v794 = vadd.f32 %v582, %v793
      %795 = vmatmul.f32.gmra.mxu0 %v681
      %v796 = vpop.f32.mrf.mxu0
      %v797 = vadd.f32 %v585, %v796
      %798 = vmatmul.f32.gmra.mxu0 %v684
      %v799 = vpop.f32.mrf.mxu0
      %v800 = vadd.f32 %v588, %v799
      %801 = vmatmul.f32.gmra.mxu0 %v687
      %v802 = vpop.f32.mrf.mxu0
      %v803 = vadd.f32 %v591, %v802
      %804 = vmatmul.f32.gmra.mxu0 %v690
      %v805 = vpop.f32.mrf.mxu0
      %v806 = vadd.f32 %v594, %v805
      %807 = vmatmul.f32.gmra.mxu0 %v693
      %v808 = vpop.f32.mrf.mxu0
      %v809 = vadd.f32 %v597, %v808
      %810 = vmatmul.f32.gmra.mxu0 %v696
      %v811 = vpop.f32.mrf.mxu0
      %v812 = vadd.f32 %v600, %v811
      %813 = vmatmul.f32.gmra.mxu0 %v699
      %v814 = vpop.f32.mrf.mxu0
      %v815 = vadd.f32 %v603, %v814
      %816 = vdwg.mxu0
      %v817 = vld [vmem:[#allocation2 + $0x2] sm:$0xff]
      %v818 = vld [vmem:[#allocation2 + $0xa] sm:$0xff]
      %v819 = vld [vmem:[#allocation2 + $0x1a] sm:$0xff]
      %v820 = vld [vmem:[#allocation2 + $0x22] sm:$0xff]
      %v821 = vld [vmem:[#allocation2 + $0x32] sm:$0xff]
      %v822 = vld [vmem:[#allocation2 + $0x3a] sm:$0xff]
      %v823 = vld [vmem:[#allocation2 + $0x4a] sm:$0xff]
      %v824 = vld [vmem:[#allocation2 + $0x52] sm:$0xff]
      %v825 = vld [vmem:[#allocation2 + $0x62] sm:$0xff]
      %v826 = vld [vmem:[#allocation2 + $0x6a] sm:$0xff]
      %v827 = vld [vmem:[#allocation2 + $0x7a] sm:$0xff]
      %v828 = vld [vmem:[#allocation2 + $0x82] sm:$0xff]
      %v829 = vld [vmem:[#allocation2 + $0x92] sm:$0xff]
      %v830 = vld [vmem:[#allocation2 + $0x9a] sm:$0xff]
      %v831 = vld [vmem:[#allocation2 + $0xaa] sm:$0xff]
      %v832 = vld [vmem:[#allocation2 + $0xb2] sm:$0xff]
      %v833 = vld [vmem:[#allocation2 + $0xc2] sm:$0xff]
      %v834 = vld [vmem:[#allocation2 + $0xca] sm:$0xff]
      %v835 = vld [vmem:[#allocation2 + $0xda] sm:$0xff]
      %v836 = vld [vmem:[#allocation2 + $0xe2] sm:$0xff]
      %v837 = vld [vmem:[#allocation2 + $0xf2] sm:$0xff]
      %v838 = vld [vmem:[#allocation2 + $0xfa] sm:$0xff]
      %v839 = vld [vmem:[#allocation2 + $0x10a] sm:$0xff]
      %v840 = vld [vmem:[#allocation2 + $0x112] sm:$0xff]
      %v841 = vld [vmem:[#allocation2 + $0x122] sm:$0xff]
      %v842 = vld [vmem:[#allocation2 + $0x12a] sm:$0xff]
      %v843 = vld [vmem:[#allocation2 + $0x13a] sm:$0xff]
      %v844 = vld [vmem:[#allocation2 + $0x142] sm:$0xff]
      %v845 = vld [vmem:[#allocation2 + $0x152] sm:$0xff]
      %v846 = vld [vmem:[#allocation2 + $0x15a] sm:$0xff]
      %v847 = vld [vmem:[#allocation2 + $0x16a] sm:$0xff]
      %v848 = vld [vmem:[#allocation2 + $0x172] sm:$0xff]
      %s849 = scalar_lea.vmem %s1, 8
      %v850 = vld [vmem:[%s849] sm:$0xf]
      %v852 = vsel %vm171, %v817, 0
      %v855 = vsel %vm171, %v818, 0
      %v858 = vsel %vm171, %v819, 0
      %v861 = vsel %vm171, %v820, 0
      %v864 = vsel %vm171, %v821, 0
      %v867 = vsel %vm171, %v822, 0
      %v870 = vsel %vm171, %v823, 0
      %v873 = vsel %vm171, %v824, 0
      %v876 = vsel %vm171, %v825, 0
      %v879 = vsel %vm171, %v826, 0
      %v882 = vsel %vm171, %v827, 0
      %v885 = vsel %vm171, %v828, 0
      %v888 = vsel %vm171, %v829, 0
      %v891 = vsel %vm171, %v830, 0
      %v894 = vsel %vm171, %v831, 0
      %v897 = vsel %vm171, %v832, 0
      %v900 = vsel %vm171, %v833, 0
      %v903 = vsel %vm171, %v834, 0
      %v906 = vsel %vm171, %v835, 0
      %v909 = vsel %vm171, %v836, 0
      %v912 = vsel %vm171, %v837, 0
      %v915 = vsel %vm171, %v838, 0
      %v918 = vsel %vm171, %v839, 0
      %v921 = vsel %vm171, %v840, 0
      %v924 = vsel %vm171, %v841, 0
      %v927 = vsel %vm171, %v842, 0
      %v930 = vsel %vm171, %v843, 0
      %v933 = vsel %vm171, %v844, 0
      %v936 = vsel %vm171, %v845, 0
      %v939 = vsel %vm171, %v846, 0
      %v942 = vsel %vm171, %v847, 0
      %v945 = vsel %vm171, %v848, 0
      %v948 = vsel %vm488, %v850, 0
      %950 = vmatpush.msra.mxu0 0.0
      %951 = vmatpush.msra.mxu0 0.0
      %952 = vmatpush.msra.mxu0 0.0
      %953 = vmatpush.msra.mxu0 0.0
      %954 = vmatpush.msra.mxu0 0.0
      %955 = vmatpush.msra.mxu0 0.0
      %956 = vmatpush.msra.mxu0 0.0
      %957 = vmatpush.msra.mxu0 0.0
      %958 = vmatpush.msra.mxu0 0.0
      %959 = vmatpush.msra.mxu0 0.0
      %960 = vmatpush.msra.mxu0 0.0
      %961 = vmatpush.msra.mxu0 0.0
      %962 = vmatpush.msra.mxu0 0.0
      %963 = vmatpush.msra.mxu0 0.0
      %964 = vmatpush.msra.mxu0 0.0
      %965 = vmatpush.msra.mxu0 %v948
      %966 = vmatmul.f32.gmra.mxu0 %v852
      %v967 = vpop.f32.mrf.mxu0
      %v968 = vadd.f32 0.0, %v967
      %969 = vmatmul.f32.gmra.mxu0 %v855
      %v970 = vpop.f32.mrf.mxu0
      %v971 = vadd.f32 0.0, %v970
      %972 = vmatmul.f32.gmra.mxu0 %v858
      %v973 = vpop.f32.mrf.mxu0
      %v974 = vadd.f32 0.0, %v973
      %975 = vmatmul.f32.gmra.mxu0 %v861
      %v976 = vpop.f32.mrf.mxu0
      %v977 = vadd.f32 0.0, %v976
      %978 = vmatmul.f32.gmra.mxu0 %v864
      %v979 = vpop.f32.mrf.mxu0
      %v980 = vadd.f32 0.0, %v979
      %981 = vmatmul.f32.gmra.mxu0 %v867
      %v982 = vpop.f32.mrf.mxu0
      %v983 = vadd.f32 0.0, %v982
      %984 = vmatmul.f32.gmra.mxu0 %v870
      %v985 = vpop.f32.mrf.mxu0
      %v986 = vadd.f32 0.0, %v985
      %987 = vmatmul.f32.gmra.mxu0 %v873
      %v988 = vpop.f32.mrf.mxu0
      %v989 = vadd.f32 0.0, %v988
      %990 = vmatmul.f32.gmra.mxu0 %v876
      %v991 = vpop.f32.mrf.mxu0
      %v992 = vadd.f32 0.0, %v991
      %993 = vmatmul.f32.gmra.mxu0 %v879
      %v994 = vpop.f32.mrf.mxu0
      %v995 = vadd.f32 0.0, %v994
      %996 = vmatmul.f32.gmra.mxu0 %v882
      %v997 = vpop.f32.mrf.mxu0
      %v998 = vadd.f32 0.0, %v997
      %999 = vmatmul.f32.gmra.mxu0 %v885
      %v1000 = vpop.f32.mrf.mxu0
      %v1001 = vadd.f32 0.0, %v1000
      %1002 = vmatmul.f32.gmra.mxu0 %v888
      %v1003 = vpop.f32.mrf.mxu0
      %v1004 = vadd.f32 0.0, %v1003
      %1005 = vmatmul.f32.gmra.mxu0 %v891
      %v1006 = vpop.f32.mrf.mxu0
      %v1007 = vadd.f32 0.0, %v1006
      %1008 = vmatmul.f32.gmra.mxu0 %v894
      %v1009 = vpop.f32.mrf.mxu0
      %v1010 = vadd.f32 0.0, %v1009
      %1011 = vmatmul.f32.gmra.mxu0 %v897
      %v1012 = vpop.f32.mrf.mxu0
      %v1013 = vadd.f32 0.0, %v1012
      %1014 = vmatmul.f32.gmra.mxu0 %v900
      %v1015 = vpop.f32.mrf.mxu0
      %v1016 = vadd.f32 0.0, %v1015
      %1017 = vmatmul.f32.gmra.mxu0 %v903
      %v1018 = vpop.f32.mrf.mxu0
      %v1019 = vadd.f32 0.0, %v1018
      %1020 = vmatmul.f32.gmra.mxu0 %v906
      %v1021 = vpop.f32.mrf.mxu0
      %v1022 = vadd.f32 0.0, %v1021
      %1023 = vmatmul.f32.gmra.mxu0 %v909
      %v1024 = vpop.f32.mrf.mxu0
      %v1025 = vadd.f32 0.0, %v1024
      %1026 = vmatmul.f32.gmra.mxu0 %v912
      %v1027 = vpop.f32.mrf.mxu0
      %v1028 = vadd.f32 0.0, %v1027
      %1029 = vmatmul.f32.gmra.mxu0 %v915
      %v1030 = vpop.f32.mrf.mxu0
      %v1031 = vadd.f32 0.0, %v1030
      %1032 = vmatmul.f32.gmra.mxu0 %v918
      %v1033 = vpop.f32.mrf.mxu0
      %v1034 = vadd.f32 0.0, %v1033
      %1035 = vmatmul.f32.gmra.mxu0 %v921
      %v1036 = vpop.f32.mrf.mxu0
      %v1037 = vadd.f32 0.0, %v1036
      %1038 = vmatmul.f32.gmra.mxu0 %v924
      %v1039 = vpop.f32.mrf.mxu0
      %v1040 = vadd.f32 0.0, %v1039
      %1041 = vmatmul.f32.gmra.mxu0 %v927
      %v1042 = vpop.f32.mrf.mxu0
      %v1043 = vadd.f32 0.0, %v1042
      %1044 = vmatmul.f32.gmra.mxu0 %v930
      %v1045 = vpop.f32.mrf.mxu0
      %v1046 = vadd.f32 0.0, %v1045
      %1047 = vmatmul.f32.gmra.mxu0 %v933
      %v1048 = vpop.f32.mrf.mxu0
      %v1049 = vadd.f32 0.0, %v1048
      %1050 = vmatmul.f32.gmra.mxu0 %v936
      %v1051 = vpop.f32.mrf.mxu0
      %v1052 = vadd.f32 0.0, %v1051
      %1053 = vmatmul.f32.gmra.mxu0 %v939
      %v1054 = vpop.f32.mrf.mxu0
      %v1055 = vadd.f32 0.0, %v1054
      %1056 = vmatmul.f32.gmra.mxu0 %v942
      %v1057 = vpop.f32.mrf.mxu0
      %v1058 = vadd.f32 0.0, %v1057
      %1059 = vmatmul.f32.gmra.mxu0 %v945
      %v1060 = vpop.f32.mrf.mxu0
      %v1061 = vadd.f32 0.0, %v1060
      %1062 = vdwg.mxu0
      %v1063 = vadd.f32 %v722, %v968
      %v1064 = vadd.f32 %v725, %v971
      %v1065 = vadd.f32 %v728, %v974
      %v1066 = vadd.f32 %v731, %v977
      %v1067 = vadd.f32 %v734, %v980
      %v1068 = vadd.f32 %v737, %v983
      %v1069 = vadd.f32 %v740, %v986
      %v1070 = vadd.f32 %v743, %v989
      %v1071 = vadd.f32 %v746, %v992
      %v1072 = vadd.f32 %v749, %v995
      %v1073 = vadd.f32 %v752, %v998
      %v1074 = vadd.f32 %v755, %v1001
      %v1075 = vadd.f32 %v758, %v1004
      %v1076 = vadd.f32 %v761, %v1007
      %v1077 = vadd.f32 %v764, %v1010
      %v1078 = vadd.f32 %v767, %v1013
      %v1079 = vadd.f32 %v770, %v1016
      %v1080 = vadd.f32 %v773, %v1019
      %v1081 = vadd.f32 %v776, %v1022
      %v1082 = vadd.f32 %v779, %v1025
      %v1083 = vadd.f32 %v782, %v1028
      %v1084 = vadd.f32 %v785, %v1031
      %v1085 = vadd.f32 %v788, %v1034
      %v1086 = vadd.f32 %v791, %v1037
      %v1087 = vadd.f32 %v794, %v1040
      %v1088 = vadd.f32 %v797, %v1043
      %v1089 = vadd.f32 %v800, %v1046
      %v1090 = vadd.f32 %v803, %v1049
      %v1091 = vadd.f32 %v806, %v1052
      %v1092 = vadd.f32 %v809, %v1055
      %v1093 = vadd.f32 %v812, %v1058
      %v1094 = vadd.f32 %v815, %v1061
      %v1095 = vld [vmem:[%s292] sm:$0xff]
      %v1096 = vld [vmem:[%s292 + $0x8] sm:$0xff]
      %v1097 = vld [vmem:[%s292 + $0x18] sm:$0xff]
      %v1098 = vld [vmem:[%s292 + $0x20] sm:$0xff]
      %v1099 = vld [vmem:[%s292 + $0x30] sm:$0xff]
      %v1100 = vld [vmem:[%s292 + $0x38] sm:$0xff]
      %v1101 = vld [vmem:[%s292 + $0x48] sm:$0xff]
      %v1102 = vld [vmem:[%s292 + $0x50] sm:$0xff]
      %v1103 = vld [vmem:[%s292 + $0x60] sm:$0xff]
      %v1104 = vld [vmem:[%s292 + $0x68] sm:$0xff]
      %v1105 = vld [vmem:[%s292 + $0x78] sm:$0xff]
      %v1106 = vld [vmem:[%s292 + $0x80] sm:$0xff]
      %v1107 = vld [vmem:[%s292 + $0x90] sm:$0xff]
      %v1108 = vld [vmem:[%s292 + $0x98] sm:$0xff]
      %v1109 = vld [vmem:[%s292 + $0xa8] sm:$0xff]
      %v1110 = vld [vmem:[%s292 + $0xb0] sm:$0xff]
      %v1111 = vld [vmem:[%s292 + $0xc0] sm:$0xff]
      %v1112 = vld [vmem:[%s292 + $0xc8] sm:$0xff]
      %v1113 = vld [vmem:[%s292 + $0xd8] sm:$0xff]
      %v1114 = vld [vmem:[%s292 + $0xe0] sm:$0xff]
      %v1115 = vld [vmem:[%s292 + $0xf0] sm:$0xff]
      %v1116 = vld [vmem:[%s292 + $0xf8] sm:$0xff]
      %v1117 = vld [vmem:[%s292 + $0x108] sm:$0xff]
      %v1118 = vld [vmem:[%s292 + $0x110] sm:$0xff]
      %v1119 = vld [vmem:[%s292 + $0x120] sm:$0xff]
      %v1120 = vld [vmem:[%s292 + $0x128] sm:$0xff]
      %v1121 = vld [vmem:[%s292 + $0x138] sm:$0xff]
      %v1122 = vld [vmem:[%s292 + $0x140] sm:$0xff]
      %v1123 = vld [vmem:[%s292 + $0x150] sm:$0xff]
      %v1124 = vld [vmem:[%s292 + $0x158] sm:$0xff]
      %v1125 = vld [vmem:[%s292 + $0x168] sm:$0xff]
      %v1126 = vld [vmem:[%s292 + $0x170] sm:$0xff]
      %s1127 = scalar_lea.vmem %s1, 12
      %v1128 = vld [vmem:[%s1127] sm:$0xf]
      %v1130 = vsel %vm171, %v1095, 0
      %v1133 = vsel %vm171, %v1096, 0
      %v1136 = vsel %vm171, %v1097, 0
      %v1139 = vsel %vm171, %v1098, 0
      %v1142 = vsel %vm171, %v1099, 0
      %v1145 = vsel %vm171, %v1100, 0
      %v1148 = vsel %vm171, %v1101, 0
      %v1151 = vsel %vm171, %v1102, 0
      %v1154 = vsel %vm171, %v1103, 0
      %v1157 = vsel %vm171, %v1104, 0
      %v1160 = vsel %vm171, %v1105, 0
      %v1163 = vsel %vm171, %v1106, 0
      %v1166 = vsel %vm171, %v1107, 0
      %v1169 = vsel %vm171, %v1108, 0
      %v1172 = vsel %vm171, %v1109, 0
      %v1175 = vsel %vm171, %v1110, 0
      %v1178 = vsel %vm171, %v1111, 0
      %v1181 = vsel %vm171, %v1112, 0
      %v1184 = vsel %vm171, %v1113, 0
      %v1187 = vsel %vm171, %v1114, 0
      %v1190 = vsel %vm171, %v1115, 0
      %v1193 = vsel %vm171, %v1116, 0
      %v1196 = vsel %vm171, %v1117, 0
      %v1199 = vsel %vm171, %v1118, 0
      %v1202 = vsel %vm171, %v1119, 0
      %v1205 = vsel %vm171, %v1120, 0
      %v1208 = vsel %vm171, %v1121, 0
      %v1211 = vsel %vm171, %v1122, 0
      %v1214 = vsel %vm171, %v1123, 0
      %v1217 = vsel %vm171, %v1124, 0
      %v1220 = vsel %vm171, %v1125, 0
      %v1223 = vsel %vm171, %v1126, 0
      %v1226 = vsel %vm488, %v1128, 0
      %1228 = vmatpush.msra.mxu0 0.0
      %1229 = vmatpush.msra.mxu0 0.0
      %1230 = vmatpush.msra.mxu0 0.0
      %1231 = vmatpush.msra.mxu0 0.0
      %1232 = vmatpush.msra.mxu0 0.0
      %1233 = vmatpush.msra.mxu0 0.0
      %1234 = vmatpush.msra.mxu0 0.0
      %1235 = vmatpush.msra.mxu0 0.0
      %1236 = vmatpush.msra.mxu0 0.0
      %1237 = vmatpush.msra.mxu0 0.0
      %1238 = vmatpush.msra.mxu0 0.0
      %1239 = vmatpush.msra.mxu0 0.0
      %1240 = vmatpush.msra.mxu0 0.0
      %1241 = vmatpush.msra.mxu0 0.0
      %1242 = vmatpush.msra.mxu0 0.0
      %1243 = vmatpush.msra.mxu0 %v1226
      %1244 = vmatmul.f32.gmra.mxu0 %v1130
      %v1245 = vpop.f32.mrf.mxu0
      %v1246 = vadd.f32 0.0, %v1245
      %1247 = vmatmul.f32.gmra.mxu0 %v1133
      %v1248 = vpop.f32.mrf.mxu0
      %v1249 = vadd.f32 0.0, %v1248
      %1250 = vmatmul.f32.gmra.mxu0 %v1136
      %v1251 = vpop.f32.mrf.mxu0
      %v1252 = vadd.f32 0.0, %v1251
      %1253 = vmatmul.f32.gmra.mxu0 %v1139
      %v1254 = vpop.f32.mrf.mxu0
      %v1255 = vadd.f32 0.0, %v1254
      %1256 = vmatmul.f32.gmra.mxu0 %v1142
      %v1257 = vpop.f32.mrf.mxu0
      %v1258 = vadd.f32 0.0, %v1257
      %1259 = vmatmul.f32.gmra.mxu0 %v1145
      %v1260 = vpop.f32.mrf.mxu0
      %v1261 = vadd.f32 0.0, %v1260
      %1262 = vmatmul.f32.gmra.mxu0 %v1148
      %v1263 = vpop.f32.mrf.mxu0
      %v1264 = vadd.f32 0.0, %v1263
      %1265 = vmatmul.f32.gmra.mxu0 %v1151
      %v1266 = vpop.f32.mrf.mxu0
      %v1267 = vadd.f32 0.0, %v1266
      %1268 = vmatmul.f32.gmra.mxu0 %v1154
      %v1269 = vpop.f32.mrf.mxu0
      %v1270 = vadd.f32 0.0, %v1269
      %1271 = vmatmul.f32.gmra.mxu0 %v1157
      %v1272 = vpop.f32.mrf.mxu0
      %v1273 = vadd.f32 0.0, %v1272
      %1274 = vmatmul.f32.gmra.mxu0 %v1160
      %v1275 = vpop.f32.mrf.mxu0
      %v1276 = vadd.f32 0.0, %v1275
      %1277 = vmatmul.f32.gmra.mxu0 %v1163
      %v1278 = vpop.f32.mrf.mxu0
      %v1279 = vadd.f32 0.0, %v1278
      %1280 = vmatmul.f32.gmra.mxu0 %v1166
      %v1281 = vpop.f32.mrf.mxu0
      %v1282 = vadd.f32 0.0, %v1281
      %1283 = vmatmul.f32.gmra.mxu0 %v1169
      %v1284 = vpop.f32.mrf.mxu0
      %v1285 = vadd.f32 0.0, %v1284
      %1286 = vmatmul.f32.gmra.mxu0 %v1172
      %v1287 = vpop.f32.mrf.mxu0
      %v1288 = vadd.f32 0.0, %v1287
      %1289 = vmatmul.f32.gmra.mxu0 %v1175
      %v1290 = vpop.f32.mrf.mxu0
      %v1291 = vadd.f32 0.0, %v1290
      %1292 = vmatmul.f32.gmra.mxu0 %v1178
      %v1293 = vpop.f32.mrf.mxu0
      %v1294 = vadd.f32 0.0, %v1293
      %1295 = vmatmul.f32.gmra.mxu0 %v1181
      %v1296 = vpop.f32.mrf.mxu0
      %v1297 = vadd.f32 0.0, %v1296
      %1298 = vmatmul.f32.gmra.mxu0 %v1184
      %v1299 = vpop.f32.mrf.mxu0
      %v1300 = vadd.f32 0.0, %v1299
      %1301 = vmatmul.f32.gmra.mxu0 %v1187
      %v1302 = vpop.f32.mrf.mxu0
      %v1303 = vadd.f32 0.0, %v1302
      %1304 = vmatmul.f32.gmra.mxu0 %v1190
      %v1305 = vpop.f32.mrf.mxu0
      %v1306 = vadd.f32 0.0, %v1305
      %1307 = vmatmul.f32.gmra.mxu0 %v1193
      %v1308 = vpop.f32.mrf.mxu0
      %v1309 = vadd.f32 0.0, %v1308
      %1310 = vmatmul.f32.gmra.mxu0 %v1196
      %v1311 = vpop.f32.mrf.mxu0
      %v1312 = vadd.f32 0.0, %v1311
      %1313 = vmatmul.f32.gmra.mxu0 %v1199
      %v1314 = vpop.f32.mrf.mxu0
      %v1315 = vadd.f32 0.0, %v1314
      %1316 = vmatmul.f32.gmra.mxu0 %v1202
      %v1317 = vpop.f32.mrf.mxu0
      %v1318 = vadd.f32 0.0, %v1317
      %1319 = vmatmul.f32.gmra.mxu0 %v1205
      %v1320 = vpop.f32.mrf.mxu0
      %v1321 = vadd.f32 0.0, %v1320
      %1322 = vmatmul.f32.gmra.mxu0 %v1208
      %v1323 = vpop.f32.mrf.mxu0
      %v1324 = vadd.f32 0.0, %v1323
      %1325 = vmatmul.f32.gmra.mxu0 %v1211
      %v1326 = vpop.f32.mrf.mxu0
      %v1327 = vadd.f32 0.0, %v1326
      %1328 = vmatmul.f32.gmra.mxu0 %v1214
      %v1329 = vpop.f32.mrf.mxu0
      %v1330 = vadd.f32 0.0, %v1329
      %1331 = vmatmul.f32.gmra.mxu0 %v1217
      %v1332 = vpop.f32.mrf.mxu0
      %v1333 = vadd.f32 0.0, %v1332
      %1334 = vmatmul.f32.gmra.mxu0 %v1220
      %v1335 = vpop.f32.mrf.mxu0
      %v1336 = vadd.f32 0.0, %v1335
      %1337 = vmatmul.f32.gmra.mxu0 %v1223
      %v1338 = vpop.f32.mrf.mxu0
      %v1339 = vadd.f32 0.0, %v1338
      %1340 = vdwg.mxu0
      %v1341 = vadd.f32 %v1063, %v1246
      %v1342 = vadd.f32 %v1064, %v1249
      %v1343 = vadd.f32 %v1065, %v1252
      %v1344 = vadd.f32 %v1066, %v1255
      %v1345 = vadd.f32 %v1067, %v1258
      %v1346 = vadd.f32 %v1068, %v1261
      %v1347 = vadd.f32 %v1069, %v1264
      %v1348 = vadd.f32 %v1070, %v1267
      %v1349 = vadd.f32 %v1071, %v1270
      %v1350 = vadd.f32 %v1072, %v1273
      %v1351 = vadd.f32 %v1073, %v1276
      %v1352 = vadd.f32 %v1074, %v1279
      %v1353 = vadd.f32 %v1075, %v1282
      %v1354 = vadd.f32 %v1076, %v1285
      %v1355 = vadd.f32 %v1077, %v1288
      %v1356 = vadd.f32 %v1078, %v1291
      %v1357 = vadd.f32 %v1079, %v1294
      %v1358 = vadd.f32 %v1080, %v1297
      %v1359 = vadd.f32 %v1081, %v1300
      %v1360 = vadd.f32 %v1082, %v1303
      %v1361 = vadd.f32 %v1083, %v1306
      %v1362 = vadd.f32 %v1084, %v1309
      %v1363 = vadd.f32 %v1085, %v1312
      %v1364 = vadd.f32 %v1086, %v1315
      %v1365 = vadd.f32 %v1087, %v1318
      %v1366 = vadd.f32 %v1088, %v1321
      %v1367 = vadd.f32 %v1089, %v1324
      %v1368 = vadd.f32 %v1090, %v1327
      %v1369 = vadd.f32 %v1091, %v1330
      %v1370 = vadd.f32 %v1092, %v1333
      %v1371 = vadd.f32 %v1093, %v1336
      %v1372 = vadd.f32 %v1094, %v1339
      %v1373 = vld [vmem:[%s292 + $0x1] sm:$0xff]
      %v1374 = vld [vmem:[%s292 + $0x9] sm:$0xff]
      %v1375 = vld [vmem:[%s292 + $0x19] sm:$0xff]
      %v1376 = vld [vmem:[%s292 + $0x21] sm:$0xff]
      %v1377 = vld [vmem:[%s292 + $0x31] sm:$0xff]
      %v1378 = vld [vmem:[%s292 + $0x39] sm:$0xff]
      %v1379 = vld [vmem:[%s292 + $0x49] sm:$0xff]
      %v1380 = vld [vmem:[%s292 + $0x51] sm:$0xff]
      %v1381 = vld [vmem:[%s292 + $0x61] sm:$0xff]
      %v1382 = vld [vmem:[%s292 + $0x69] sm:$0xff]
      %v1383 = vld [vmem:[%s292 + $0x79] sm:$0xff]
      %v1384 = vld [vmem:[%s292 + $0x81] sm:$0xff]
      %v1385 = vld [vmem:[%s292 + $0x91] sm:$0xff]
      %v1386 = vld [vmem:[%s292 + $0x99] sm:$0xff]
      %v1387 = vld [vmem:[%s292 + $0xa9] sm:$0xff]
      %v1388 = vld [vmem:[%s292 + $0xb1] sm:$0xff]
      %v1389 = vld [vmem:[%s292 + $0xc1] sm:$0xff]
      %v1390 = vld [vmem:[%s292 + $0xc9] sm:$0xff]
      %v1391 = vld [vmem:[%s292 + $0xd9] sm:$0xff]
      %v1392 = vld [vmem:[%s292 + $0xe1] sm:$0xff]
      %v1393 = vld [vmem:[%s292 + $0xf1] sm:$0xff]
      %v1394 = vld [vmem:[%s292 + $0xf9] sm:$0xff]
      %v1395 = vld [vmem:[%s292 + $0x109] sm:$0xff]
      %v1396 = vld [vmem:[%s292 + $0x111] sm:$0xff]
      %v1397 = vld [vmem:[%s292 + $0x121] sm:$0xff]
      %v1398 = vld [vmem:[%s292 + $0x129] sm:$0xff]
      %v1399 = vld [vmem:[%s292 + $0x139] sm:$0xff]
      %v1400 = vld [vmem:[%s292 + $0x141] sm:$0xff]
      %v1401 = vld [vmem:[%s292 + $0x151] sm:$0xff]
      %v1402 = vld [vmem:[%s292 + $0x159] sm:$0xff]
      %v1403 = vld [vmem:[%s292 + $0x169] sm:$0xff]
      %v1404 = vld [vmem:[%s292 + $0x171] sm:$0xff]
      %s1405 = scalar_lea.vmem %s1, 16
      %v1406 = vld [vmem:[%s1405] sm:$0xf]
      %v1408 = vsel %vm171, %v1373, 0
      %v1411 = vsel %vm171, %v1374, 0
      %v1414 = vsel %vm171, %v1375, 0
      %v1417 = vsel %vm171, %v1376, 0
      %v1420 = vsel %vm171, %v1377, 0
      %v1423 = vsel %vm171, %v1378, 0
      %v1426 = vsel %vm171, %v1379, 0
      %v1429 = vsel %vm171, %v1380, 0
      %v1432 = vsel %vm171, %v1381, 0
      %v1435 = vsel %vm171, %v1382, 0
      %v1438 = vsel %vm171, %v1383, 0
      %v1441 = vsel %vm171, %v1384, 0
      %v1444 = vsel %vm171, %v1385, 0
      %v1447 = vsel %vm171, %v1386, 0
      %v1450 = vsel %vm171, %v1387, 0
      %v1453 = vsel %vm171, %v1388, 0
      %v1456 = vsel %vm171, %v1389, 0
      %v1459 = vsel %vm171, %v1390, 0
      %v1462 = vsel %vm171, %v1391, 0
      %v1465 = vsel %vm171, %v1392, 0
      %v1468 = vsel %vm171, %v1393, 0
      %v1471 = vsel %vm171, %v1394, 0
      %v1474 = vsel %vm171, %v1395, 0
      %v1477 = vsel %vm171, %v1396, 0
      %v1480 = vsel %vm171, %v1397, 0
      %v1483 = vsel %vm171, %v1398, 0
      %v1486 = vsel %vm171, %v1399, 0
      %v1489 = vsel %vm171, %v1400, 0
      %v1492 = vsel %vm171, %v1401, 0
      %v1495 = vsel %vm171, %v1402, 0
      %v1498 = vsel %vm171, %v1403, 0
      %v1501 = vsel %vm171, %v1404, 0
      %v1504 = vsel %vm488, %v1406, 0
      %1506 = vmatpush.msra.mxu0 0.0
      %1507 = vmatpush.msra.mxu0 0.0
      %1508 = vmatpush.msra.mxu0 0.0
      %1509 = vmatpush.msra.mxu0 0.0
      %1510 = vmatpush.msra.mxu0 0.0
      %1511 = vmatpush.msra.mxu0 0.0
      %1512 = vmatpush.msra.mxu0 0.0
      %1513 = vmatpush.msra.mxu0 0.0
      %1514 = vmatpush.msra.mxu0 0.0
      %1515 = vmatpush.msra.mxu0 0.0
      %1516 = vmatpush.msra.mxu0 0.0
      %1517 = vmatpush.msra.mxu0 0.0
      %1518 = vmatpush.msra.mxu0 0.0
      %1519 = vmatpush.msra.mxu0 0.0
      %1520 = vmatpush.msra.mxu0 0.0
      %1521 = vmatpush.msra.mxu0 %v1504
      %1522 = vmatmul.f32.gmra.mxu0 %v1408
      %v1523 = vpop.f32.mrf.mxu0
      %v1524 = vadd.f32 0.0, %v1523
      %1525 = vmatmul.f32.gmra.mxu0 %v1411
      %v1526 = vpop.f32.mrf.mxu0
      %v1527 = vadd.f32 0.0, %v1526
      %1528 = vmatmul.f32.gmra.mxu0 %v1414
      %v1529 = vpop.f32.mrf.mxu0
      %v1530 = vadd.f32 0.0, %v1529
      %1531 = vmatmul.f32.gmra.mxu0 %v1417
      %v1532 = vpop.f32.mrf.mxu0
      %v1533 = vadd.f32 0.0, %v1532
      %1534 = vmatmul.f32.gmra.mxu0 %v1420
      %v1535 = vpop.f32.mrf.mxu0
      %v1536 = vadd.f32 0.0, %v1535
      %1537 = vmatmul.f32.gmra.mxu0 %v1423
      %v1538 = vpop.f32.mrf.mxu0
      %v1539 = vadd.f32 0.0, %v1538
      %1540 = vmatmul.f32.gmra.mxu0 %v1426
      %v1541 = vpop.f32.mrf.mxu0
      %v1542 = vadd.f32 0.0, %v1541
      %1543 = vmatmul.f32.gmra.mxu0 %v1429
      %v1544 = vpop.f32.mrf.mxu0
      %v1545 = vadd.f32 0.0, %v1544
      %1546 = vmatmul.f32.gmra.mxu0 %v1432
      %v1547 = vpop.f32.mrf.mxu0
      %v1548 = vadd.f32 0.0, %v1547
      %1549 = vmatmul.f32.gmra.mxu0 %v1435
      %v1550 = vpop.f32.mrf.mxu0
      %v1551 = vadd.f32 0.0, %v1550
      %1552 = vmatmul.f32.gmra.mxu0 %v1438
      %v1553 = vpop.f32.mrf.mxu0
      %v1554 = vadd.f32 0.0, %v1553
      %1555 = vmatmul.f32.gmra.mxu0 %v1441
      %v1556 = vpop.f32.mrf.mxu0
      %v1557 = vadd.f32 0.0, %v1556
      %1558 = vmatmul.f32.gmra.mxu0 %v1444
      %v1559 = vpop.f32.mrf.mxu0
      %v1560 = vadd.f32 0.0, %v1559
      %1561 = vmatmul.f32.gmra.mxu0 %v1447
      %v1562 = vpop.f32.mrf.mxu0
      %v1563 = vadd.f32 0.0, %v1562
      %1564 = vmatmul.f32.gmra.mxu0 %v1450
      %v1565 = vpop.f32.mrf.mxu0
      %v1566 = vadd.f32 0.0, %v1565
      %1567 = vmatmul.f32.gmra.mxu0 %v1453
      %v1568 = vpop.f32.mrf.mxu0
      %v1569 = vadd.f32 0.0, %v1568
      %1570 = vmatmul.f32.gmra.mxu0 %v1456
      %v1571 = vpop.f32.mrf.mxu0
      %v1572 = vadd.f32 0.0, %v1571
      %1573 = vmatmul.f32.gmra.mxu0 %v1459
      %v1574 = vpop.f32.mrf.mxu0
      %v1575 = vadd.f32 0.0, %v1574
      %1576 = vmatmul.f32.gmra.mxu0 %v1462
      %v1577 = vpop.f32.mrf.mxu0
      %v1578 = vadd.f32 0.0, %v1577
      %1579 = vmatmul.f32.gmra.mxu0 %v1465
      %v1580 = vpop.f32.mrf.mxu0
      %v1581 = vadd.f32 0.0, %v1580
      %1582 = vmatmul.f32.gmra.mxu0 %v1468
      %v1583 = vpop.f32.mrf.mxu0
      %v1584 = vadd.f32 0.0, %v1583
      %1585 = vmatmul.f32.gmra.mxu0 %v1471
      %v1586 = vpop.f32.mrf.mxu0
      %v1587 = vadd.f32 0.0, %v1586
      %1588 = vmatmul.f32.gmra.mxu0 %v1474
      %v1589 = vpop.f32.mrf.mxu0
      %v1590 = vadd.f32 0.0, %v1589
      %1591 = vmatmul.f32.gmra.mxu0 %v1477
      %v1592 = vpop.f32.mrf.mxu0
      %v1593 = vadd.f32 0.0, %v1592
      %1594 = vmatmul.f32.gmra.mxu0 %v1480
      %v1595 = vpop.f32.mrf.mxu0
      %v1596 = vadd.f32 0.0, %v1595
      %1597 = vmatmul.f32.gmra.mxu0 %v1483
      %v1598 = vpop.f32.mrf.mxu0
      %v1599 = vadd.f32 0.0, %v1598
      %1600 = vmatmul.f32.gmra.mxu0 %v1486
      %v1601 = vpop.f32.mrf.mxu0
      %v1602 = vadd.f32 0.0, %v1601
      %1603 = vmatmul.f32.gmra.mxu0 %v1489
      %v1604 = vpop.f32.mrf.mxu0
      %v1605 = vadd.f32 0.0, %v1604
      %1606 = vmatmul.f32.gmra.mxu0 %v1492
      %v1607 = vpop.f32.mrf.mxu0
      %v1608 = vadd.f32 0.0, %v1607
      %1609 = vmatmul.f32.gmra.mxu0 %v1495
      %v1610 = vpop.f32.mrf.mxu0
      %v1611 = vadd.f32 0.0, %v1610
      %1612 = vmatmul.f32.gmra.mxu0 %v1498
      %v1613 = vpop.f32.mrf.mxu0
      %v1614 = vadd.f32 0.0, %v1613
      %1615 = vmatmul.f32.gmra.mxu0 %v1501
      %v1616 = vpop.f32.mrf.mxu0
      %v1617 = vadd.f32 0.0, %v1616
      %1618 = vdwg.mxu0
      %v1619 = vadd.f32 %v1341, %v1524
      %v1620 = vadd.f32 %v1342, %v1527
      %v1621 = vadd.f32 %v1343, %v1530
      %v1622 = vadd.f32 %v1344, %v1533
      %v1623 = vadd.f32 %v1345, %v1536
      %v1624 = vadd.f32 %v1346, %v1539
      %v1625 = vadd.f32 %v1347, %v1542
      %v1626 = vadd.f32 %v1348, %v1545
      %v1627 = vadd.f32 %v1349, %v1548
      %v1628 = vadd.f32 %v1350, %v1551
      %v1629 = vadd.f32 %v1351, %v1554
      %v1630 = vadd.f32 %v1352, %v1557
      %v1631 = vadd.f32 %v1353, %v1560
      %v1632 = vadd.f32 %v1354, %v1563
      %v1633 = vadd.f32 %v1355, %v1566
      %v1634 = vadd.f32 %v1356, %v1569
      %v1635 = vadd.f32 %v1357, %v1572
      %v1636 = vadd.f32 %v1358, %v1575
      %v1637 = vadd.f32 %v1359, %v1578
      %v1638 = vadd.f32 %v1360, %v1581
      %v1639 = vadd.f32 %v1361, %v1584
      %v1640 = vadd.f32 %v1362, %v1587
      %v1641 = vadd.f32 %v1363, %v1590
      %v1642 = vadd.f32 %v1364, %v1593
      %v1643 = vadd.f32 %v1365, %v1596
      %v1644 = vadd.f32 %v1366, %v1599
      %v1645 = vadd.f32 %v1367, %v1602
      %v1646 = vadd.f32 %v1368, %v1605
      %v1647 = vadd.f32 %v1369, %v1608
      %v1648 = vadd.f32 %v1370, %v1611
      %v1649 = vadd.f32 %v1371, %v1614
      %v1650 = vadd.f32 %v1372, %v1617
      %v1651 = vld [vmem:[%s292 + $0x2] sm:$0xff]
      %v1652 = vld [vmem:[%s292 + $0xa] sm:$0xff]
      %v1653 = vld [vmem:[%s292 + $0x1a] sm:$0xff]
      %v1654 = vld [vmem:[%s292 + $0x22] sm:$0xff]
      %v1655 = vld [vmem:[%s292 + $0x32] sm:$0xff]
      %v1656 = vld [vmem:[%s292 + $0x3a] sm:$0xff]
      %v1657 = vld [vmem:[%s292 + $0x4a] sm:$0xff]
      %v1658 = vld [vmem:[%s292 + $0x52] sm:$0xff]
      %v1659 = vld [vmem:[%s292 + $0x62] sm:$0xff]
      %v1660 = vld [vmem:[%s292 + $0x6a] sm:$0xff]
      %v1661 = vld [vmem:[%s292 + $0x7a] sm:$0xff]
      %v1662 = vld [vmem:[%s292 + $0x82] sm:$0xff]
      %v1663 = vld [vmem:[%s292 + $0x92] sm:$0xff]
      %v1664 = vld [vmem:[%s292 + $0x9a] sm:$0xff]
      %v1665 = vld [vmem:[%s292 + $0xaa] sm:$0xff]
      %v1666 = vld [vmem:[%s292 + $0xb2] sm:$0xff]
      %v1667 = vld [vmem:[%s292 + $0xc2] sm:$0xff]
      %v1668 = vld [vmem:[%s292 + $0xca] sm:$0xff]
      %v1669 = vld [vmem:[%s292 + $0xda] sm:$0xff]
      %v1670 = vld [vmem:[%s292 + $0xe2] sm:$0xff]
      %v1671 = vld [vmem:[%s292 + $0xf2] sm:$0xff]
      %v1672 = vld [vmem:[%s292 + $0xfa] sm:$0xff]
      %v1673 = vld [vmem:[%s292 + $0x10a] sm:$0xff]
      %v1674 = vld [vmem:[%s292 + $0x112] sm:$0xff]
      %v1675 = vld [vmem:[%s292 + $0x122] sm:$0xff]
      %v1676 = vld [vmem:[%s292 + $0x12a] sm:$0xff]
      %v1677 = vld [vmem:[%s292 + $0x13a] sm:$0xff]
      %v1678 = vld [vmem:[%s292 + $0x142] sm:$0xff]
      %v1679 = vld [vmem:[%s292 + $0x152] sm:$0xff]
      %v1680 = vld [vmem:[%s292 + $0x15a] sm:$0xff]
      %v1681 = vld [vmem:[%s292 + $0x16a] sm:$0xff]
      %v1682 = vld [vmem:[%s292 + $0x172] sm:$0xff]
      %s1683 = scalar_lea.vmem %s1, 20
      %v1684 = vld [vmem:[%s1683] sm:$0xf]
      %v1686 = vsel %vm171, %v1651, 0
      %v1689 = vsel %vm171, %v1652, 0
      %v1692 = vsel %vm171, %v1653, 0
      %v1695 = vsel %vm171, %v1654, 0
      %v1698 = vsel %vm171, %v1655, 0
      %v1701 = vsel %vm171, %v1656, 0
      %v1704 = vsel %vm171, %v1657, 0
      %v1707 = vsel %vm171, %v1658, 0
      %v1710 = vsel %vm171, %v1659, 0
      %v1713 = vsel %vm171, %v1660, 0
      %v1716 = vsel %vm171, %v1661, 0
      %v1719 = vsel %vm171, %v1662, 0
      %v1722 = vsel %vm171, %v1663, 0
      %v1725 = vsel %vm171, %v1664, 0
      %v1728 = vsel %vm171, %v1665, 0
      %v1731 = vsel %vm171, %v1666, 0
      %v1734 = vsel %vm171, %v1667, 0
      %v1737 = vsel %vm171, %v1668, 0
      %v1740 = vsel %vm171, %v1669, 0
      %v1743 = vsel %vm171, %v1670, 0
      %v1746 = vsel %vm171, %v1671, 0
      %v1749 = vsel %vm171, %v1672, 0
      %v1752 = vsel %vm171, %v1673, 0
      %v1755 = vsel %vm171, %v1674, 0
      %v1758 = vsel %vm171, %v1675, 0
      %v1761 = vsel %vm171, %v1676, 0
      %v1764 = vsel %vm171, %v1677, 0
      %v1767 = vsel %vm171, %v1678, 0
      %v1770 = vsel %vm171, %v1679, 0
      %v1773 = vsel %vm171, %v1680, 0
      %v1776 = vsel %vm171, %v1681, 0
      %v1779 = vsel %vm171, %v1682, 0
      %v1782 = vsel %vm488, %v1684, 0
      %1784 = vmatpush.msra.mxu0 0.0
      %1785 = vmatpush.msra.mxu0 0.0
      %1786 = vmatpush.msra.mxu0 0.0
      %1787 = vmatpush.msra.mxu0 0.0
      %1788 = vmatpush.msra.mxu0 0.0
      %1789 = vmatpush.msra.mxu0 0.0
      %1790 = vmatpush.msra.mxu0 0.0
      %1791 = vmatpush.msra.mxu0 0.0
      %1792 = vmatpush.msra.mxu0 0.0
      %1793 = vmatpush.msra.mxu0 0.0
      %1794 = vmatpush.msra.mxu0 0.0
      %1795 = vmatpush.msra.mxu0 0.0
      %1796 = vmatpush.msra.mxu0 0.0
      %1797 = vmatpush.msra.mxu0 0.0
      %1798 = vmatpush.msra.mxu0 0.0
      %1799 = vmatpush.msra.mxu0 %v1782
      %1800 = vmatmul.f32.gmra.mxu0 %v1686
      %v1801 = vpop.f32.mrf.mxu0
      %v1802 = vadd.f32 0.0, %v1801
      %1803 = vmatmul.f32.gmra.mxu0 %v1689
      %v1804 = vpop.f32.mrf.mxu0
      %v1805 = vadd.f32 0.0, %v1804
      %1806 = vmatmul.f32.gmra.mxu0 %v1692
      %v1807 = vpop.f32.mrf.mxu0
      %v1808 = vadd.f32 0.0, %v1807
      %1809 = vmatmul.f32.gmra.mxu0 %v1695
      %v1810 = vpop.f32.mrf.mxu0
      %v1811 = vadd.f32 0.0, %v1810
      %1812 = vmatmul.f32.gmra.mxu0 %v1698
      %v1813 = vpop.f32.mrf.mxu0
      %v1814 = vadd.f32 0.0, %v1813
      %1815 = vmatmul.f32.gmra.mxu0 %v1701
      %v1816 = vpop.f32.mrf.mxu0
      %v1817 = vadd.f32 0.0, %v1816
      %1818 = vmatmul.f32.gmra.mxu0 %v1704
      %v1819 = vpop.f32.mrf.mxu0
      %v1820 = vadd.f32 0.0, %v1819
      %1821 = vmatmul.f32.gmra.mxu0 %v1707
      %v1822 = vpop.f32.mrf.mxu0
      %v1823 = vadd.f32 0.0, %v1822
      %1824 = vmatmul.f32.gmra.mxu0 %v1710
      %v1825 = vpop.f32.mrf.mxu0
      %v1826 = vadd.f32 0.0, %v1825
      %1827 = vmatmul.f32.gmra.mxu0 %v1713
      %v1828 = vpop.f32.mrf.mxu0
      %v1829 = vadd.f32 0.0, %v1828
      %1830 = vmatmul.f32.gmra.mxu0 %v1716
      %v1831 = vpop.f32.mrf.mxu0
      %v1832 = vadd.f32 0.0, %v1831
      %1833 = vmatmul.f32.gmra.mxu0 %v1719
      %v1834 = vpop.f32.mrf.mxu0
      %v1835 = vadd.f32 0.0, %v1834
      %1836 = vmatmul.f32.gmra.mxu0 %v1722
      %v1837 = vpop.f32.mrf.mxu0
      %v1838 = vadd.f32 0.0, %v1837
      %1839 = vmatmul.f32.gmra.mxu0 %v1725
      %v1840 = vpop.f32.mrf.mxu0
      %v1841 = vadd.f32 0.0, %v1840
      %1842 = vmatmul.f32.gmra.mxu0 %v1728
      %v1843 = vpop.f32.mrf.mxu0
      %v1844 = vadd.f32 0.0, %v1843
      %1845 = vmatmul.f32.gmra.mxu0 %v1731
      %v1846 = vpop.f32.mrf.mxu0
      %v1847 = vadd.f32 0.0, %v1846
      %1848 = vmatmul.f32.gmra.mxu0 %v1734
      %v1849 = vpop.f32.mrf.mxu0
      %v1850 = vadd.f32 0.0, %v1849
      %1851 = vmatmul.f32.gmra.mxu0 %v1737
      %v1852 = vpop.f32.mrf.mxu0
      %v1853 = vadd.f32 0.0, %v1852
      %1854 = vmatmul.f32.gmra.mxu0 %v1740
      %v1855 = vpop.f32.mrf.mxu0
      %v1856 = vadd.f32 0.0, %v1855
      %1857 = vmatmul.f32.gmra.mxu0 %v1743
      %v1858 = vpop.f32.mrf.mxu0
      %v1859 = vadd.f32 0.0, %v1858
      %1860 = vmatmul.f32.gmra.mxu0 %v1746
      %v1861 = vpop.f32.mrf.mxu0
      %v1862 = vadd.f32 0.0, %v1861
      %1863 = vmatmul.f32.gmra.mxu0 %v1749
      %v1864 = vpop.f32.mrf.mxu0
      %v1865 = vadd.f32 0.0, %v1864
      %1866 = vmatmul.f32.gmra.mxu0 %v1752
      %v1867 = vpop.f32.mrf.mxu0
      %v1868 = vadd.f32 0.0, %v1867
      %1869 = vmatmul.f32.gmra.mxu0 %v1755
      %v1870 = vpop.f32.mrf.mxu0
      %v1871 = vadd.f32 0.0, %v1870
      %1872 = vmatmul.f32.gmra.mxu0 %v1758
      %v1873 = vpop.f32.mrf.mxu0
      %v1874 = vadd.f32 0.0, %v1873
      %1875 = vmatmul.f32.gmra.mxu0 %v1761
      %v1876 = vpop.f32.mrf.mxu0
      %v1877 = vadd.f32 0.0, %v1876
      %1878 = vmatmul.f32.gmra.mxu0 %v1764
      %v1879 = vpop.f32.mrf.mxu0
      %v1880 = vadd.f32 0.0, %v1879
      %1881 = vmatmul.f32.gmra.mxu0 %v1767
      %v1882 = vpop.f32.mrf.mxu0
      %v1883 = vadd.f32 0.0, %v1882
      %1884 = vmatmul.f32.gmra.mxu0 %v1770
      %v1885 = vpop.f32.mrf.mxu0
      %v1886 = vadd.f32 0.0, %v1885
      %1887 = vmatmul.f32.gmra.mxu0 %v1773
      %v1888 = vpop.f32.mrf.mxu0
      %v1889 = vadd.f32 0.0, %v1888
      %1890 = vmatmul.f32.gmra.mxu0 %v1776
      %v1891 = vpop.f32.mrf.mxu0
      %v1892 = vadd.f32 0.0, %v1891
      %1893 = vmatmul.f32.gmra.mxu0 %v1779
      %v1894 = vpop.f32.mrf.mxu0
      %v1895 = vadd.f32 0.0, %v1894
      %1896 = vdwg.mxu0
      %v1897 = vadd.f32 %v1619, %v1802
      %v1898 = vadd.f32 %v1620, %v1805
      %v1899 = vadd.f32 %v1621, %v1808
      %v1900 = vadd.f32 %v1622, %v1811
      %v1901 = vadd.f32 %v1623, %v1814
      %v1902 = vadd.f32 %v1624, %v1817
      %v1903 = vadd.f32 %v1625, %v1820
      %v1904 = vadd.f32 %v1626, %v1823
      %v1905 = vadd.f32 %v1627, %v1826
      %v1906 = vadd.f32 %v1628, %v1829
      %v1907 = vadd.f32 %v1629, %v1832
      %v1908 = vadd.f32 %v1630, %v1835
      %v1909 = vadd.f32 %v1631, %v1838
      %v1910 = vadd.f32 %v1632, %v1841
      %v1911 = vadd.f32 %v1633, %v1844
      %v1912 = vadd.f32 %v1634, %v1847
      %v1913 = vadd.f32 %v1635, %v1850
      %v1914 = vadd.f32 %v1636, %v1853
      %v1915 = vadd.f32 %v1637, %v1856
      %v1916 = vadd.f32 %v1638, %v1859
      %v1917 = vadd.f32 %v1639, %v1862
      %v1918 = vadd.f32 %v1640, %v1865
      %v1919 = vadd.f32 %v1641, %v1868
      %v1920 = vadd.f32 %v1642, %v1871
      %v1921 = vadd.f32 %v1643, %v1874
      %v1922 = vadd.f32 %v1644, %v1877
      %v1923 = vadd.f32 %v1645, %v1880
      %v1924 = vadd.f32 %v1646, %v1883
      %v1925 = vadd.f32 %v1647, %v1886
      %v1926 = vadd.f32 %v1648, %v1889
      %v1927 = vadd.f32 %v1649, %v1892
      %v1928 = vadd.f32 %v1650, %v1895
      %s1929 = scalar_lea.vmem [#allocation2], 48
      %v1930 = vld [vmem:[%s1929] sm:$0xff]
      %v1931 = vld [vmem:[%s1929 + $0x8] sm:$0xff]
      %v1932 = vld [vmem:[%s1929 + $0x18] sm:$0xff]
      %v1933 = vld [vmem:[%s1929 + $0x20] sm:$0xff]
      %v1934 = vld [vmem:[%s1929 + $0x30] sm:$0xff]
      %v1935 = vld [vmem:[%s1929 + $0x38] sm:$0xff]
      %v1936 = vld [vmem:[%s1929 + $0x48] sm:$0xff]
      %v1937 = vld [vmem:[%s1929 + $0x50] sm:$0xff]
      %v1938 = vld [vmem:[%s1929 + $0x60] sm:$0xff]
      %v1939 = vld [vmem:[%s1929 + $0x68] sm:$0xff]
      %v1940 = vld [vmem:[%s1929 + $0x78] sm:$0xff]
      %v1941 = vld [vmem:[%s1929 + $0x80] sm:$0xff]
      %v1942 = vld [vmem:[%s1929 + $0x90] sm:$0xff]
      %v1943 = vld [vmem:[%s1929 + $0x98] sm:$0xff]
      %v1944 = vld [vmem:[%s1929 + $0xa8] sm:$0xff]
      %v1945 = vld [vmem:[%s1929 + $0xb0] sm:$0xff]
      %v1946 = vld [vmem:[%s1929 + $0xc0] sm:$0xff]
      %v1947 = vld [vmem:[%s1929 + $0xc8] sm:$0xff]
      %v1948 = vld [vmem:[%s1929 + $0xd8] sm:$0xff]
      %v1949 = vld [vmem:[%s1929 + $0xe0] sm:$0xff]
      %v1950 = vld [vmem:[%s1929 + $0xf0] sm:$0xff]
      %v1951 = vld [vmem:[%s1929 + $0xf8] sm:$0xff]
      %v1952 = vld [vmem:[%s1929 + $0x108] sm:$0xff]
      %v1953 = vld [vmem:[%s1929 + $0x110] sm:$0xff]
      %v1954 = vld [vmem:[%s1929 + $0x120] sm:$0xff]
      %v1955 = vld [vmem:[%s1929 + $0x128] sm:$0xff]
      %v1956 = vld [vmem:[%s1929 + $0x138] sm:$0xff]
      %v1957 = vld [vmem:[%s1929 + $0x140] sm:$0xff]
      %v1958 = vld [vmem:[%s1929 + $0x150] sm:$0xff]
      %v1959 = vld [vmem:[%s1929 + $0x158] sm:$0xff]
      %v1960 = vld [vmem:[%s1929 + $0x168] sm:$0xff]
      %v1961 = vld [vmem:[%s1929 + $0x170] sm:$0xff]
      %s1962 = scalar_lea.vmem %s1, 24
      %v1963 = vld [vmem:[%s1962] sm:$0xf]
      %v1965 = vsel %vm171, %v1930, 0
      %v1968 = vsel %vm171, %v1931, 0
      %v1971 = vsel %vm171, %v1932, 0
      %v1974 = vsel %vm171, %v1933, 0
      %v1977 = vsel %vm171, %v1934, 0
      %v1980 = vsel %vm171, %v1935, 0
      %v1983 = vsel %vm171, %v1936, 0
      %v1986 = vsel %vm171, %v1937, 0
      %v1989 = vsel %vm171, %v1938, 0
      %v1992 = vsel %vm171, %v1939, 0
      %v1995 = vsel %vm171, %v1940, 0
      %v1998 = vsel %vm171, %v1941, 0
      %v2001 = vsel %vm171, %v1942, 0
      %v2004 = vsel %vm171, %v1943, 0
      %v2007 = vsel %vm171, %v1944, 0
      %v2010 = vsel %vm171, %v1945, 0
      %v2013 = vsel %vm171, %v1946, 0
      %v2016 = vsel %vm171, %v1947, 0
      %v2019 = vsel %vm171, %v1948, 0
      %v2022 = vsel %vm171, %v1949, 0
      %v2025 = vsel %vm171, %v1950, 0
      %v2028 = vsel %vm171, %v1951, 0
      %v2031 = vsel %vm171, %v1952, 0
      %v2034 = vsel %vm171, %v1953, 0
      %v2037 = vsel %vm171, %v1954, 0
      %v2040 = vsel %vm171, %v1955, 0
      %v2043 = vsel %vm171, %v1956, 0
      %v2046 = vsel %vm171, %v1957, 0
      %v2049 = vsel %vm171, %v1958, 0
      %v2052 = vsel %vm171, %v1959, 0
      %v2055 = vsel %vm171, %v1960, 0
      %v2058 = vsel %vm171, %v1961, 0
      %v2061 = vsel %vm488, %v1963, 0
      %2063 = vmatpush.msra.mxu0 0.0
      %2064 = vmatpush.msra.mxu0 0.0
      %2065 = vmatpush.msra.mxu0 0.0
      %2066 = vmatpush.msra.mxu0 0.0
      %2067 = vmatpush.msra.mxu0 0.0
      %2068 = vmatpush.msra.mxu0 0.0
      %2069 = vmatpush.msra.mxu0 0.0
      %2070 = vmatpush.msra.mxu0 0.0
      %2071 = vmatpush.msra.mxu0 0.0
      %2072 = vmatpush.msra.mxu0 0.0
      %2073 = vmatpush.msra.mxu0 0.0
      %2074 = vmatpush.msra.mxu0 0.0
      %2075 = vmatpush.msra.mxu0 0.0
      %2076 = vmatpush.msra.mxu0 0.0
      %2077 = vmatpush.msra.mxu0 0.0
      %2078 = vmatpush.msra.mxu0 %v2061
      %2079 = vmatmul.f32.gmra.mxu0 %v1965
      %v2080 = vpop.f32.mrf.mxu0
      %v2081 = vadd.f32 0.0, %v2080
      %2082 = vmatmul.f32.gmra.mxu0 %v1968
      %v2083 = vpop.f32.mrf.mxu0
      %v2084 = vadd.f32 0.0, %v2083
      %2085 = vmatmul.f32.gmra.mxu0 %v1971
      %v2086 = vpop.f32.mrf.mxu0
      %v2087 = vadd.f32 0.0, %v2086
      %2088 = vmatmul.f32.gmra.mxu0 %v1974
      %v2089 = vpop.f32.mrf.mxu0
      %v2090 = vadd.f32 0.0, %v2089
      %2091 = vmatmul.f32.gmra.mxu0 %v1977
      %v2092 = vpop.f32.mrf.mxu0
      %v2093 = vadd.f32 0.0, %v2092
      %2094 = vmatmul.f32.gmra.mxu0 %v1980
      %v2095 = vpop.f32.mrf.mxu0
      %v2096 = vadd.f32 0.0, %v2095
      %2097 = vmatmul.f32.gmra.mxu0 %v1983
      %v2098 = vpop.f32.mrf.mxu0
      %v2099 = vadd.f32 0.0, %v2098
      %2100 = vmatmul.f32.gmra.mxu0 %v1986
      %v2101 = vpop.f32.mrf.mxu0
      %v2102 = vadd.f32 0.0, %v2101
      %2103 = vmatmul.f32.gmra.mxu0 %v1989
      %v2104 = vpop.f32.mrf.mxu0
      %v2105 = vadd.f32 0.0, %v2104
      %2106 = vmatmul.f32.gmra.mxu0 %v1992
      %v2107 = vpop.f32.mrf.mxu0
      %v2108 = vadd.f32 0.0, %v2107
      %2109 = vmatmul.f32.gmra.mxu0 %v1995
      %v2110 = vpop.f32.mrf.mxu0
      %v2111 = vadd.f32 0.0, %v2110
      %2112 = vmatmul.f32.gmra.mxu0 %v1998
      %v2113 = vpop.f32.mrf.mxu0
      %v2114 = vadd.f32 0.0, %v2113
      %2115 = vmatmul.f32.gmra.mxu0 %v2001
      %v2116 = vpop.f32.mrf.mxu0
      %v2117 = vadd.f32 0.0, %v2116
      %2118 = vmatmul.f32.gmra.mxu0 %v2004
      %v2119 = vpop.f32.mrf.mxu0
      %v2120 = vadd.f32 0.0, %v2119
      %2121 = vmatmul.f32.gmra.mxu0 %v2007
      %v2122 = vpop.f32.mrf.mxu0
      %v2123 = vadd.f32 0.0, %v2122
      %2124 = vmatmul.f32.gmra.mxu0 %v2010
      %v2125 = vpop.f32.mrf.mxu0
      %v2126 = vadd.f32 0.0, %v2125
      %2127 = vmatmul.f32.gmra.mxu0 %v2013
      %v2128 = vpop.f32.mrf.mxu0
      %v2129 = vadd.f32 0.0, %v2128
      %2130 = vmatmul.f32.gmra.mxu0 %v2016
      %v2131 = vpop.f32.mrf.mxu0
      %v2132 = vadd.f32 0.0, %v2131
      %2133 = vmatmul.f32.gmra.mxu0 %v2019
      %v2134 = vpop.f32.mrf.mxu0
      %v2135 = vadd.f32 0.0, %v2134
      %2136 = vmatmul.f32.gmra.mxu0 %v2022
      %v2137 = vpop.f32.mrf.mxu0
      %v2138 = vadd.f32 0.0, %v2137
      %2139 = vmatmul.f32.gmra.mxu0 %v2025
      %v2140 = vpop.f32.mrf.mxu0
      %v2141 = vadd.f32 0.0, %v2140
      %2142 = vmatmul.f32.gmra.mxu0 %v2028
      %v2143 = vpop.f32.mrf.mxu0
      %v2144 = vadd.f32 0.0, %v2143
      %2145 = vmatmul.f32.gmra.mxu0 %v2031
      %v2146 = vpop.f32.mrf.mxu0
      %v2147 = vadd.f32 0.0, %v2146
      %2148 = vmatmul.f32.gmra.mxu0 %v2034
      %v2149 = vpop.f32.mrf.mxu0
      %v2150 = vadd.f32 0.0, %v2149
      %2151 = vmatmul.f32.gmra.mxu0 %v2037
      %v2152 = vpop.f32.mrf.mxu0
      %v2153 = vadd.f32 0.0, %v2152
      %2154 = vmatmul.f32.gmra.mxu0 %v2040
      %v2155 = vpop.f32.mrf.mxu0
      %v2156 = vadd.f32 0.0, %v2155
      %2157 = vmatmul.f32.gmra.mxu0 %v2043
      %v2158 = vpop.f32.mrf.mxu0
      %v2159 = vadd.f32 0.0, %v2158
      %2160 = vmatmul.f32.gmra.mxu0 %v2046
      %v2161 = vpop.f32.mrf.mxu0
      %v2162 = vadd.f32 0.0, %v2161
      %2163 = vmatmul.f32.gmra.mxu0 %v2049
      %v2164 = vpop.f32.mrf.mxu0
      %v2165 = vadd.f32 0.0, %v2164
      %2166 = vmatmul.f32.gmra.mxu0 %v2052
      %v2167 = vpop.f32.mrf.mxu0
      %v2168 = vadd.f32 0.0, %v2167
      %2169 = vmatmul.f32.gmra.mxu0 %v2055
      %v2170 = vpop.f32.mrf.mxu0
      %v2171 = vadd.f32 0.0, %v2170
      %2172 = vmatmul.f32.gmra.mxu0 %v2058
      %v2173 = vpop.f32.mrf.mxu0
      %v2174 = vadd.f32 0.0, %v2173
      %2175 = vdwg.mxu0
      %v2176 = vadd.f32 %v1897, %v2081
      %v2177 = vadd.f32 %v1898, %v2084
      %v2178 = vadd.f32 %v1899, %v2087
      %v2179 = vadd.f32 %v1900, %v2090
      %v2180 = vadd.f32 %v1901, %v2093
      %v2181 = vadd.f32 %v1902, %v2096
      %v2182 = vadd.f32 %v1903, %v2099
      %v2183 = vadd.f32 %v1904, %v2102
      %v2184 = vadd.f32 %v1905, %v2105
      %v2185 = vadd.f32 %v1906, %v2108
      %v2186 = vadd.f32 %v1907, %v2111
      %v2187 = vadd.f32 %v1908, %v2114
      %v2188 = vadd.f32 %v1909, %v2117
      %v2189 = vadd.f32 %v1910, %v2120
      %v2190 = vadd.f32 %v1911, %v2123
      %v2191 = vadd.f32 %v1912, %v2126
      %v2192 = vadd.f32 %v1913, %v2129
      %v2193 = vadd.f32 %v1914, %v2132
      %v2194 = vadd.f32 %v1915, %v2135
      %v2195 = vadd.f32 %v1916, %v2138
      %v2196 = vadd.f32 %v1917, %v2141
      %v2197 = vadd.f32 %v1918, %v2144
      %v2198 = vadd.f32 %v1919, %v2147
      %v2199 = vadd.f32 %v1920, %v2150
      %v2200 = vadd.f32 %v1921, %v2153
      %v2201 = vadd.f32 %v1922, %v2156
      %v2202 = vadd.f32 %v1923, %v2159
      %v2203 = vadd.f32 %v1924, %v2162
      %v2204 = vadd.f32 %v1925, %v2165
      %v2205 = vadd.f32 %v1926, %v2168
      %v2206 = vadd.f32 %v1927, %v2171
      %v2207 = vadd.f32 %v1928, %v2174
      %v2208 = vld [vmem:[%s1929 + $0x1] sm:$0xff]
      %v2209 = vld [vmem:[%s1929 + $0x9] sm:$0xff]
      %v2210 = vld [vmem:[%s1929 + $0x19] sm:$0xff]
      %v2211 = vld [vmem:[%s1929 + $0x21] sm:$0xff]
      %v2212 = vld [vmem:[%s1929 + $0x31] sm:$0xff]
      %v2213 = vld [vmem:[%s1929 + $0x39] sm:$0xff]
      %v2214 = vld [vmem:[%s1929 + $0x49] sm:$0xff]
      %v2215 = vld [vmem:[%s1929 + $0x51] sm:$0xff]
      %v2216 = vld [vmem:[%s1929 + $0x61] sm:$0xff]
      %v2217 = vld [vmem:[%s1929 + $0x69] sm:$0xff]
      %v2218 = vld [vmem:[%s1929 + $0x79] sm:$0xff]
      %v2219 = vld [vmem:[%s1929 + $0x81] sm:$0xff]
      %v2220 = vld [vmem:[%s1929 + $0x91] sm:$0xff]
      %v2221 = vld [vmem:[%s1929 + $0x99] sm:$0xff]
      %v2222 = vld [vmem:[%s1929 + $0xa9] sm:$0xff]
      %v2223 = vld [vmem:[%s1929 + $0xb1] sm:$0xff]
      %v2224 = vld [vmem:[%s1929 + $0xc1] sm:$0xff]
      %v2225 = vld [vmem:[%s1929 + $0xc9] sm:$0xff]
      %v2226 = vld [vmem:[%s1929 + $0xd9] sm:$0xff]
      %v2227 = vld [vmem:[%s1929 + $0xe1] sm:$0xff]
      %v2228 = vld [vmem:[%s1929 + $0xf1] sm:$0xff]
      %v2229 = vld [vmem:[%s1929 + $0xf9] sm:$0xff]
      %v2230 = vld [vmem:[%s1929 + $0x109] sm:$0xff]
      %v2231 = vld [vmem:[%s1929 + $0x111] sm:$0xff]
      %v2232 = vld [vmem:[%s1929 + $0x121] sm:$0xff]
      %v2233 = vld [vmem:[%s1929 + $0x129] sm:$0xff]
      %v2234 = vld [vmem:[%s1929 + $0x139] sm:$0xff]
      %v2235 = vld [vmem:[%s1929 + $0x141] sm:$0xff]
      %v2236 = vld [vmem:[%s1929 + $0x151] sm:$0xff]
      %v2237 = vld [vmem:[%s1929 + $0x159] sm:$0xff]
      %v2238 = vld [vmem:[%s1929 + $0x169] sm:$0xff]
      %v2239 = vld [vmem:[%s1929 + $0x171] sm:$0xff]
      %s2240 = scalar_lea.vmem %s1, 28
      %v2241 = vld [vmem:[%s2240] sm:$0xf]
      %v2243 = vsel %vm171, %v2208, 0
      %v2246 = vsel %vm171, %v2209, 0
      %v2249 = vsel %vm171, %v2210, 0
      %v2252 = vsel %vm171, %v2211, 0
      %v2255 = vsel %vm171, %v2212, 0
      %v2258 = vsel %vm171, %v2213, 0
      %v2261 = vsel %vm171, %v2214, 0
      %v2264 = vsel %vm171, %v2215, 0
      %v2267 = vsel %vm171, %v2216, 0
      %v2270 = vsel %vm171, %v2217, 0
      %v2273 = vsel %vm171, %v2218, 0
      %v2276 = vsel %vm171, %v2219, 0
      %v2279 = vsel %vm171, %v2220, 0
      %v2282 = vsel %vm171, %v2221, 0
      %v2285 = vsel %vm171, %v2222, 0
      %v2288 = vsel %vm171, %v2223, 0
      %v2291 = vsel %vm171, %v2224, 0
      %v2294 = vsel %vm171, %v2225, 0
      %v2297 = vsel %vm171, %v2226, 0
      %v2300 = vsel %vm171, %v2227, 0
      %v2303 = vsel %vm171, %v2228, 0
      %v2306 = vsel %vm171, %v2229, 0
      %v2309 = vsel %vm171, %v2230, 0
      %v2312 = vsel %vm171, %v2231, 0
      %v2315 = vsel %vm171, %v2232, 0
      %v2318 = vsel %vm171, %v2233, 0
      %v2321 = vsel %vm171, %v2234, 0
      %v2324 = vsel %vm171, %v2235, 0
      %v2327 = vsel %vm171, %v2236, 0
      %v2330 = vsel %vm171, %v2237, 0
      %v2333 = vsel %vm171, %v2238, 0
      %v2336 = vsel %vm171, %v2239, 0
      %v2339 = vsel %vm488, %v2241, 0
      %2341 = vmatpush.msra.mxu0 0.0
      %2342 = vmatpush.msra.mxu0 0.0
      %2343 = vmatpush.msra.mxu0 0.0
      %2344 = vmatpush.msra.mxu0 0.0
      %2345 = vmatpush.msra.mxu0 0.0
      %2346 = vmatpush.msra.mxu0 0.0
      %2347 = vmatpush.msra.mxu0 0.0
      %2348 = vmatpush.msra.mxu0 0.0
      %2349 = vmatpush.msra.mxu0 0.0
      %2350 = vmatpush.msra.mxu0 0.0
      %2351 = vmatpush.msra.mxu0 0.0
      %2352 = vmatpush.msra.mxu0 0.0
      %2353 = vmatpush.msra.mxu0 0.0
      %2354 = vmatpush.msra.mxu0 0.0
      %2355 = vmatpush.msra.mxu0 0.0
      %2356 = vmatpush.msra.mxu0 %v2339
      %2357 = vmatmul.f32.gmra.mxu0 %v2243
      %v2358 = vpop.f32.mrf.mxu0
      %v2359 = vadd.f32 0.0, %v2358
      %2360 = vmatmul.f32.gmra.mxu0 %v2246
      %v2361 = vpop.f32.mrf.mxu0
      %v2362 = vadd.f32 0.0, %v2361
      %2363 = vmatmul.f32.gmra.mxu0 %v2249
      %v2364 = vpop.f32.mrf.mxu0
      %v2365 = vadd.f32 0.0, %v2364
      %2366 = vmatmul.f32.gmra.mxu0 %v2252
      %v2367 = vpop.f32.mrf.mxu0
      %v2368 = vadd.f32 0.0, %v2367
      %2369 = vmatmul.f32.gmra.mxu0 %v2255
      %v2370 = vpop.f32.mrf.mxu0
      %v2371 = vadd.f32 0.0, %v2370
      %2372 = vmatmul.f32.gmra.mxu0 %v2258
      %v2373 = vpop.f32.mrf.mxu0
      %v2374 = vadd.f32 0.0, %v2373
      %2375 = vmatmul.f32.gmra.mxu0 %v2261
      %v2376 = vpop.f32.mrf.mxu0
      %v2377 = vadd.f32 0.0, %v2376
      %2378 = vmatmul.f32.gmra.mxu0 %v2264
      %v2379 = vpop.f32.mrf.mxu0
      %v2380 = vadd.f32 0.0, %v2379
      %2381 = vmatmul.f32.gmra.mxu0 %v2267
      %v2382 = vpop.f32.mrf.mxu0
      %v2383 = vadd.f32 0.0, %v2382
      %2384 = vmatmul.f32.gmra.mxu0 %v2270
      %v2385 = vpop.f32.mrf.mxu0
      %v2386 = vadd.f32 0.0, %v2385
      %2387 = vmatmul.f32.gmra.mxu0 %v2273
      %v2388 = vpop.f32.mrf.mxu0
      %v2389 = vadd.f32 0.0, %v2388
      %2390 = vmatmul.f32.gmra.mxu0 %v2276
      %v2391 = vpop.f32.mrf.mxu0
      %v2392 = vadd.f32 0.0, %v2391
      %2393 = vmatmul.f32.gmra.mxu0 %v2279
      %v2394 = vpop.f32.mrf.mxu0
      %v2395 = vadd.f32 0.0, %v2394
      %2396 = vmatmul.f32.gmra.mxu0 %v2282
      %v2397 = vpop.f32.mrf.mxu0
      %v2398 = vadd.f32 0.0, %v2397
      %2399 = vmatmul.f32.gmra.mxu0 %v2285
      %v2400 = vpop.f32.mrf.mxu0
      %v2401 = vadd.f32 0.0, %v2400
      %2402 = vmatmul.f32.gmra.mxu0 %v2288
      %v2403 = vpop.f32.mrf.mxu0
      %v2404 = vadd.f32 0.0, %v2403
      %2405 = vmatmul.f32.gmra.mxu0 %v2291
      %v2406 = vpop.f32.mrf.mxu0
      %v2407 = vadd.f32 0.0, %v2406
      %2408 = vmatmul.f32.gmra.mxu0 %v2294
      %v2409 = vpop.f32.mrf.mxu0
      %v2410 = vadd.f32 0.0, %v2409
      %2411 = vmatmul.f32.gmra.mxu0 %v2297
      %v2412 = vpop.f32.mrf.mxu0
      %v2413 = vadd.f32 0.0, %v2412
      %2414 = vmatmul.f32.gmra.mxu0 %v2300
      %v2415 = vpop.f32.mrf.mxu0
      %v2416 = vadd.f32 0.0, %v2415
      %2417 = vmatmul.f32.gmra.mxu0 %v2303
      %v2418 = vpop.f32.mrf.mxu0
      %v2419 = vadd.f32 0.0, %v2418
      %2420 = vmatmul.f32.gmra.mxu0 %v2306
      %v2421 = vpop.f32.mrf.mxu0
      %v2422 = vadd.f32 0.0, %v2421
      %2423 = vmatmul.f32.gmra.mxu0 %v2309
      %v2424 = vpop.f32.mrf.mxu0
      %v2425 = vadd.f32 0.0, %v2424
      %2426 = vmatmul.f32.gmra.mxu0 %v2312
      %v2427 = vpop.f32.mrf.mxu0
      %v2428 = vadd.f32 0.0, %v2427
      %2429 = vmatmul.f32.gmra.mxu0 %v2315
      %v2430 = vpop.f32.mrf.mxu0
      %v2431 = vadd.f32 0.0, %v2430
      %2432 = vmatmul.f32.gmra.mxu0 %v2318
      %v2433 = vpop.f32.mrf.mxu0
      %v2434 = vadd.f32 0.0, %v2433
      %2435 = vmatmul.f32.gmra.mxu0 %v2321
      %v2436 = vpop.f32.mrf.mxu0
      %v2437 = vadd.f32 0.0, %v2436
      %2438 = vmatmul.f32.gmra.mxu0 %v2324
      %v2439 = vpop.f32.mrf.mxu0
      %v2440 = vadd.f32 0.0, %v2439
      %2441 = vmatmul.f32.gmra.mxu0 %v2327
      %v2442 = vpop.f32.mrf.mxu0
      %v2443 = vadd.f32 0.0, %v2442
      %2444 = vmatmul.f32.gmra.mxu0 %v2330
      %v2445 = vpop.f32.mrf.mxu0
      %v2446 = vadd.f32 0.0, %v2445
      %2447 = vmatmul.f32.gmra.mxu0 %v2333
      %v2448 = vpop.f32.mrf.mxu0
      %v2449 = vadd.f32 0.0, %v2448
      %2450 = vmatmul.f32.gmra.mxu0 %v2336
      %v2451 = vpop.f32.mrf.mxu0
      %v2452 = vadd.f32 0.0, %v2451
      %2453 = vdwg.mxu0
      %v2454 = vadd.f32 %v2176, %v2359
      %v2455 = vadd.f32 %v2177, %v2362
      %v2456 = vadd.f32 %v2178, %v2365
      %v2457 = vadd.f32 %v2179, %v2368
      %v2458 = vadd.f32 %v2180, %v2371
      %v2459 = vadd.f32 %v2181, %v2374
      %v2460 = vadd.f32 %v2182, %v2377
      %v2461 = vadd.f32 %v2183, %v2380
      %v2462 = vadd.f32 %v2184, %v2383
      %v2463 = vadd.f32 %v2185, %v2386
      %v2464 = vadd.f32 %v2186, %v2389
      %v2465 = vadd.f32 %v2187, %v2392
      %v2466 = vadd.f32 %v2188, %v2395
      %v2467 = vadd.f32 %v2189, %v2398
      %v2468 = vadd.f32 %v2190, %v2401
      %v2469 = vadd.f32 %v2191, %v2404
      %v2470 = vadd.f32 %v2192, %v2407
      %v2471 = vadd.f32 %v2193, %v2410
      %v2472 = vadd.f32 %v2194, %v2413
      %v2473 = vadd.f32 %v2195, %v2416
      %v2474 = vadd.f32 %v2196, %v2419
      %v2475 = vadd.f32 %v2197, %v2422
      %v2476 = vadd.f32 %v2198, %v2425
      %v2477 = vadd.f32 %v2199, %v2428
      %v2478 = vadd.f32 %v2200, %v2431
      %v2479 = vadd.f32 %v2201, %v2434
      %v2480 = vadd.f32 %v2202, %v2437
      %v2481 = vadd.f32 %v2203, %v2440
      %v2482 = vadd.f32 %v2204, %v2443
      %v2483 = vadd.f32 %v2205, %v2446
      %v2484 = vadd.f32 %v2206, %v2449
      %v2485 = vadd.f32 %v2207, %v2452
      %v2486 = vld [vmem:[%s1929 + $0x2] sm:$0xff]
      %v2487 = vld [vmem:[%s1929 + $0xa] sm:$0xff]
      %v2488 = vld [vmem:[%s1929 + $0x1a] sm:$0xff]
      %v2489 = vld [vmem:[%s1929 + $0x22] sm:$0xff]
      %v2490 = vld [vmem:[%s1929 + $0x32] sm:$0xff]
      %v2491 = vld [vmem:[%s1929 + $0x3a] sm:$0xff]
      %v2492 = vld [vmem:[%s1929 + $0x4a] sm:$0xff]
      %v2493 = vld [vmem:[%s1929 + $0x52] sm:$0xff]
      %v2494 = vld [vmem:[%s1929 + $0x62] sm:$0xff]
      %v2495 = vld [vmem:[%s1929 + $0x6a] sm:$0xff]
      %v2496 = vld [vmem:[%s1929 + $0x7a] sm:$0xff]
      %v2497 = vld [vmem:[%s1929 + $0x82] sm:$0xff]
      %v2498 = vld [vmem:[%s1929 + $0x92] sm:$0xff]
      %v2499 = vld [vmem:[%s1929 + $0x9a] sm:$0xff]
      %v2500 = vld [vmem:[%s1929 + $0xaa] sm:$0xff]
      %v2501 = vld [vmem:[%s1929 + $0xb2] sm:$0xff]
      %v2502 = vld [vmem:[%s1929 + $0xc2] sm:$0xff]
      %v2503 = vld [vmem:[%s1929 + $0xca] sm:$0xff]
      %v2504 = vld [vmem:[%s1929 + $0xda] sm:$0xff]
      %v2505 = vld [vmem:[%s1929 + $0xe2] sm:$0xff]
      %v2506 = vld [vmem:[%s1929 + $0xf2] sm:$0xff]
      %v2507 = vld [vmem:[%s1929 + $0xfa] sm:$0xff]
      %v2508 = vld [vmem:[%s1929 + $0x10a] sm:$0xff]
      %v2509 = vld [vmem:[%s1929 + $0x112] sm:$0xff]
      %v2510 = vld [vmem:[%s1929 + $0x122] sm:$0xff]
      %v2511 = vld [vmem:[%s1929 + $0x12a] sm:$0xff]
      %v2512 = vld [vmem:[%s1929 + $0x13a] sm:$0xff]
      %v2513 = vld [vmem:[%s1929 + $0x142] sm:$0xff]
      %v2514 = vld [vmem:[%s1929 + $0x152] sm:$0xff]
      %v2515 = vld [vmem:[%s1929 + $0x15a] sm:$0xff]
      %v2516 = vld [vmem:[%s1929 + $0x16a] sm:$0xff]
      %v2517 = vld [vmem:[%s1929 + $0x172] sm:$0xff]
      %s2518 = scalar_lea.vmem %s1, 32
      %v2519 = vld [vmem:[%s2518] sm:$0xf]
      %v2521 = vsel %vm171, %v2486, 0
      %v2524 = vsel %vm171, %v2487, 0
      %v2527 = vsel %vm171, %v2488, 0
      %v2530 = vsel %vm171, %v2489, 0
      %v2533 = vsel %vm171, %v2490, 0
      %v2536 = vsel %vm171, %v2491, 0
      %v2539 = vsel %vm171, %v2492, 0
      %v2542 = vsel %vm171, %v2493, 0
      %v2545 = vsel %vm171, %v2494, 0
      %v2548 = vsel %vm171, %v2495, 0
      %v2551 = vsel %vm171, %v2496, 0
      %v2554 = vsel %vm171, %v2497, 0
      %v2557 = vsel %vm171, %v2498, 0
      %v2560 = vsel %vm171, %v2499, 0
      %v2563 = vsel %vm171, %v2500, 0
      %v2566 = vsel %vm171, %v2501, 0
      %v2569 = vsel %vm171, %v2502, 0
      %v2572 = vsel %vm171, %v2503, 0
      %v2575 = vsel %vm171, %v2504, 0
      %v2578 = vsel %vm171, %v2505, 0
      %v2581 = vsel %vm171, %v2506, 0
      %v2584 = vsel %vm171, %v2507, 0
      %v2587 = vsel %vm171, %v2508, 0
      %v2590 = vsel %vm171, %v2509, 0
      %v2593 = vsel %vm171, %v2510, 0
      %v2596 = vsel %vm171, %v2511, 0
      %v2599 = vsel %vm171, %v2512, 0
      %v2602 = vsel %vm171, %v2513, 0
      %v2605 = vsel %vm171, %v2514, 0
      %v2608 = vsel %vm171, %v2515, 0
      %v2611 = vsel %vm171, %v2516, 0
      %v2614 = vsel %vm171, %v2517, 0
      %v2617 = vsel %vm488, %v2519, 0
      %2619 = vmatpush.msra.mxu0 0.0
      %2620 = vmatpush.msra.mxu0 0.0
      %2621 = vmatpush.msra.mxu0 0.0
      %2622 = vmatpush.msra.mxu0 0.0
      %2623 = vmatpush.msra.mxu0 0.0
      %2624 = vmatpush.msra.mxu0 0.0
      %2625 = vmatpush.msra.mxu0 0.0
      %2626 = vmatpush.msra.mxu0 0.0
      %2627 = vmatpush.msra.mxu0 0.0
      %2628 = vmatpush.msra.mxu0 0.0
      %2629 = vmatpush.msra.mxu0 0.0
      %2630 = vmatpush.msra.mxu0 0.0
      %2631 = vmatpush.msra.mxu0 0.0
      %2632 = vmatpush.msra.mxu0 0.0
      %2633 = vmatpush.msra.mxu0 0.0
      %2634 = vmatpush.msra.mxu0 %v2617
      %2635 = vmatmul.f32.gmra.mxu0 %v2521
      %v2636 = vpop.f32.mrf.mxu0
      %v2637 = vadd.f32 0.0, %v2636
      %2638 = vmatmul.f32.gmra.mxu0 %v2524
      %v2639 = vpop.f32.mrf.mxu0
      %v2640 = vadd.f32 0.0, %v2639
      %2641 = vmatmul.f32.gmra.mxu0 %v2527
      %v2642 = vpop.f32.mrf.mxu0
      %v2643 = vadd.f32 0.0, %v2642
      %2644 = vmatmul.f32.gmra.mxu0 %v2530
      %v2645 = vpop.f32.mrf.mxu0
      %v2646 = vadd.f32 0.0, %v2645
      %2647 = vmatmul.f32.gmra.mxu0 %v2533
      %v2648 = vpop.f32.mrf.mxu0
      %v2649 = vadd.f32 0.0, %v2648
      %2650 = vmatmul.f32.gmra.mxu0 %v2536
      %v2651 = vpop.f32.mrf.mxu0
      %v2652 = vadd.f32 0.0, %v2651
      %2653 = vmatmul.f32.gmra.mxu0 %v2539
      %v2654 = vpop.f32.mrf.mxu0
      %v2655 = vadd.f32 0.0, %v2654
      %2656 = vmatmul.f32.gmra.mxu0 %v2542
      %v2657 = vpop.f32.mrf.mxu0
      %v2658 = vadd.f32 0.0, %v2657
      %2659 = vmatmul.f32.gmra.mxu0 %v2545
      %v2660 = vpop.f32.mrf.mxu0
      %v2661 = vadd.f32 0.0, %v2660
      %2662 = vmatmul.f32.gmra.mxu0 %v2548
      %v2663 = vpop.f32.mrf.mxu0
      %v2664 = vadd.f32 0.0, %v2663
      %2665 = vmatmul.f32.gmra.mxu0 %v2551
      %v2666 = vpop.f32.mrf.mxu0
      %v2667 = vadd.f32 0.0, %v2666
      %2668 = vmatmul.f32.gmra.mxu0 %v2554
      %v2669 = vpop.f32.mrf.mxu0
      %v2670 = vadd.f32 0.0, %v2669
      %2671 = vmatmul.f32.gmra.mxu0 %v2557
      %v2672 = vpop.f32.mrf.mxu0
      %v2673 = vadd.f32 0.0, %v2672
      %2674 = vmatmul.f32.gmra.mxu0 %v2560
      %v2675 = vpop.f32.mrf.mxu0
      %v2676 = vadd.f32 0.0, %v2675
      %2677 = vmatmul.f32.gmra.mxu0 %v2563
      %v2678 = vpop.f32.mrf.mxu0
      %v2679 = vadd.f32 0.0, %v2678
      %2680 = vmatmul.f32.gmra.mxu0 %v2566
      %v2681 = vpop.f32.mrf.mxu0
      %v2682 = vadd.f32 0.0, %v2681
      %2683 = vmatmul.f32.gmra.mxu0 %v2569
      %v2684 = vpop.f32.mrf.mxu0
      %v2685 = vadd.f32 0.0, %v2684
      %2686 = vmatmul.f32.gmra.mxu0 %v2572
      %v2687 = vpop.f32.mrf.mxu0
      %v2688 = vadd.f32 0.0, %v2687
      %2689 = vmatmul.f32.gmra.mxu0 %v2575
      %v2690 = vpop.f32.mrf.mxu0
      %v2691 = vadd.f32 0.0, %v2690
      %2692 = vmatmul.f32.gmra.mxu0 %v2578
      %v2693 = vpop.f32.mrf.mxu0
      %v2694 = vadd.f32 0.0, %v2693
      %2695 = vmatmul.f32.gmra.mxu0 %v2581
      %v2696 = vpop.f32.mrf.mxu0
      %v2697 = vadd.f32 0.0, %v2696
      %2698 = vmatmul.f32.gmra.mxu0 %v2584
      %v2699 = vpop.f32.mrf.mxu0
      %v2700 = vadd.f32 0.0, %v2699
      %2701 = vmatmul.f32.gmra.mxu0 %v2587
      %v2702 = vpop.f32.mrf.mxu0
      %v2703 = vadd.f32 0.0, %v2702
      %2704 = vmatmul.f32.gmra.mxu0 %v2590
      %v2705 = vpop.f32.mrf.mxu0
      %v2706 = vadd.f32 0.0, %v2705
      %2707 = vmatmul.f32.gmra.mxu0 %v2593
      %v2708 = vpop.f32.mrf.mxu0
      %v2709 = vadd.f32 0.0, %v2708
      %2710 = vmatmul.f32.gmra.mxu0 %v2596
      %v2711 = vpop.f32.mrf.mxu0
      %v2712 = vadd.f32 0.0, %v2711
      %2713 = vmatmul.f32.gmra.mxu0 %v2599
      %v2714 = vpop.f32.mrf.mxu0
      %v2715 = vadd.f32 0.0, %v2714
      %2716 = vmatmul.f32.gmra.mxu0 %v2602
      %v2717 = vpop.f32.mrf.mxu0
      %v2718 = vadd.f32 0.0, %v2717
      %2719 = vmatmul.f32.gmra.mxu0 %v2605
      %v2720 = vpop.f32.mrf.mxu0
      %v2721 = vadd.f32 0.0, %v2720
      %2722 = vmatmul.f32.gmra.mxu0 %v2608
      %v2723 = vpop.f32.mrf.mxu0
      %v2724 = vadd.f32 0.0, %v2723
      %2725 = vmatmul.f32.gmra.mxu0 %v2611
      %v2726 = vpop.f32.mrf.mxu0
      %v2727 = vadd.f32 0.0, %v2726
      %2728 = vmatmul.f32.gmra.mxu0 %v2614
      %v2729 = vpop.f32.mrf.mxu0
      %v2730 = vadd.f32 0.0, %v2729
      %2731 = vdwg.mxu0
      %v2732 = vadd.f32 %v2454, %v2637
      %v2733 = vadd.f32 %v2455, %v2640
      %v2734 = vadd.f32 %v2456, %v2643
      %v2735 = vadd.f32 %v2457, %v2646
      %v2736 = vadd.f32 %v2458, %v2649
      %v2737 = vadd.f32 %v2459, %v2652
      %v2738 = vadd.f32 %v2460, %v2655
      %v2739 = vadd.f32 %v2461, %v2658
      %v2740 = vadd.f32 %v2462, %v2661
      %v2741 = vadd.f32 %v2463, %v2664
      %v2742 = vadd.f32 %v2464, %v2667
      %v2743 = vadd.f32 %v2465, %v2670
      %v2744 = vadd.f32 %v2466, %v2673
      %v2745 = vadd.f32 %v2467, %v2676
      %v2746 = vadd.f32 %v2468, %v2679
      %v2747 = vadd.f32 %v2469, %v2682
      %v2748 = vadd.f32 %v2470, %v2685
      %v2749 = vadd.f32 %v2471, %v2688
      %v2750 = vadd.f32 %v2472, %v2691
      %v2751 = vadd.f32 %v2473, %v2694
      %v2752 = vadd.f32 %v2474, %v2697
      %v2753 = vadd.f32 %v2475, %v2700
      %v2754 = vadd.f32 %v2476, %v2703
      %v2755 = vadd.f32 %v2477, %v2706
      %v2756 = vadd.f32 %v2478, %v2709
      %v2757 = vadd.f32 %v2479, %v2712
      %v2758 = vadd.f32 %v2480, %v2715
      %v2759 = vadd.f32 %v2481, %v2718
      %v2760 = vadd.f32 %v2482, %v2721
      %v2761 = vadd.f32 %v2483, %v2724
      %v2762 = vadd.f32 %v2484, %v2727
      %v2763 = vadd.f32 %v2485, %v2730
      %s2764 = scalar_lea.vmem [#allocation3], 24
      %2765 = vst.msk [vmem:[%s2764 + $0x1] sm:$0xff] %vm171, %v2732
      %2766 = vst.msk [vmem:[%s2764 + $0x9] sm:$0xff] %vm171, %v2733
      %2767 = vst.msk [vmem:[%s2764 + $0x19] sm:$0xff] %vm171, %v2734
      %2768 = vst.msk [vmem:[%s2764 + $0x21] sm:$0xff] %vm171, %v2735
      %2769 = vst.msk [vmem:[%s2764 + $0x31] sm:$0xff] %vm171, %v2736
      %2770 = vst.msk [vmem:[%s2764 + $0x39] sm:$0xff] %vm171, %v2737
      %2771 = vst.msk [vmem:[%s2764 + $0x49] sm:$0xff] %vm171, %v2738
      %2772 = vst.msk [vmem:[%s2764 + $0x51] sm:$0xff] %vm171, %v2739
      %2773 = vst.msk [vmem:[%s2764 + $0x61] sm:$0xff] %vm171, %v2740
      %2774 = vst.msk [vmem:[%s2764 + $0x69] sm:$0xff] %vm171, %v2741
      %2775 = vst.msk [vmem:[%s2764 + $0x79] sm:$0xff] %vm171, %v2742
      %2776 = vst.msk [vmem:[%s2764 + $0x81] sm:$0xff] %vm171, %v2743
      %2777 = vst.msk [vmem:[%s2764 + $0x91] sm:$0xff] %vm171, %v2744
      %2778 = vst.msk [vmem:[%s2764 + $0x99] sm:$0xff] %vm171, %v2745
      %2779 = vst.msk [vmem:[%s2764 + $0xa9] sm:$0xff] %vm171, %v2746
      %2780 = vst.msk [vmem:[%s2764 + $0xb1] sm:$0xff] %vm171, %v2747
      %2781 = vst.msk [vmem:[%s2764 + $0xc1] sm:$0xff] %vm171, %v2748
      %2782 = vst.msk [vmem:[%s2764 + $0xc9] sm:$0xff] %vm171, %v2749
      %2783 = vst.msk [vmem:[%s2764 + $0xd9] sm:$0xff] %vm171, %v2750
      %2784 = vst.msk [vmem:[%s2764 + $0xe1] sm:$0xff] %vm171, %v2751
      %2785 = vst.msk [vmem:[%s2764 + $0xf1] sm:$0xff] %vm171, %v2752
      %2786 = vst.msk [vmem:[%s2764 + $0xf9] sm:$0xff] %vm171, %v2753
      %2787 = vst.msk [vmem:[%s2764 + $0x109] sm:$0xff] %vm171, %v2754
      %2788 = vst.msk [vmem:[%s2764 + $0x111] sm:$0xff] %vm171, %v2755
      %2789 = vst.msk [vmem:[%s2764 + $0x121] sm:$0xff] %vm171, %v2756
      %2790 = vst.msk [vmem:[%s2764 + $0x129] sm:$0xff] %vm171, %v2757
      %2791 = vst.msk [vmem:[%s2764 + $0x139] sm:$0xff] %vm171, %v2758
      %2792 = vst.msk [vmem:[%s2764 + $0x141] sm:$0xff] %vm171, %v2759
      %2793 = vst.msk [vmem:[%s2764 + $0x151] sm:$0xff] %vm171, %v2760
      %2794 = vst.msk [vmem:[%s2764 + $0x159] sm:$0xff] %vm171, %v2761
      %2795 = vst.msk [vmem:[%s2764 + $0x169] sm:$0xff] %vm171, %v2762
      %2796 = vst.msk [vmem:[%s2764 + $0x171] sm:$0xff] %vm171, %v2763
      %v2797 = vld [vmem:[#allocation3] sm:$0xff]
      %v2798 = vld [vmem:[#allocation3 + $0x8] sm:$0xff]
      %v2799 = vld [vmem:[#allocation3 + $0x18] sm:$0xff]
      %v2800 = vld [vmem:[#allocation3 + $0x20] sm:$0xff]
      %v2801 = vld [vmem:[#allocation3 + $0x30] sm:$0xff]
      %v2802 = vld [vmem:[#allocation3 + $0x38] sm:$0xff]
      %v2803 = vld [vmem:[#allocation3 + $0x48] sm:$0xff]
      %v2804 = vld [vmem:[#allocation3 + $0x50] sm:$0xff]
      %v2805 = vld [vmem:[#allocation3 + $0x60] sm:$0xff]
      %v2806 = vld [vmem:[#allocation3 + $0x68] sm:$0xff]
      %v2807 = vld [vmem:[#allocation3 + $0x78] sm:$0xff]
      %v2808 = vld [vmem:[#allocation3 + $0x80] sm:$0xff]
      %v2809 = vld [vmem:[#allocation3 + $0x90] sm:$0xff]
      %v2810 = vld [vmem:[#allocation3 + $0x98] sm:$0xff]
      %v2811 = vld [vmem:[#allocation3 + $0xa8] sm:$0xff]
      %v2812 = vld [vmem:[#allocation3 + $0xb0] sm:$0xff]
      %v2813 = vld [vmem:[#allocation3 + $0xc0] sm:$0xff]
      %v2814 = vld [vmem:[#allocation3 + $0xc8] sm:$0xff]
      %v2815 = vld [vmem:[#allocation3 + $0xd8] sm:$0xff]
      %v2816 = vld [vmem:[#allocation3 + $0xe0] sm:$0xff]
      %v2817 = vld [vmem:[#allocation3 + $0xf0] sm:$0xff]
      %v2818 = vld [vmem:[#allocation3 + $0xf8] sm:$0xff]
      %v2819 = vld [vmem:[#allocation3 + $0x108] sm:$0xff]
      %v2820 = vld [vmem:[#allocation3 + $0x110] sm:$0xff]
      %v2821 = vld [vmem:[#allocation3 + $0x120] sm:$0xff]
      %v2822 = vld [vmem:[#allocation3 + $0x128] sm:$0xff]
      %v2823 = vld [vmem:[#allocation3 + $0x138] sm:$0xff]
      %v2824 = vld [vmem:[#allocation3 + $0x140] sm:$0xff]
      %v2825 = vld [vmem:[#allocation3 + $0x150] sm:$0xff]
      %v2826 = vld [vmem:[#allocation3 + $0x158] sm:$0xff]
      %v2827 = vld [vmem:[#allocation3 + $0x168] sm:$0xff]
      %v2828 = vld [vmem:[#allocation3 + $0x170] sm:$0xff]
      %v2829 = vld [vmem:[%s2] sm:$0xf]
      %v2830 = vld [vmem:[#allocation3 + $0x1] sm:$0xff]
      %v2831 = vld [vmem:[#allocation3 + $0x9] sm:$0xff]
      %v2832 = vld [vmem:[#allocation3 + $0x19] sm:$0xff]
      %v2833 = vld [vmem:[#allocation3 + $0x21] sm:$0xff]
      %v2834 = vld [vmem:[#allocation3 + $0x31] sm:$0xff]
      %v2835 = vld [vmem:[#allocation3 + $0x39] sm:$0xff]
      %v2836 = vld [vmem:[#allocation3 + $0x49] sm:$0xff]
      %v2837 = vld [vmem:[#allocation3 + $0x51] sm:$0xff]
      %v2838 = vld [vmem:[#allocation3 + $0x61] sm:$0xff]
      %v2839 = vld [vmem:[#allocation3 + $0x69] sm:$0xff]
      %v2840 = vld [vmem:[#allocation3 + $0x79] sm:$0xff]
      %v2841 = vld [vmem:[#allocation3 + $0x81] sm:$0xff]
      %v2842 = vld [vmem:[#allocation3 + $0x91] sm:$0xff]
      %v2843 = vld [vmem:[#allocation3 + $0x99] sm:$0xff]
      %v2844 = vld [vmem:[#allocation3 + $0xa9] sm:$0xff]
      %v2845 = vld [vmem:[#allocation3 + $0xb1] sm:$0xff]
      %v2846 = vld [vmem:[#allocation3 + $0xc1] sm:$0xff]
      %v2847 = vld [vmem:[#allocation3 + $0xc9] sm:$0xff]
      %v2848 = vld [vmem:[#allocation3 + $0xd9] sm:$0xff]
      %v2849 = vld [vmem:[#allocation3 + $0xe1] sm:$0xff]
      %v2850 = vld [vmem:[#allocation3 + $0xf1] sm:$0xff]
      %v2851 = vld [vmem:[#allocation3 + $0xf9] sm:$0xff]
      %v2852 = vld [vmem:[#allocation3 + $0x109] sm:$0xff]
      %v2853 = vld [vmem:[#allocation3 + $0x111] sm:$0xff]
      %v2854 = vld [vmem:[#allocation3 + $0x121] sm:$0xff]
      %v2855 = vld [vmem:[#allocation3 + $0x129] sm:$0xff]
      %v2856 = vld [vmem:[#allocation3 + $0x139] sm:$0xff]
      %v2857 = vld [vmem:[#allocation3 + $0x141] sm:$0xff]
      %v2858 = vld [vmem:[#allocation3 + $0x151] sm:$0xff]
      %v2859 = vld [vmem:[#allocation3 + $0x159] sm:$0xff]
      %v2860 = vld [vmem:[#allocation3 + $0x169] sm:$0xff]
      %v2861 = vld [vmem:[#allocation3 + $0x171] sm:$0xff]
      %s2862 = scalar_lea.vmem %s2, 4
      %v2863 = vld [vmem:[%s2862] sm:$0xf]
      %v2865 = vsel %vm171, %v2830, 0
      %v2868 = vsel %vm171, %v2831, 0
      %v2871 = vsel %vm171, %v2832, 0
      %v2874 = vsel %vm171, %v2833, 0
      %v2877 = vsel %vm171, %v2834, 0
      %v2880 = vsel %vm171, %v2835, 0
      %v2883 = vsel %vm171, %v2836, 0
      %v2886 = vsel %vm171, %v2837, 0
      %v2889 = vsel %vm171, %v2838, 0
      %v2892 = vsel %vm171, %v2839, 0
      %v2895 = vsel %vm171, %v2840, 0
      %v2898 = vsel %vm171, %v2841, 0
      %v2901 = vsel %vm171, %v2842, 0
      %v2904 = vsel %vm171, %v2843, 0
      %v2907 = vsel %vm171, %v2844, 0
      %v2910 = vsel %vm171, %v2845, 0
      %v2913 = vsel %vm171, %v2846, 0
      %v2916 = vsel %vm171, %v2847, 0
      %v2919 = vsel %vm171, %v2848, 0
      %v2922 = vsel %vm171, %v2849, 0
      %v2925 = vsel %vm171, %v2850, 0
      %v2928 = vsel %vm171, %v2851, 0
      %v2931 = vsel %vm171, %v2852, 0
      %v2934 = vsel %vm171, %v2853, 0
      %v2937 = vsel %vm171, %v2854, 0
      %v2940 = vsel %vm171, %v2855, 0
      %v2943 = vsel %vm171, %v2856, 0
      %v2946 = vsel %vm171, %v2857, 0
      %v2949 = vsel %vm171, %v2858, 0
      %v2952 = vsel %vm171, %v2859, 0
      %v2955 = vsel %vm171, %v2860, 0
      %v2958 = vsel %vm171, %v2861, 0
      %v2961 = vsel %vm488, %v2863, 0
      %2963 = vmatpush.msra.mxu0 0.0
      %2964 = vmatpush.msra.mxu0 0.0
      %2965 = vmatpush.msra.mxu0 0.0
      %2966 = vmatpush.msra.mxu0 0.0
      %2967 = vmatpush.msra.mxu0 0.0
      %2968 = vmatpush.msra.mxu0 0.0
      %2969 = vmatpush.msra.mxu0 0.0
      %2970 = vmatpush.msra.mxu0 0.0
      %2971 = vmatpush.msra.mxu0 0.0
      %2972 = vmatpush.msra.mxu0 0.0
      %2973 = vmatpush.msra.mxu0 0.0
      %2974 = vmatpush.msra.mxu0 0.0
      %2975 = vmatpush.msra.mxu0 0.0
      %2976 = vmatpush.msra.mxu0 0.0
      %2977 = vmatpush.msra.mxu0 0.0
      %2978 = vmatpush.msra.mxu0 %v2961
      %2979 = vmatmul.f32.gmra.mxu0 %v2865
      %v2980 = vpop.f32.mrf.mxu0
      %v2981 = vadd.f32 0.0, %v2980
      %2982 = vmatmul.f32.gmra.mxu0 %v2868
      %v2983 = vpop.f32.mrf.mxu0
      %v2984 = vadd.f32 0.0, %v2983
      %2985 = vmatmul.f32.gmra.mxu0 %v2871
      %v2986 = vpop.f32.mrf.mxu0
      %v2987 = vadd.f32 0.0, %v2986
      %2988 = vmatmul.f32.gmra.mxu0 %v2874
      %v2989 = vpop.f32.mrf.mxu0
      %v2990 = vadd.f32 0.0, %v2989
      %2991 = vmatmul.f32.gmra.mxu0 %v2877
      %v2992 = vpop.f32.mrf.mxu0
      %v2993 = vadd.f32 0.0, %v2992
      %2994 = vmatmul.f32.gmra.mxu0 %v2880
      %v2995 = vpop.f32.mrf.mxu0
      %v2996 = vadd.f32 0.0, %v2995
      %2997 = vmatmul.f32.gmra.mxu0 %v2883
      %v2998 = vpop.f32.mrf.mxu0
      %v2999 = vadd.f32 0.0, %v2998
      %3000 = vmatmul.f32.gmra.mxu0 %v2886
      %v3001 = vpop.f32.mrf.mxu0
      %v3002 = vadd.f32 0.0, %v3001
      %3003 = vmatmul.f32.gmra.mxu0 %v2889
      %v3004 = vpop.f32.mrf.mxu0
      %v3005 = vadd.f32 0.0, %v3004
      %3006 = vmatmul.f32.gmra.mxu0 %v2892
      %v3007 = vpop.f32.mrf.mxu0
      %v3008 = vadd.f32 0.0, %v3007
      %3009 = vmatmul.f32.gmra.mxu0 %v2895
      %v3010 = vpop.f32.mrf.mxu0
      %v3011 = vadd.f32 0.0, %v3010
      %3012 = vmatmul.f32.gmra.mxu0 %v2898
      %v3013 = vpop.f32.mrf.mxu0
      %v3014 = vadd.f32 0.0, %v3013
      %3015 = vmatmul.f32.gmra.mxu0 %v2901
      %v3016 = vpop.f32.mrf.mxu0
      %v3017 = vadd.f32 0.0, %v3016
      %3018 = vmatmul.f32.gmra.mxu0 %v2904
      %v3019 = vpop.f32.mrf.mxu0
      %v3020 = vadd.f32 0.0, %v3019
      %3021 = vmatmul.f32.gmra.mxu0 %v2907
      %v3022 = vpop.f32.mrf.mxu0
      %v3023 = vadd.f32 0.0, %v3022
      %3024 = vmatmul.f32.gmra.mxu0 %v2910
      %v3025 = vpop.f32.mrf.mxu0
      %v3026 = vadd.f32 0.0, %v3025
      %3027 = vmatmul.f32.gmra.mxu0 %v2913
      %v3028 = vpop.f32.mrf.mxu0
      %v3029 = vadd.f32 0.0, %v3028
      %3030 = vmatmul.f32.gmra.mxu0 %v2916
      %v3031 = vpop.f32.mrf.mxu0
      %v3032 = vadd.f32 0.0, %v3031
      %3033 = vmatmul.f32.gmra.mxu0 %v2919
      %v3034 = vpop.f32.mrf.mxu0
      %v3035 = vadd.f32 0.0, %v3034
      %3036 = vmatmul.f32.gmra.mxu0 %v2922
      %v3037 = vpop.f32.mrf.mxu0
      %v3038 = vadd.f32 0.0, %v3037
      %3039 = vmatmul.f32.gmra.mxu0 %v2925
      %v3040 = vpop.f32.mrf.mxu0
      %v3041 = vadd.f32 0.0, %v3040
      %3042 = vmatmul.f32.gmra.mxu0 %v2928
      %v3043 = vpop.f32.mrf.mxu0
      %v3044 = vadd.f32 0.0, %v3043
      %3045 = vmatmul.f32.gmra.mxu0 %v2931
      %v3046 = vpop.f32.mrf.mxu0
      %v3047 = vadd.f32 0.0, %v3046
      %3048 = vmatmul.f32.gmra.mxu0 %v2934
      %v3049 = vpop.f32.mrf.mxu0
      %v3050 = vadd.f32 0.0, %v3049
      %3051 = vmatmul.f32.gmra.mxu0 %v2937
      %v3052 = vpop.f32.mrf.mxu0
      %v3053 = vadd.f32 0.0, %v3052
      %3054 = vmatmul.f32.gmra.mxu0 %v2940
      %v3055 = vpop.f32.mrf.mxu0
      %v3056 = vadd.f32 0.0, %v3055
      %3057 = vmatmul.f32.gmra.mxu0 %v2943
      %v3058 = vpop.f32.mrf.mxu0
      %v3059 = vadd.f32 0.0, %v3058
      %3060 = vmatmul.f32.gmra.mxu0 %v2946
      %v3061 = vpop.f32.mrf.mxu0
      %v3062 = vadd.f32 0.0, %v3061
      %3063 = vmatmul.f32.gmra.mxu0 %v2949
      %v3064 = vpop.f32.mrf.mxu0
      %v3065 = vadd.f32 0.0, %v3064
      %3066 = vmatmul.f32.gmra.mxu0 %v2952
      %v3067 = vpop.f32.mrf.mxu0
      %v3068 = vadd.f32 0.0, %v3067
      %3069 = vmatmul.f32.gmra.mxu0 %v2955
      %v3070 = vpop.f32.mrf.mxu0
      %v3071 = vadd.f32 0.0, %v3070
      %3072 = vmatmul.f32.gmra.mxu0 %v2958
      %v3073 = vpop.f32.mrf.mxu0
      %v3074 = vadd.f32 0.0, %v3073
      %3075 = vdwg.mxu0
      %v3077 = vsel %vm171, %v2797, 0
      %v3080 = vsel %vm171, %v2798, 0
      %v3083 = vsel %vm171, %v2799, 0
      %v3086 = vsel %vm171, %v2800, 0
      %v3089 = vsel %vm171, %v2801, 0
      %v3092 = vsel %vm171, %v2802, 0
      %v3095 = vsel %vm171, %v2803, 0
      %v3098 = vsel %vm171, %v2804, 0
      %v3101 = vsel %vm171, %v2805, 0
      %v3104 = vsel %vm171, %v2806, 0
      %v3107 = vsel %vm171, %v2807, 0
      %v3110 = vsel %vm171, %v2808, 0
      %v3113 = vsel %vm171, %v2809, 0
      %v3116 = vsel %vm171, %v2810, 0
      %v3119 = vsel %vm171, %v2811, 0
      %v3122 = vsel %vm171, %v2812, 0
      %v3125 = vsel %vm171, %v2813, 0
      %v3128 = vsel %vm171, %v2814, 0
      %v3131 = vsel %vm171, %v2815, 0
      %v3134 = vsel %vm171, %v2816, 0
      %v3137 = vsel %vm171, %v2817, 0
      %v3140 = vsel %vm171, %v2818, 0
      %v3143 = vsel %vm171, %v2819, 0
      %v3146 = vsel %vm171, %v2820, 0
      %v3149 = vsel %vm171, %v2821, 0
      %v3152 = vsel %vm171, %v2822, 0
      %v3155 = vsel %vm171, %v2823, 0
      %v3158 = vsel %vm171, %v2824, 0
      %v3161 = vsel %vm171, %v2825, 0
      %v3164 = vsel %vm171, %v2826, 0
      %v3167 = vsel %vm171, %v2827, 0
      %v3170 = vsel %vm171, %v2828, 0
      %v3173 = vsel %vm488, %v2829, 0
      %3175 = vmatpush.msra.mxu0 0.0
      %3176 = vmatpush.msra.mxu0 0.0
      %3177 = vmatpush.msra.mxu0 0.0
      %3178 = vmatpush.msra.mxu0 0.0
      %3179 = vmatpush.msra.mxu0 0.0
      %3180 = vmatpush.msra.mxu0 0.0
      %3181 = vmatpush.msra.mxu0 0.0
      %3182 = vmatpush.msra.mxu0 0.0
      %3183 = vmatpush.msra.mxu0 0.0
      %3184 = vmatpush.msra.mxu0 0.0
      %3185 = vmatpush.msra.mxu0 0.0
      %3186 = vmatpush.msra.mxu0 0.0
      %3187 = vmatpush.msra.mxu0 0.0
      %3188 = vmatpush.msra.mxu0 0.0
      %3189 = vmatpush.msra.mxu0 0.0
      %3190 = vmatpush.msra.mxu0 %v3173
      %3191 = vmatmul.f32.gmra.mxu0 %v3077
      %v3192 = vpop.f32.mrf.mxu0
      %v3193 = vadd.f32 %v2981, %v3192
      %3194 = vmatmul.f32.gmra.mxu0 %v3080
      %v3195 = vpop.f32.mrf.mxu0
      %v3196 = vadd.f32 %v2984, %v3195
      %3197 = vmatmul.f32.gmra.mxu0 %v3083
      %v3198 = vpop.f32.mrf.mxu0
      %v3199 = vadd.f32 %v2987, %v3198
      %3200 = vmatmul.f32.gmra.mxu0 %v3086
      %v3201 = vpop.f32.mrf.mxu0
      %v3202 = vadd.f32 %v2990, %v3201
      %3203 = vmatmul.f32.gmra.mxu0 %v3089
      %v3204 = vpop.f32.mrf.mxu0
      %v3205 = vadd.f32 %v2993, %v3204
      %3206 = vmatmul.f32.gmra.mxu0 %v3092
      %v3207 = vpop.f32.mrf.mxu0
      %v3208 = vadd.f32 %v2996, %v3207
      %3209 = vmatmul.f32.gmra.mxu0 %v3095
      %v3210 = vpop.f32.mrf.mxu0
      %v3211 = vadd.f32 %v2999, %v3210
      %3212 = vmatmul.f32.gmra.mxu0 %v3098
      %v3213 = vpop.f32.mrf.mxu0
      %v3214 = vadd.f32 %v3002, %v3213
      %3215 = vmatmul.f32.gmra.mxu0 %v3101
      %v3216 = vpop.f32.mrf.mxu0
      %v3217 = vadd.f32 %v3005, %v3216
      %3218 = vmatmul.f32.gmra.mxu0 %v3104
      %v3219 = vpop.f32.mrf.mxu0
      %v3220 = vadd.f32 %v3008, %v3219
      %3221 = vmatmul.f32.gmra.mxu0 %v3107
      %v3222 = vpop.f32.mrf.mxu0
      %v3223 = vadd.f32 %v3011, %v3222
      %3224 = vmatmul.f32.gmra.mxu0 %v3110
      %v3225 = vpop.f32.mrf.mxu0
      %v3226 = vadd.f32 %v3014, %v3225
      %3227 = vmatmul.f32.gmra.mxu0 %v3113
      %v3228 = vpop.f32.mrf.mxu0
      %v3229 = vadd.f32 %v3017, %v3228
      %3230 = vmatmul.f32.gmra.mxu0 %v3116
      %v3231 = vpop.f32.mrf.mxu0
      %v3232 = vadd.f32 %v3020, %v3231
      %3233 = vmatmul.f32.gmra.mxu0 %v3119
      %v3234 = vpop.f32.mrf.mxu0
      %v3235 = vadd.f32 %v3023, %v3234
      %3236 = vmatmul.f32.gmra.mxu0 %v3122
      %v3237 = vpop.f32.mrf.mxu0
      %v3238 = vadd.f32 %v3026, %v3237
      %3239 = vmatmul.f32.gmra.mxu0 %v3125
      %v3240 = vpop.f32.mrf.mxu0
      %v3241 = vadd.f32 %v3029, %v3240
      %3242 = vmatmul.f32.gmra.mxu0 %v3128
      %v3243 = vpop.f32.mrf.mxu0
      %v3244 = vadd.f32 %v3032, %v3243
      %3245 = vmatmul.f32.gmra.mxu0 %v3131
      %v3246 = vpop.f32.mrf.mxu0
      %v3247 = vadd.f32 %v3035, %v3246
      %3248 = vmatmul.f32.gmra.mxu0 %v3134
      %v3249 = vpop.f32.mrf.mxu0
      %v3250 = vadd.f32 %v3038, %v3249
      %3251 = vmatmul.f32.gmra.mxu0 %v3137
      %v3252 = vpop.f32.mrf.mxu0
      %v3253 = vadd.f32 %v3041, %v3252
      %3254 = vmatmul.f32.gmra.mxu0 %v3140
      %v3255 = vpop.f32.mrf.mxu0
      %v3256 = vadd.f32 %v3044, %v3255
      %3257 = vmatmul.f32.gmra.mxu0 %v3143
      %v3258 = vpop.f32.mrf.mxu0
      %v3259 = vadd.f32 %v3047, %v3258
      %3260 = vmatmul.f32.gmra.mxu0 %v3146
      %v3261 = vpop.f32.mrf.mxu0
      %v3262 = vadd.f32 %v3050, %v3261
      %3263 = vmatmul.f32.gmra.mxu0 %v3149
      %v3264 = vpop.f32.mrf.mxu0
      %v3265 = vadd.f32 %v3053, %v3264
      %3266 = vmatmul.f32.gmra.mxu0 %v3152
      %v3267 = vpop.f32.mrf.mxu0
      %v3268 = vadd.f32 %v3056, %v3267
      %3269 = vmatmul.f32.gmra.mxu0 %v3155
      %v3270 = vpop.f32.mrf.mxu0
      %v3271 = vadd.f32 %v3059, %v3270
      %3272 = vmatmul.f32.gmra.mxu0 %v3158
      %v3273 = vpop.f32.mrf.mxu0
      %v3274 = vadd.f32 %v3062, %v3273
      %3275 = vmatmul.f32.gmra.mxu0 %v3161
      %v3276 = vpop.f32.mrf.mxu0
      %v3277 = vadd.f32 %v3065, %v3276
      %3278 = vmatmul.f32.gmra.mxu0 %v3164
      %v3279 = vpop.f32.mrf.mxu0
      %v3280 = vadd.f32 %v3068, %v3279
      %3281 = vmatmul.f32.gmra.mxu0 %v3167
      %v3282 = vpop.f32.mrf.mxu0
      %v3283 = vadd.f32 %v3071, %v3282
      %3284 = vmatmul.f32.gmra.mxu0 %v3170
      %v3285 = vpop.f32.mrf.mxu0
      %v3286 = vadd.f32 %v3074, %v3285
      %3287 = vdwg.mxu0
      %v3288 = vld [vmem:[#allocation3 + $0x2] sm:$0xff]
      %v3289 = vld [vmem:[#allocation3 + $0xa] sm:$0xff]
      %v3290 = vld [vmem:[#allocation3 + $0x1a] sm:$0xff]
      %v3291 = vld [vmem:[#allocation3 + $0x22] sm:$0xff]
      %v3292 = vld [vmem:[#allocation3 + $0x32] sm:$0xff]
      %v3293 = vld [vmem:[#allocation3 + $0x3a] sm:$0xff]
      %v3294 = vld [vmem:[#allocation3 + $0x4a] sm:$0xff]
      %v3295 = vld [vmem:[#allocation3 + $0x52] sm:$0xff]
      %v3296 = vld [vmem:[#allocation3 + $0x62] sm:$0xff]
      %v3297 = vld [vmem:[#allocation3 + $0x6a] sm:$0xff]
      %v3298 = vld [vmem:[#allocation3 + $0x7a] sm:$0xff]
      %v3299 = vld [vmem:[#allocation3 + $0x82] sm:$0xff]
      %v3300 = vld [vmem:[#allocation3 + $0x92] sm:$0xff]
      %v3301 = vld [vmem:[#allocation3 + $0x9a] sm:$0xff]
      %v3302 = vld [vmem:[#allocation3 + $0xaa] sm:$0xff]
      %v3303 = vld [vmem:[#allocation3 + $0xb2] sm:$0xff]
      %v3304 = vld [vmem:[#allocation3 + $0xc2] sm:$0xff]
      %v3305 = vld [vmem:[#allocation3 + $0xca] sm:$0xff]
      %v3306 = vld [vmem:[#allocation3 + $0xda] sm:$0xff]
      %v3307 = vld [vmem:[#allocation3 + $0xe2] sm:$0xff]
      %v3308 = vld [vmem:[#allocation3 + $0xf2] sm:$0xff]
      %v3309 = vld [vmem:[#allocation3 + $0xfa] sm:$0xff]
      %v3310 = vld [vmem:[#allocation3 + $0x10a] sm:$0xff]
      %v3311 = vld [vmem:[#allocation3 + $0x112] sm:$0xff]
      %v3312 = vld [vmem:[#allocation3 + $0x122] sm:$0xff]
      %v3313 = vld [vmem:[#allocation3 + $0x12a] sm:$0xff]
      %v3314 = vld [vmem:[#allocation3 + $0x13a] sm:$0xff]
      %v3315 = vld [vmem:[#allocation3 + $0x142] sm:$0xff]
      %v3316 = vld [vmem:[#allocation3 + $0x152] sm:$0xff]
      %v3317 = vld [vmem:[#allocation3 + $0x15a] sm:$0xff]
      %v3318 = vld [vmem:[#allocation3 + $0x16a] sm:$0xff]
      %v3319 = vld [vmem:[#allocation3 + $0x172] sm:$0xff]
      %s3320 = scalar_lea.vmem %s2, 8
      %v3321 = vld [vmem:[%s3320] sm:$0xf]
      %v3323 = vsel %vm171, %v3288, 0
      %v3326 = vsel %vm171, %v3289, 0
      %v3329 = vsel %vm171, %v3290, 0
      %v3332 = vsel %vm171, %v3291, 0
      %v3335 = vsel %vm171, %v3292, 0
      %v3338 = vsel %vm171, %v3293, 0
      %v3341 = vsel %vm171, %v3294, 0
      %v3344 = vsel %vm171, %v3295, 0
      %v3347 = vsel %vm171, %v3296, 0
      %v3350 = vsel %vm171, %v3297, 0
      %v3353 = vsel %vm171, %v3298, 0
      %v3356 = vsel %vm171, %v3299, 0
      %v3359 = vsel %vm171, %v3300, 0
      %v3362 = vsel %vm171, %v3301, 0
      %v3365 = vsel %vm171, %v3302, 0
      %v3368 = vsel %vm171, %v3303, 0
      %v3371 = vsel %vm171, %v3304, 0
      %v3374 = vsel %vm171, %v3305, 0
      %v3377 = vsel %vm171, %v3306, 0
      %v3380 = vsel %vm171, %v3307, 0
      %v3383 = vsel %vm171, %v3308, 0
      %v3386 = vsel %vm171, %v3309, 0
      %v3389 = vsel %vm171, %v3310, 0
      %v3392 = vsel %vm171, %v3311, 0
      %v3395 = vsel %vm171, %v3312, 0
      %v3398 = vsel %vm171, %v3313, 0
      %v3401 = vsel %vm171, %v3314, 0
      %v3404 = vsel %vm171, %v3315, 0
      %v3407 = vsel %vm171, %v3316, 0
      %v3410 = vsel %vm171, %v3317, 0
      %v3413 = vsel %vm171, %v3318, 0
      %v3416 = vsel %vm171, %v3319, 0
      %v3419 = vsel %vm488, %v3321, 0
      %3421 = vmatpush.msra.mxu0 0.0
      %3422 = vmatpush.msra.mxu0 0.0
      %3423 = vmatpush.msra.mxu0 0.0
      %3424 = vmatpush.msra.mxu0 0.0
      %3425 = vmatpush.msra.mxu0 0.0
      %3426 = vmatpush.msra.mxu0 0.0
      %3427 = vmatpush.msra.mxu0 0.0
      %3428 = vmatpush.msra.mxu0 0.0
      %3429 = vmatpush.msra.mxu0 0.0
      %3430 = vmatpush.msra.mxu0 0.0
      %3431 = vmatpush.msra.mxu0 0.0
      %3432 = vmatpush.msra.mxu0 0.0
      %3433 = vmatpush.msra.mxu0 0.0
      %3434 = vmatpush.msra.mxu0 0.0
      %3435 = vmatpush.msra.mxu0 0.0
      %3436 = vmatpush.msra.mxu0 %v3419
      %3437 = vmatmul.f32.gmra.mxu0 %v3323
      %v3438 = vpop.f32.mrf.mxu0
      %v3439 = vadd.f32 0.0, %v3438
      %3440 = vmatmul.f32.gmra.mxu0 %v3326
      %v3441 = vpop.f32.mrf.mxu0
      %v3442 = vadd.f32 0.0, %v3441
      %3443 = vmatmul.f32.gmra.mxu0 %v3329
      %v3444 = vpop.f32.mrf.mxu0
      %v3445 = vadd.f32 0.0, %v3444
      %3446 = vmatmul.f32.gmra.mxu0 %v3332
      %v3447 = vpop.f32.mrf.mxu0
      %v3448 = vadd.f32 0.0, %v3447
      %3449 = vmatmul.f32.gmra.mxu0 %v3335
      %v3450 = vpop.f32.mrf.mxu0
      %v3451 = vadd.f32 0.0, %v3450
      %3452 = vmatmul.f32.gmra.mxu0 %v3338
      %v3453 = vpop.f32.mrf.mxu0
      %v3454 = vadd.f32 0.0, %v3453
      %3455 = vmatmul.f32.gmra.mxu0 %v3341
      %v3456 = vpop.f32.mrf.mxu0
      %v3457 = vadd.f32 0.0, %v3456
      %3458 = vmatmul.f32.gmra.mxu0 %v3344
      %v3459 = vpop.f32.mrf.mxu0
      %v3460 = vadd.f32 0.0, %v3459
      %3461 = vmatmul.f32.gmra.mxu0 %v3347
      %v3462 = vpop.f32.mrf.mxu0
      %v3463 = vadd.f32 0.0, %v3462
      %3464 = vmatmul.f32.gmra.mxu0 %v3350
      %v3465 = vpop.f32.mrf.mxu0
      %v3466 = vadd.f32 0.0, %v3465
      %3467 = vmatmul.f32.gmra.mxu0 %v3353
      %v3468 = vpop.f32.mrf.mxu0
      %v3469 = vadd.f32 0.0, %v3468
      %3470 = vmatmul.f32.gmra.mxu0 %v3356
      %v3471 = vpop.f32.mrf.mxu0
      %v3472 = vadd.f32 0.0, %v3471
      %3473 = vmatmul.f32.gmra.mxu0 %v3359
      %v3474 = vpop.f32.mrf.mxu0
      %v3475 = vadd.f32 0.0, %v3474
      %3476 = vmatmul.f32.gmra.mxu0 %v3362
      %v3477 = vpop.f32.mrf.mxu0
      %v3478 = vadd.f32 0.0, %v3477
      %3479 = vmatmul.f32.gmra.mxu0 %v3365
      %v3480 = vpop.f32.mrf.mxu0
      %v3481 = vadd.f32 0.0, %v3480
      %3482 = vmatmul.f32.gmra.mxu0 %v3368
      %v3483 = vpop.f32.mrf.mxu0
      %v3484 = vadd.f32 0.0, %v3483
      %3485 = vmatmul.f32.gmra.mxu0 %v3371
      %v3486 = vpop.f32.mrf.mxu0
      %v3487 = vadd.f32 0.0, %v3486
      %3488 = vmatmul.f32.gmra.mxu0 %v3374
      %v3489 = vpop.f32.mrf.mxu0
      %v3490 = vadd.f32 0.0, %v3489
      %3491 = vmatmul.f32.gmra.mxu0 %v3377
      %v3492 = vpop.f32.mrf.mxu0
      %v3493 = vadd.f32 0.0, %v3492
      %3494 = vmatmul.f32.gmra.mxu0 %v3380
      %v3495 = vpop.f32.mrf.mxu0
      %v3496 = vadd.f32 0.0, %v3495
      %3497 = vmatmul.f32.gmra.mxu0 %v3383
      %v3498 = vpop.f32.mrf.mxu0
      %v3499 = vadd.f32 0.0, %v3498
      %3500 = vmatmul.f32.gmra.mxu0 %v3386
      %v3501 = vpop.f32.mrf.mxu0
      %v3502 = vadd.f32 0.0, %v3501
      %3503 = vmatmul.f32.gmra.mxu0 %v3389
      %v3504 = vpop.f32.mrf.mxu0
      %v3505 = vadd.f32 0.0, %v3504
      %3506 = vmatmul.f32.gmra.mxu0 %v3392
      %v3507 = vpop.f32.mrf.mxu0
      %v3508 = vadd.f32 0.0, %v3507
      %3509 = vmatmul.f32.gmra.mxu0 %v3395
      %v3510 = vpop.f32.mrf.mxu0
      %v3511 = vadd.f32 0.0, %v3510
      %3512 = vmatmul.f32.gmra.mxu0 %v3398
      %v3513 = vpop.f32.mrf.mxu0
      %v3514 = vadd.f32 0.0, %v3513
      %3515 = vmatmul.f32.gmra.mxu0 %v3401
      %v3516 = vpop.f32.mrf.mxu0
      %v3517 = vadd.f32 0.0, %v3516
      %3518 = vmatmul.f32.gmra.mxu0 %v3404
      %v3519 = vpop.f32.mrf.mxu0
      %v3520 = vadd.f32 0.0, %v3519
      %3521 = vmatmul.f32.gmra.mxu0 %v3407
      %v3522 = vpop.f32.mrf.mxu0
      %v3523 = vadd.f32 0.0, %v3522
      %3524 = vmatmul.f32.gmra.mxu0 %v3410
      %v3525 = vpop.f32.mrf.mxu0
      %v3526 = vadd.f32 0.0, %v3525
      %3527 = vmatmul.f32.gmra.mxu0 %v3413
      %v3528 = vpop.f32.mrf.mxu0
      %v3529 = vadd.f32 0.0, %v3528
      %3530 = vmatmul.f32.gmra.mxu0 %v3416
      %v3531 = vpop.f32.mrf.mxu0
      %v3532 = vadd.f32 0.0, %v3531
      %3533 = vdwg.mxu0
      %v3534 = vadd.f32 %v3193, %v3439
      %v3535 = vadd.f32 %v3196, %v3442
      %v3536 = vadd.f32 %v3199, %v3445
      %v3537 = vadd.f32 %v3202, %v3448
      %v3538 = vadd.f32 %v3205, %v3451
      %v3539 = vadd.f32 %v3208, %v3454
      %v3540 = vadd.f32 %v3211, %v3457
      %v3541 = vadd.f32 %v3214, %v3460
      %v3542 = vadd.f32 %v3217, %v3463
      %v3543 = vadd.f32 %v3220, %v3466
      %v3544 = vadd.f32 %v3223, %v3469
      %v3545 = vadd.f32 %v3226, %v3472
      %v3546 = vadd.f32 %v3229, %v3475
      %v3547 = vadd.f32 %v3232, %v3478
      %v3548 = vadd.f32 %v3235, %v3481
      %v3549 = vadd.f32 %v3238, %v3484
      %v3550 = vadd.f32 %v3241, %v3487
      %v3551 = vadd.f32 %v3244, %v3490
      %v3552 = vadd.f32 %v3247, %v3493
      %v3553 = vadd.f32 %v3250, %v3496
      %v3554 = vadd.f32 %v3253, %v3499
      %v3555 = vadd.f32 %v3256, %v3502
      %v3556 = vadd.f32 %v3259, %v3505
      %v3557 = vadd.f32 %v3262, %v3508
      %v3558 = vadd.f32 %v3265, %v3511
      %v3559 = vadd.f32 %v3268, %v3514
      %v3560 = vadd.f32 %v3271, %v3517
      %v3561 = vadd.f32 %v3274, %v3520
      %v3562 = vadd.f32 %v3277, %v3523
      %v3563 = vadd.f32 %v3280, %v3526
      %v3564 = vadd.f32 %v3283, %v3529
      %v3565 = vadd.f32 %v3286, %v3532
      %v3566 = vld [vmem:[%s2764] sm:$0xff]
      %v3567 = vld [vmem:[%s2764 + $0x8] sm:$0xff]
      %v3568 = vld [vmem:[%s2764 + $0x18] sm:$0xff]
      %v3569 = vld [vmem:[%s2764 + $0x20] sm:$0xff]
      %v3570 = vld [vmem:[%s2764 + $0x30] sm:$0xff]
      %v3571 = vld [vmem:[%s2764 + $0x38] sm:$0xff]
      %v3572 = vld [vmem:[%s2764 + $0x48] sm:$0xff]
      %v3573 = vld [vmem:[%s2764 + $0x50] sm:$0xff]
      %v3574 = vld [vmem:[%s2764 + $0x60] sm:$0xff]
      %v3575 = vld [vmem:[%s2764 + $0x68] sm:$0xff]
      %v3576 = vld [vmem:[%s2764 + $0x78] sm:$0xff]
      %v3577 = vld [vmem:[%s2764 + $0x80] sm:$0xff]
      %v3578 = vld [vmem:[%s2764 + $0x90] sm:$0xff]
      %v3579 = vld [vmem:[%s2764 + $0x98] sm:$0xff]
      %v3580 = vld [vmem:[%s2764 + $0xa8] sm:$0xff]
      %v3581 = vld [vmem:[%s2764 + $0xb0] sm:$0xff]
      %v3582 = vld [vmem:[%s2764 + $0xc0] sm:$0xff]
      %v3583 = vld [vmem:[%s2764 + $0xc8] sm:$0xff]
      %v3584 = vld [vmem:[%s2764 + $0xd8] sm:$0xff]
      %v3585 = vld [vmem:[%s2764 + $0xe0] sm:$0xff]
      %v3586 = vld [vmem:[%s2764 + $0xf0] sm:$0xff]
      %v3587 = vld [vmem:[%s2764 + $0xf8] sm:$0xff]
      %v3588 = vld [vmem:[%s2764 + $0x108] sm:$0xff]
      %v3589 = vld [vmem:[%s2764 + $0x110] sm:$0xff]
      %v3590 = vld [vmem:[%s2764 + $0x120] sm:$0xff]
      %v3591 = vld [vmem:[%s2764 + $0x128] sm:$0xff]
      %v3592 = vld [vmem:[%s2764 + $0x138] sm:$0xff]
      %v3593 = vld [vmem:[%s2764 + $0x140] sm:$0xff]
      %v3594 = vld [vmem:[%s2764 + $0x150] sm:$0xff]
      %v3595 = vld [vmem:[%s2764 + $0x158] sm:$0xff]
      %v3596 = vld [vmem:[%s2764 + $0x168] sm:$0xff]
      %v3597 = vld [vmem:[%s2764 + $0x170] sm:$0xff]
      %s3598 = scalar_lea.vmem %s2, 12
      %v3599 = vld [vmem:[%s3598] sm:$0xf]
      %v3601 = vsel %vm171, %v3566, 0
      %v3604 = vsel %vm171, %v3567, 0
      %v3607 = vsel %vm171, %v3568, 0
      %v3610 = vsel %vm171, %v3569, 0
      %v3613 = vsel %vm171, %v3570, 0
      %v3616 = vsel %vm171, %v3571, 0
      %v3619 = vsel %vm171, %v3572, 0
      %v3622 = vsel %vm171, %v3573, 0
      %v3625 = vsel %vm171, %v3574, 0
      %v3628 = vsel %vm171, %v3575, 0
      %v3631 = vsel %vm171, %v3576, 0
      %v3634 = vsel %vm171, %v3577, 0
      %v3637 = vsel %vm171, %v3578, 0
      %v3640 = vsel %vm171, %v3579, 0
      %v3643 = vsel %vm171, %v3580, 0
      %v3646 = vsel %vm171, %v3581, 0
      %v3649 = vsel %vm171, %v3582, 0
      %v3652 = vsel %vm171, %v3583, 0
      %v3655 = vsel %vm171, %v3584, 0
      %v3658 = vsel %vm171, %v3585, 0
      %v3661 = vsel %vm171, %v3586, 0
      %v3664 = vsel %vm171, %v3587, 0
      %v3667 = vsel %vm171, %v3588, 0
      %v3670 = vsel %vm171, %v3589, 0
      %v3673 = vsel %vm171, %v3590, 0
      %v3676 = vsel %vm171, %v3591, 0
      %v3679 = vsel %vm171, %v3592, 0
      %v3682 = vsel %vm171, %v3593, 0
      %v3685 = vsel %vm171, %v3594, 0
      %v3688 = vsel %vm171, %v3595, 0
      %v3691 = vsel %vm171, %v3596, 0
      %v3694 = vsel %vm171, %v3597, 0
      %v3697 = vsel %vm488, %v3599, 0
      %3699 = vmatpush.msra.mxu0 0.0
      %3700 = vmatpush.msra.mxu0 0.0
      %3701 = vmatpush.msra.mxu0 0.0
      %3702 = vmatpush.msra.mxu0 0.0
      %3703 = vmatpush.msra.mxu0 0.0
      %3704 = vmatpush.msra.mxu0 0.0
      %3705 = vmatpush.msra.mxu0 0.0
      %3706 = vmatpush.msra.mxu0 0.0
      %3707 = vmatpush.msra.mxu0 0.0
      %3708 = vmatpush.msra.mxu0 0.0
      %3709 = vmatpush.msra.mxu0 0.0
      %3710 = vmatpush.msra.mxu0 0.0
      %3711 = vmatpush.msra.mxu0 0.0
      %3712 = vmatpush.msra.mxu0 0.0
      %3713 = vmatpush.msra.mxu0 0.0
      %3714 = vmatpush.msra.mxu0 %v3697
      %3715 = vmatmul.f32.gmra.mxu0 %v3601
      %v3716 = vpop.f32.mrf.mxu0
      %v3717 = vadd.f32 0.0, %v3716
      %3718 = vmatmul.f32.gmra.mxu0 %v3604
      %v3719 = vpop.f32.mrf.mxu0
      %v3720 = vadd.f32 0.0, %v3719
      %3721 = vmatmul.f32.gmra.mxu0 %v3607
      %v3722 = vpop.f32.mrf.mxu0
      %v3723 = vadd.f32 0.0, %v3722
      %3724 = vmatmul.f32.gmra.mxu0 %v3610
      %v3725 = vpop.f32.mrf.mxu0
      %v3726 = vadd.f32 0.0, %v3725
      %3727 = vmatmul.f32.gmra.mxu0 %v3613
      %v3728 = vpop.f32.mrf.mxu0
      %v3729 = vadd.f32 0.0, %v3728
      %3730 = vmatmul.f32.gmra.mxu0 %v3616
      %v3731 = vpop.f32.mrf.mxu0
      %v3732 = vadd.f32 0.0, %v3731
      %3733 = vmatmul.f32.gmra.mxu0 %v3619
      %v3734 = vpop.f32.mrf.mxu0
      %v3735 = vadd.f32 0.0, %v3734
      %3736 = vmatmul.f32.gmra.mxu0 %v3622
      %v3737 = vpop.f32.mrf.mxu0
      %v3738 = vadd.f32 0.0, %v3737
      %3739 = vmatmul.f32.gmra.mxu0 %v3625
      %v3740 = vpop.f32.mrf.mxu0
      %v3741 = vadd.f32 0.0, %v3740
      %3742 = vmatmul.f32.gmra.mxu0 %v3628
      %v3743 = vpop.f32.mrf.mxu0
      %v3744 = vadd.f32 0.0, %v3743
      %3745 = vmatmul.f32.gmra.mxu0 %v3631
      %v3746 = vpop.f32.mrf.mxu0
      %v3747 = vadd.f32 0.0, %v3746
      %3748 = vmatmul.f32.gmra.mxu0 %v3634
      %v3749 = vpop.f32.mrf.mxu0
      %v3750 = vadd.f32 0.0, %v3749
      %3751 = vmatmul.f32.gmra.mxu0 %v3637
      %v3752 = vpop.f32.mrf.mxu0
      %v3753 = vadd.f32 0.0, %v3752
      %3754 = vmatmul.f32.gmra.mxu0 %v3640
      %v3755 = vpop.f32.mrf.mxu0
      %v3756 = vadd.f32 0.0, %v3755
      %3757 = vmatmul.f32.gmra.mxu0 %v3643
      %v3758 = vpop.f32.mrf.mxu0
      %v3759 = vadd.f32 0.0, %v3758
      %3760 = vmatmul.f32.gmra.mxu0 %v3646
      %v3761 = vpop.f32.mrf.mxu0
      %v3762 = vadd.f32 0.0, %v3761
      %3763 = vmatmul.f32.gmra.mxu0 %v3649
      %v3764 = vpop.f32.mrf.mxu0
      %v3765 = vadd.f32 0.0, %v3764
      %3766 = vmatmul.f32.gmra.mxu0 %v3652
      %v3767 = vpop.f32.mrf.mxu0
      %v3768 = vadd.f32 0.0, %v3767
      %3769 = vmatmul.f32.gmra.mxu0 %v3655
      %v3770 = vpop.f32.mrf.mxu0
      %v3771 = vadd.f32 0.0, %v3770
      %3772 = vmatmul.f32.gmra.mxu0 %v3658
      %v3773 = vpop.f32.mrf.mxu0
      %v3774 = vadd.f32 0.0, %v3773
      %3775 = vmatmul.f32.gmra.mxu0 %v3661
      %v3776 = vpop.f32.mrf.mxu0
      %v3777 = vadd.f32 0.0, %v3776
      %3778 = vmatmul.f32.gmra.mxu0 %v3664
      %v3779 = vpop.f32.mrf.mxu0
      %v3780 = vadd.f32 0.0, %v3779
      %3781 = vmatmul.f32.gmra.mxu0 %v3667
      %v3782 = vpop.f32.mrf.mxu0
      %v3783 = vadd.f32 0.0, %v3782
      %3784 = vmatmul.f32.gmra.mxu0 %v3670
      %v3785 = vpop.f32.mrf.mxu0
      %v3786 = vadd.f32 0.0, %v3785
      %3787 = vmatmul.f32.gmra.mxu0 %v3673
      %v3788 = vpop.f32.mrf.mxu0
      %v3789 = vadd.f32 0.0, %v3788
      %3790 = vmatmul.f32.gmra.mxu0 %v3676
      %v3791 = vpop.f32.mrf.mxu0
      %v3792 = vadd.f32 0.0, %v3791
      %3793 = vmatmul.f32.gmra.mxu0 %v3679
      %v3794 = vpop.f32.mrf.mxu0
      %v3795 = vadd.f32 0.0, %v3794
      %3796 = vmatmul.f32.gmra.mxu0 %v3682
      %v3797 = vpop.f32.mrf.mxu0
      %v3798 = vadd.f32 0.0, %v3797
      %3799 = vmatmul.f32.gmra.mxu0 %v3685
      %v3800 = vpop.f32.mrf.mxu0
      %v3801 = vadd.f32 0.0, %v3800
      %3802 = vmatmul.f32.gmra.mxu0 %v3688
      %v3803 = vpop.f32.mrf.mxu0
      %v3804 = vadd.f32 0.0, %v3803
      %3805 = vmatmul.f32.gmra.mxu0 %v3691
      %v3806 = vpop.f32.mrf.mxu0
      %v3807 = vadd.f32 0.0, %v3806
      %3808 = vmatmul.f32.gmra.mxu0 %v3694
      %v3809 = vpop.f32.mrf.mxu0
      %v3810 = vadd.f32 0.0, %v3809
      %3811 = vdwg.mxu0
      %v3812 = vadd.f32 %v3534, %v3717
      %v3813 = vadd.f32 %v3535, %v3720
      %v3814 = vadd.f32 %v3536, %v3723
      %v3815 = vadd.f32 %v3537, %v3726
      %v3816 = vadd.f32 %v3538, %v3729
      %v3817 = vadd.f32 %v3539, %v3732
      %v3818 = vadd.f32 %v3540, %v3735
      %v3819 = vadd.f32 %v3541, %v3738
      %v3820 = vadd.f32 %v3542, %v3741
      %v3821 = vadd.f32 %v3543, %v3744
      %v3822 = vadd.f32 %v3544, %v3747
      %v3823 = vadd.f32 %v3545, %v3750
      %v3824 = vadd.f32 %v3546, %v3753
      %v3825 = vadd.f32 %v3547, %v3756
      %v3826 = vadd.f32 %v3548, %v3759
      %v3827 = vadd.f32 %v3549, %v3762
      %v3828 = vadd.f32 %v3550, %v3765
      %v3829 = vadd.f32 %v3551, %v3768
      %v3830 = vadd.f32 %v3552, %v3771
      %v3831 = vadd.f32 %v3553, %v3774
      %v3832 = vadd.f32 %v3554, %v3777
      %v3833 = vadd.f32 %v3555, %v3780
      %v3834 = vadd.f32 %v3556, %v3783
      %v3835 = vadd.f32 %v3557, %v3786
      %v3836 = vadd.f32 %v3558, %v3789
      %v3837 = vadd.f32 %v3559, %v3792
      %v3838 = vadd.f32 %v3560, %v3795
      %v3839 = vadd.f32 %v3561, %v3798
      %v3840 = vadd.f32 %v3562, %v3801
      %v3841 = vadd.f32 %v3563, %v3804
      %v3842 = vadd.f32 %v3564, %v3807
      %v3843 = vadd.f32 %v3565, %v3810
      %v3844 = vld [vmem:[%s2764 + $0x1] sm:$0xff]
      %v3845 = vld [vmem:[%s2764 + $0x9] sm:$0xff]
      %v3846 = vld [vmem:[%s2764 + $0x19] sm:$0xff]
      %v3847 = vld [vmem:[%s2764 + $0x21] sm:$0xff]
      %v3848 = vld [vmem:[%s2764 + $0x31] sm:$0xff]
      %v3849 = vld [vmem:[%s2764 + $0x39] sm:$0xff]
      %v3850 = vld [vmem:[%s2764 + $0x49] sm:$0xff]
      %v3851 = vld [vmem:[%s2764 + $0x51] sm:$0xff]
      %v3852 = vld [vmem:[%s2764 + $0x61] sm:$0xff]
      %v3853 = vld [vmem:[%s2764 + $0x69] sm:$0xff]
      %v3854 = vld [vmem:[%s2764 + $0x79] sm:$0xff]
      %v3855 = vld [vmem:[%s2764 + $0x81] sm:$0xff]
      %v3856 = vld [vmem:[%s2764 + $0x91] sm:$0xff]
      %v3857 = vld [vmem:[%s2764 + $0x99] sm:$0xff]
      %v3858 = vld [vmem:[%s2764 + $0xa9] sm:$0xff]
      %v3859 = vld [vmem:[%s2764 + $0xb1] sm:$0xff]
      %v3860 = vld [vmem:[%s2764 + $0xc1] sm:$0xff]
      %v3861 = vld [vmem:[%s2764 + $0xc9] sm:$0xff]
      %v3862 = vld [vmem:[%s2764 + $0xd9] sm:$0xff]
      %v3863 = vld [vmem:[%s2764 + $0xe1] sm:$0xff]
      %v3864 = vld [vmem:[%s2764 + $0xf1] sm:$0xff]
      %v3865 = vld [vmem:[%s2764 + $0xf9] sm:$0xff]
      %v3866 = vld [vmem:[%s2764 + $0x109] sm:$0xff]
      %v3867 = vld [vmem:[%s2764 + $0x111] sm:$0xff]
      %v3868 = vld [vmem:[%s2764 + $0x121] sm:$0xff]
      %v3869 = vld [vmem:[%s2764 + $0x129] sm:$0xff]
      %v3870 = vld [vmem:[%s2764 + $0x139] sm:$0xff]
      %v3871 = vld [vmem:[%s2764 + $0x141] sm:$0xff]
      %v3872 = vld [vmem:[%s2764 + $0x151] sm:$0xff]
      %v3873 = vld [vmem:[%s2764 + $0x159] sm:$0xff]
      %v3874 = vld [vmem:[%s2764 + $0x169] sm:$0xff]
      %v3875 = vld [vmem:[%s2764 + $0x171] sm:$0xff]
      %s3876 = scalar_lea.vmem %s2, 16
      %v3877 = vld [vmem:[%s3876] sm:$0xf]
      %v3879 = vsel %vm171, %v3844, 0
      %v3882 = vsel %vm171, %v3845, 0
      %v3885 = vsel %vm171, %v3846, 0
      %v3888 = vsel %vm171, %v3847, 0
      %v3891 = vsel %vm171, %v3848, 0
      %v3894 = vsel %vm171, %v3849, 0
      %v3897 = vsel %vm171, %v3850, 0
      %v3900 = vsel %vm171, %v3851, 0
      %v3903 = vsel %vm171, %v3852, 0
      %v3906 = vsel %vm171, %v3853, 0
      %v3909 = vsel %vm171, %v3854, 0
      %v3912 = vsel %vm171, %v3855, 0
      %v3915 = vsel %vm171, %v3856, 0
      %v3918 = vsel %vm171, %v3857, 0
      %v3921 = vsel %vm171, %v3858, 0
      %v3924 = vsel %vm171, %v3859, 0
      %v3927 = vsel %vm171, %v3860, 0
      %v3930 = vsel %vm171, %v3861, 0
      %v3933 = vsel %vm171, %v3862, 0
      %v3936 = vsel %vm171, %v3863, 0
      %v3939 = vsel %vm171, %v3864, 0
      %v3942 = vsel %vm171, %v3865, 0
      %v3945 = vsel %vm171, %v3866, 0
      %v3948 = vsel %vm171, %v3867, 0
      %v3951 = vsel %vm171, %v3868, 0
      %v3954 = vsel %vm171, %v3869, 0
      %v3957 = vsel %vm171, %v3870, 0
      %v3960 = vsel %vm171, %v3871, 0
      %v3963 = vsel %vm171, %v3872, 0
      %v3966 = vsel %vm171, %v3873, 0
      %v3969 = vsel %vm171, %v3874, 0
      %v3972 = vsel %vm171, %v3875, 0
      %v3975 = vsel %vm488, %v3877, 0
      %3977 = vmatpush.msra.mxu0 0.0
      %3978 = vmatpush.msra.mxu0 0.0
      %3979 = vmatpush.msra.mxu0 0.0
      %3980 = vmatpush.msra.mxu0 0.0
      %3981 = vmatpush.msra.mxu0 0.0
      %3982 = vmatpush.msra.mxu0 0.0
      %3983 = vmatpush.msra.mxu0 0.0
      %3984 = vmatpush.msra.mxu0 0.0
      %3985 = vmatpush.msra.mxu0 0.0
      %3986 = vmatpush.msra.mxu0 0.0
      %3987 = vmatpush.msra.mxu0 0.0
      %3988 = vmatpush.msra.mxu0 0.0
      %3989 = vmatpush.msra.mxu0 0.0
      %3990 = vmatpush.msra.mxu0 0.0
      %3991 = vmatpush.msra.mxu0 0.0
      %3992 = vmatpush.msra.mxu0 %v3975
      %3993 = vmatmul.f32.gmra.mxu0 %v3879
      %v3994 = vpop.f32.mrf.mxu0
      %v3995 = vadd.f32 0.0, %v3994
      %3996 = vmatmul.f32.gmra.mxu0 %v3882
      %v3997 = vpop.f32.mrf.mxu0
      %v3998 = vadd.f32 0.0, %v3997
      %3999 = vmatmul.f32.gmra.mxu0 %v3885
      %v4000 = vpop.f32.mrf.mxu0
      %v4001 = vadd.f32 0.0, %v4000
      %4002 = vmatmul.f32.gmra.mxu0 %v3888
      %v4003 = vpop.f32.mrf.mxu0
      %v4004 = vadd.f32 0.0, %v4003
      %4005 = vmatmul.f32.gmra.mxu0 %v3891
      %v4006 = vpop.f32.mrf.mxu0
      %v4007 = vadd.f32 0.0, %v4006
      %4008 = vmatmul.f32.gmra.mxu0 %v3894
      %v4009 = vpop.f32.mrf.mxu0
      %v4010 = vadd.f32 0.0, %v4009
      %4011 = vmatmul.f32.gmra.mxu0 %v3897
      %v4012 = vpop.f32.mrf.mxu0
      %v4013 = vadd.f32 0.0, %v4012
      %4014 = vmatmul.f32.gmra.mxu0 %v3900
      %v4015 = vpop.f32.mrf.mxu0
      %v4016 = vadd.f32 0.0, %v4015
      %4017 = vmatmul.f32.gmra.mxu0 %v3903
      %v4018 = vpop.f32.mrf.mxu0
      %v4019 = vadd.f32 0.0, %v4018
      %4020 = vmatmul.f32.gmra.mxu0 %v3906
      %v4021 = vpop.f32.mrf.mxu0
      %v4022 = vadd.f32 0.0, %v4021
      %4023 = vmatmul.f32.gmra.mxu0 %v3909
      %v4024 = vpop.f32.mrf.mxu0
      %v4025 = vadd.f32 0.0, %v4024
      %4026 = vmatmul.f32.gmra.mxu0 %v3912
      %v4027 = vpop.f32.mrf.mxu0
      %v4028 = vadd.f32 0.0, %v4027
      %4029 = vmatmul.f32.gmra.mxu0 %v3915
      %v4030 = vpop.f32.mrf.mxu0
      %v4031 = vadd.f32 0.0, %v4030
      %4032 = vmatmul.f32.gmra.mxu0 %v3918
      %v4033 = vpop.f32.mrf.mxu0
      %v4034 = vadd.f32 0.0, %v4033
      %4035 = vmatmul.f32.gmra.mxu0 %v3921
      %v4036 = vpop.f32.mrf.mxu0
      %v4037 = vadd.f32 0.0, %v4036
      %4038 = vmatmul.f32.gmra.mxu0 %v3924
      %v4039 = vpop.f32.mrf.mxu0
      %v4040 = vadd.f32 0.0, %v4039
      %4041 = vmatmul.f32.gmra.mxu0 %v3927
      %v4042 = vpop.f32.mrf.mxu0
      %v4043 = vadd.f32 0.0, %v4042
      %4044 = vmatmul.f32.gmra.mxu0 %v3930
      %v4045 = vpop.f32.mrf.mxu0
      %v4046 = vadd.f32 0.0, %v4045
      %4047 = vmatmul.f32.gmra.mxu0 %v3933
      %v4048 = vpop.f32.mrf.mxu0
      %v4049 = vadd.f32 0.0, %v4048
      %4050 = vmatmul.f32.gmra.mxu0 %v3936
      %v4051 = vpop.f32.mrf.mxu0
      %v4052 = vadd.f32 0.0, %v4051
      %4053 = vmatmul.f32.gmra.mxu0 %v3939
      %v4054 = vpop.f32.mrf.mxu0
      %v4055 = vadd.f32 0.0, %v4054
      %4056 = vmatmul.f32.gmra.mxu0 %v3942
      %v4057 = vpop.f32.mrf.mxu0
      %v4058 = vadd.f32 0.0, %v4057
      %4059 = vmatmul.f32.gmra.mxu0 %v3945
      %v4060 = vpop.f32.mrf.mxu0
      %v4061 = vadd.f32 0.0, %v4060
      %4062 = vmatmul.f32.gmra.mxu0 %v3948
      %v4063 = vpop.f32.mrf.mxu0
      %v4064 = vadd.f32 0.0, %v4063
      %4065 = vmatmul.f32.gmra.mxu0 %v3951
      %v4066 = vpop.f32.mrf.mxu0
      %v4067 = vadd.f32 0.0, %v4066
      %4068 = vmatmul.f32.gmra.mxu0 %v3954
      %v4069 = vpop.f32.mrf.mxu0
      %v4070 = vadd.f32 0.0, %v4069
      %4071 = vmatmul.f32.gmra.mxu0 %v3957
      %v4072 = vpop.f32.mrf.mxu0
      %v4073 = vadd.f32 0.0, %v4072
      %4074 = vmatmul.f32.gmra.mxu0 %v3960
      %v4075 = vpop.f32.mrf.mxu0
      %v4076 = vadd.f32 0.0, %v4075
      %4077 = vmatmul.f32.gmra.mxu0 %v3963
      %v4078 = vpop.f32.mrf.mxu0
      %v4079 = vadd.f32 0.0, %v4078
      %4080 = vmatmul.f32.gmra.mxu0 %v3966
      %v4081 = vpop.f32.mrf.mxu0
      %v4082 = vadd.f32 0.0, %v4081
      %4083 = vmatmul.f32.gmra.mxu0 %v3969
      %v4084 = vpop.f32.mrf.mxu0
      %v4085 = vadd.f32 0.0, %v4084
      %4086 = vmatmul.f32.gmra.mxu0 %v3972
      %v4087 = vpop.f32.mrf.mxu0
      %v4088 = vadd.f32 0.0, %v4087
      %4089 = vdwg.mxu0
      %v4090 = vadd.f32 %v3812, %v3995
      %v4091 = vadd.f32 %v3813, %v3998
      %v4092 = vadd.f32 %v3814, %v4001
      %v4093 = vadd.f32 %v3815, %v4004
      %v4094 = vadd.f32 %v3816, %v4007
      %v4095 = vadd.f32 %v3817, %v4010
      %v4096 = vadd.f32 %v3818, %v4013
      %v4097 = vadd.f32 %v3819, %v4016
      %v4098 = vadd.f32 %v3820, %v4019
      %v4099 = vadd.f32 %v3821, %v4022
      %v4100 = vadd.f32 %v3822, %v4025
      %v4101 = vadd.f32 %v3823, %v4028
      %v4102 = vadd.f32 %v3824, %v4031
      %v4103 = vadd.f32 %v3825, %v4034
      %v4104 = vadd.f32 %v3826, %v4037
      %v4105 = vadd.f32 %v3827, %v4040
      %v4106 = vadd.f32 %v3828, %v4043
      %v4107 = vadd.f32 %v3829, %v4046
      %v4108 = vadd.f32 %v3830, %v4049
      %v4109 = vadd.f32 %v3831, %v4052
      %v4110 = vadd.f32 %v3832, %v4055
      %v4111 = vadd.f32 %v3833, %v4058
      %v4112 = vadd.f32 %v3834, %v4061
      %v4113 = vadd.f32 %v3835, %v4064
      %v4114 = vadd.f32 %v3836, %v4067
      %v4115 = vadd.f32 %v3837, %v4070
      %v4116 = vadd.f32 %v3838, %v4073
      %v4117 = vadd.f32 %v3839, %v4076
      %v4118 = vadd.f32 %v3840, %v4079
      %v4119 = vadd.f32 %v3841, %v4082
      %v4120 = vadd.f32 %v3842, %v4085
      %v4121 = vadd.f32 %v3843, %v4088
      %v4122 = vld [vmem:[%s2764 + $0x2] sm:$0xff]
      %v4123 = vld [vmem:[%s2764 + $0xa] sm:$0xff]
      %v4124 = vld [vmem:[%s2764 + $0x1a] sm:$0xff]
      %v4125 = vld [vmem:[%s2764 + $0x22] sm:$0xff]
      %v4126 = vld [vmem:[%s2764 + $0x32] sm:$0xff]
      %v4127 = vld [vmem:[%s2764 + $0x3a] sm:$0xff]
      %v4128 = vld [vmem:[%s2764 + $0x4a] sm:$0xff]
      %v4129 = vld [vmem:[%s2764 + $0x52] sm:$0xff]
      %v4130 = vld [vmem:[%s2764 + $0x62] sm:$0xff]
      %v4131 = vld [vmem:[%s2764 + $0x6a] sm:$0xff]
      %v4132 = vld [vmem:[%s2764 + $0x7a] sm:$0xff]
      %v4133 = vld [vmem:[%s2764 + $0x82] sm:$0xff]
      %v4134 = vld [vmem:[%s2764 + $0x92] sm:$0xff]
      %v4135 = vld [vmem:[%s2764 + $0x9a] sm:$0xff]
      %v4136 = vld [vmem:[%s2764 + $0xaa] sm:$0xff]
      %v4137 = vld [vmem:[%s2764 + $0xb2] sm:$0xff]
      %v4138 = vld [vmem:[%s2764 + $0xc2] sm:$0xff]
      %v4139 = vld [vmem:[%s2764 + $0xca] sm:$0xff]
      %v4140 = vld [vmem:[%s2764 + $0xda] sm:$0xff]
      %v4141 = vld [vmem:[%s2764 + $0xe2] sm:$0xff]
      %v4142 = vld [vmem:[%s2764 + $0xf2] sm:$0xff]
      %v4143 = vld [vmem:[%s2764 + $0xfa] sm:$0xff]
      %v4144 = vld [vmem:[%s2764 + $0x10a] sm:$0xff]
      %v4145 = vld [vmem:[%s2764 + $0x112] sm:$0xff]
      %v4146 = vld [vmem:[%s2764 + $0x122] sm:$0xff]
      %v4147 = vld [vmem:[%s2764 + $0x12a] sm:$0xff]
      %v4148 = vld [vmem:[%s2764 + $0x13a] sm:$0xff]
      %v4149 = vld [vmem:[%s2764 + $0x142] sm:$0xff]
      %v4150 = vld [vmem:[%s2764 + $0x152] sm:$0xff]
      %v4151 = vld [vmem:[%s2764 + $0x15a] sm:$0xff]
      %v4152 = vld [vmem:[%s2764 + $0x16a] sm:$0xff]
      %v4153 = vld [vmem:[%s2764 + $0x172] sm:$0xff]
      %s4154 = scalar_lea.vmem %s2, 20
      %v4155 = vld [vmem:[%s4154] sm:$0xf]
      %v4157 = vsel %vm171, %v4122, 0
      %v4160 = vsel %vm171, %v4123, 0
      %v4163 = vsel %vm171, %v4124, 0
      %v4166 = vsel %vm171, %v4125, 0
      %v4169 = vsel %vm171, %v4126, 0
      %v4172 = vsel %vm171, %v4127, 0
      %v4175 = vsel %vm171, %v4128, 0
      %v4178 = vsel %vm171, %v4129, 0
      %v4181 = vsel %vm171, %v4130, 0
      %v4184 = vsel %vm171, %v4131, 0
      %v4187 = vsel %vm171, %v4132, 0
      %v4190 = vsel %vm171, %v4133, 0
      %v4193 = vsel %vm171, %v4134, 0
      %v4196 = vsel %vm171, %v4135, 0
      %v4199 = vsel %vm171, %v4136, 0
      %v4202 = vsel %vm171, %v4137, 0
      %v4205 = vsel %vm171, %v4138, 0
      %v4208 = vsel %vm171, %v4139, 0
      %v4211 = vsel %vm171, %v4140, 0
      %v4214 = vsel %vm171, %v4141, 0
      %v4217 = vsel %vm171, %v4142, 0
      %v4220 = vsel %vm171, %v4143, 0
      %v4223 = vsel %vm171, %v4144, 0
      %v4226 = vsel %vm171, %v4145, 0
      %v4229 = vsel %vm171, %v4146, 0
      %v4232 = vsel %vm171, %v4147, 0
      %v4235 = vsel %vm171, %v4148, 0
      %v4238 = vsel %vm171, %v4149, 0
      %v4241 = vsel %vm171, %v4150, 0
      %v4244 = vsel %vm171, %v4151, 0
      %v4247 = vsel %vm171, %v4152, 0
      %v4250 = vsel %vm171, %v4153, 0
      %v4253 = vsel %vm488, %v4155, 0
      %4255 = vmatpush.msra.mxu0 0.0
      %4256 = vmatpush.msra.mxu0 0.0
      %4257 = vmatpush.msra.mxu0 0.0
      %4258 = vmatpush.msra.mxu0 0.0
      %4259 = vmatpush.msra.mxu0 0.0
      %4260 = vmatpush.msra.mxu0 0.0
      %4261 = vmatpush.msra.mxu0 0.0
      %4262 = vmatpush.msra.mxu0 0.0
      %4263 = vmatpush.msra.mxu0 0.0
      %4264 = vmatpush.msra.mxu0 0.0
      %4265 = vmatpush.msra.mxu0 0.0
      %4266 = vmatpush.msra.mxu0 0.0
      %4267 = vmatpush.msra.mxu0 0.0
      %4268 = vmatpush.msra.mxu0 0.0
      %4269 = vmatpush.msra.mxu0 0.0
      %4270 = vmatpush.msra.mxu0 %v4253
      %4271 = vmatmul.f32.gmra.mxu0 %v4157
      %v4272 = vpop.f32.mrf.mxu0
      %v4273 = vadd.f32 0.0, %v4272
      %4274 = vmatmul.f32.gmra.mxu0 %v4160
      %v4275 = vpop.f32.mrf.mxu0
      %v4276 = vadd.f32 0.0, %v4275
      %4277 = vmatmul.f32.gmra.mxu0 %v4163
      %v4278 = vpop.f32.mrf.mxu0
      %v4279 = vadd.f32 0.0, %v4278
      %4280 = vmatmul.f32.gmra.mxu0 %v4166
      %v4281 = vpop.f32.mrf.mxu0
      %v4282 = vadd.f32 0.0, %v4281
      %4283 = vmatmul.f32.gmra.mxu0 %v4169
      %v4284 = vpop.f32.mrf.mxu0
      %v4285 = vadd.f32 0.0, %v4284
      %4286 = vmatmul.f32.gmra.mxu0 %v4172
      %v4287 = vpop.f32.mrf.mxu0
      %v4288 = vadd.f32 0.0, %v4287
      %4289 = vmatmul.f32.gmra.mxu0 %v4175
      %v4290 = vpop.f32.mrf.mxu0
      %v4291 = vadd.f32 0.0, %v4290
      %4292 = vmatmul.f32.gmra.mxu0 %v4178
      %v4293 = vpop.f32.mrf.mxu0
      %v4294 = vadd.f32 0.0, %v4293
      %4295 = vmatmul.f32.gmra.mxu0 %v4181
      %v4296 = vpop.f32.mrf.mxu0
      %v4297 = vadd.f32 0.0, %v4296
      %4298 = vmatmul.f32.gmra.mxu0 %v4184
      %v4299 = vpop.f32.mrf.mxu0
      %v4300 = vadd.f32 0.0, %v4299
      %4301 = vmatmul.f32.gmra.mxu0 %v4187
      %v4302 = vpop.f32.mrf.mxu0
      %v4303 = vadd.f32 0.0, %v4302
      %4304 = vmatmul.f32.gmra.mxu0 %v4190
      %v4305 = vpop.f32.mrf.mxu0
      %v4306 = vadd.f32 0.0, %v4305
      %4307 = vmatmul.f32.gmra.mxu0 %v4193
      %v4308 = vpop.f32.mrf.mxu0
      %v4309 = vadd.f32 0.0, %v4308
      %4310 = vmatmul.f32.gmra.mxu0 %v4196
      %v4311 = vpop.f32.mrf.mxu0
      %v4312 = vadd.f32 0.0, %v4311
      %4313 = vmatmul.f32.gmra.mxu0 %v4199
      %v4314 = vpop.f32.mrf.mxu0
      %v4315 = vadd.f32 0.0, %v4314
      %4316 = vmatmul.f32.gmra.mxu0 %v4202
      %v4317 = vpop.f32.mrf.mxu0
      %v4318 = vadd.f32 0.0, %v4317
      %4319 = vmatmul.f32.gmra.mxu0 %v4205
      %v4320 = vpop.f32.mrf.mxu0
      %v4321 = vadd.f32 0.0, %v4320
      %4322 = vmatmul.f32.gmra.mxu0 %v4208
      %v4323 = vpop.f32.mrf.mxu0
      %v4324 = vadd.f32 0.0, %v4323
      %4325 = vmatmul.f32.gmra.mxu0 %v4211
      %v4326 = vpop.f32.mrf.mxu0
      %v4327 = vadd.f32 0.0, %v4326
      %4328 = vmatmul.f32.gmra.mxu0 %v4214
      %v4329 = vpop.f32.mrf.mxu0
      %v4330 = vadd.f32 0.0, %v4329
      %4331 = vmatmul.f32.gmra.mxu0 %v4217
      %v4332 = vpop.f32.mrf.mxu0
      %v4333 = vadd.f32 0.0, %v4332
      %4334 = vmatmul.f32.gmra.mxu0 %v4220
      %v4335 = vpop.f32.mrf.mxu0
      %v4336 = vadd.f32 0.0, %v4335
      %4337 = vmatmul.f32.gmra.mxu0 %v4223
      %v4338 = vpop.f32.mrf.mxu0
      %v4339 = vadd.f32 0.0, %v4338
      %4340 = vmatmul.f32.gmra.mxu0 %v4226
      %v4341 = vpop.f32.mrf.mxu0
      %v4342 = vadd.f32 0.0, %v4341
      %4343 = vmatmul.f32.gmra.mxu0 %v4229
      %v4344 = vpop.f32.mrf.mxu0
      %v4345 = vadd.f32 0.0, %v4344
      %4346 = vmatmul.f32.gmra.mxu0 %v4232
      %v4347 = vpop.f32.mrf.mxu0
      %v4348 = vadd.f32 0.0, %v4347
      %4349 = vmatmul.f32.gmra.mxu0 %v4235
      %v4350 = vpop.f32.mrf.mxu0
      %v4351 = vadd.f32 0.0, %v4350
      %4352 = vmatmul.f32.gmra.mxu0 %v4238
      %v4353 = vpop.f32.mrf.mxu0
      %v4354 = vadd.f32 0.0, %v4353
      %4355 = vmatmul.f32.gmra.mxu0 %v4241
      %v4356 = vpop.f32.mrf.mxu0
      %v4357 = vadd.f32 0.0, %v4356
      %4358 = vmatmul.f32.gmra.mxu0 %v4244
      %v4359 = vpop.f32.mrf.mxu0
      %v4360 = vadd.f32 0.0, %v4359
      %4361 = vmatmul.f32.gmra.mxu0 %v4247
      %v4362 = vpop.f32.mrf.mxu0
      %v4363 = vadd.f32 0.0, %v4362
      %4364 = vmatmul.f32.gmra.mxu0 %v4250
      %v4365 = vpop.f32.mrf.mxu0
      %v4366 = vadd.f32 0.0, %v4365
      %4367 = vdwg.mxu0
      %v4368 = vadd.f32 %v4090, %v4273
      %v4369 = vadd.f32 %v4091, %v4276
      %v4370 = vadd.f32 %v4092, %v4279
      %v4371 = vadd.f32 %v4093, %v4282
      %v4372 = vadd.f32 %v4094, %v4285
      %v4373 = vadd.f32 %v4095, %v4288
      %v4374 = vadd.f32 %v4096, %v4291
      %v4375 = vadd.f32 %v4097, %v4294
      %v4376 = vadd.f32 %v4098, %v4297
      %v4377 = vadd.f32 %v4099, %v4300
      %v4378 = vadd.f32 %v4100, %v4303
      %v4379 = vadd.f32 %v4101, %v4306
      %v4380 = vadd.f32 %v4102, %v4309
      %v4381 = vadd.f32 %v4103, %v4312
      %v4382 = vadd.f32 %v4104, %v4315
      %v4383 = vadd.f32 %v4105, %v4318
      %v4384 = vadd.f32 %v4106, %v4321
      %v4385 = vadd.f32 %v4107, %v4324
      %v4386 = vadd.f32 %v4108, %v4327
      %v4387 = vadd.f32 %v4109, %v4330
      %v4388 = vadd.f32 %v4110, %v4333
      %v4389 = vadd.f32 %v4111, %v4336
      %v4390 = vadd.f32 %v4112, %v4339
      %v4391 = vadd.f32 %v4113, %v4342
      %v4392 = vadd.f32 %v4114, %v4345
      %v4393 = vadd.f32 %v4115, %v4348
      %v4394 = vadd.f32 %v4116, %v4351
      %v4395 = vadd.f32 %v4117, %v4354
      %v4396 = vadd.f32 %v4118, %v4357
      %v4397 = vadd.f32 %v4119, %v4360
      %v4398 = vadd.f32 %v4120, %v4363
      %v4399 = vadd.f32 %v4121, %v4366
      %s4400 = scalar_lea.vmem [#allocation3], 48
      %v4401 = vld [vmem:[%s4400] sm:$0xff]
      %v4402 = vld [vmem:[%s4400 + $0x8] sm:$0xff]
      %v4403 = vld [vmem:[%s4400 + $0x18] sm:$0xff]
      %v4404 = vld [vmem:[%s4400 + $0x20] sm:$0xff]
      %v4405 = vld [vmem:[%s4400 + $0x30] sm:$0xff]
      %v4406 = vld [vmem:[%s4400 + $0x38] sm:$0xff]
      %v4407 = vld [vmem:[%s4400 + $0x48] sm:$0xff]
      %v4408 = vld [vmem:[%s4400 + $0x50] sm:$0xff]
      %v4409 = vld [vmem:[%s4400 + $0x60] sm:$0xff]
      %v4410 = vld [vmem:[%s4400 + $0x68] sm:$0xff]
      %v4411 = vld [vmem:[%s4400 + $0x78] sm:$0xff]
      %v4412 = vld [vmem:[%s4400 + $0x80] sm:$0xff]
      %v4413 = vld [vmem:[%s4400 + $0x90] sm:$0xff]
      %v4414 = vld [vmem:[%s4400 + $0x98] sm:$0xff]
      %v4415 = vld [vmem:[%s4400 + $0xa8] sm:$0xff]
      %v4416 = vld [vmem:[%s4400 + $0xb0] sm:$0xff]
      %v4417 = vld [vmem:[%s4400 + $0xc0] sm:$0xff]
      %v4418 = vld [vmem:[%s4400 + $0xc8] sm:$0xff]
      %v4419 = vld [vmem:[%s4400 + $0xd8] sm:$0xff]
      %v4420 = vld [vmem:[%s4400 + $0xe0] sm:$0xff]
      %v4421 = vld [vmem:[%s4400 + $0xf0] sm:$0xff]
      %v4422 = vld [vmem:[%s4400 + $0xf8] sm:$0xff]
      %v4423 = vld [vmem:[%s4400 + $0x108] sm:$0xff]
      %v4424 = vld [vmem:[%s4400 + $0x110] sm:$0xff]
      %v4425 = vld [vmem:[%s4400 + $0x120] sm:$0xff]
      %v4426 = vld [vmem:[%s4400 + $0x128] sm:$0xff]
      %v4427 = vld [vmem:[%s4400 + $0x138] sm:$0xff]
      %v4428 = vld [vmem:[%s4400 + $0x140] sm:$0xff]
      %v4429 = vld [vmem:[%s4400 + $0x150] sm:$0xff]
      %v4430 = vld [vmem:[%s4400 + $0x158] sm:$0xff]
      %v4431 = vld [vmem:[%s4400 + $0x168] sm:$0xff]
      %v4432 = vld [vmem:[%s4400 + $0x170] sm:$0xff]
      %s4433 = scalar_lea.vmem %s2, 24
      %v4434 = vld [vmem:[%s4433] sm:$0xf]
      %v4436 = vsel %vm171, %v4401, 0
      %v4439 = vsel %vm171, %v4402, 0
      %v4442 = vsel %vm171, %v4403, 0
      %v4445 = vsel %vm171, %v4404, 0
      %v4448 = vsel %vm171, %v4405, 0
      %v4451 = vsel %vm171, %v4406, 0
      %v4454 = vsel %vm171, %v4407, 0
      %v4457 = vsel %vm171, %v4408, 0
      %v4460 = vsel %vm171, %v4409, 0
      %v4463 = vsel %vm171, %v4410, 0
      %v4466 = vsel %vm171, %v4411, 0
      %v4469 = vsel %vm171, %v4412, 0
      %v4472 = vsel %vm171, %v4413, 0
      %v4475 = vsel %vm171, %v4414, 0
      %v4478 = vsel %vm171, %v4415, 0
      %v4481 = vsel %vm171, %v4416, 0
      %v4484 = vsel %vm171, %v4417, 0
      %v4487 = vsel %vm171, %v4418, 0
      %v4490 = vsel %vm171, %v4419, 0
      %v4493 = vsel %vm171, %v4420, 0
      %v4496 = vsel %vm171, %v4421, 0
      %v4499 = vsel %vm171, %v4422, 0
      %v4502 = vsel %vm171, %v4423, 0
      %v4505 = vsel %vm171, %v4424, 0
      %v4508 = vsel %vm171, %v4425, 0
      %v4511 = vsel %vm171, %v4426, 0
      %v4514 = vsel %vm171, %v4427, 0
      %v4517 = vsel %vm171, %v4428, 0
      %v4520 = vsel %vm171, %v4429, 0
      %v4523 = vsel %vm171, %v4430, 0
      %v4526 = vsel %vm171, %v4431, 0
      %v4529 = vsel %vm171, %v4432, 0
      %v4532 = vsel %vm488, %v4434, 0
      %4534 = vmatpush.msra.mxu0 0.0
      %4535 = vmatpush.msra.mxu0 0.0
      %4536 = vmatpush.msra.mxu0 0.0
      %4537 = vmatpush.msra.mxu0 0.0
      %4538 = vmatpush.msra.mxu0 0.0
      %4539 = vmatpush.msra.mxu0 0.0
      %4540 = vmatpush.msra.mxu0 0.0
      %4541 = vmatpush.msra.mxu0 0.0
      %4542 = vmatpush.msra.mxu0 0.0
      %4543 = vmatpush.msra.mxu0 0.0
      %4544 = vmatpush.msra.mxu0 0.0
      %4545 = vmatpush.msra.mxu0 0.0
      %4546 = vmatpush.msra.mxu0 0.0
      %4547 = vmatpush.msra.mxu0 0.0
      %4548 = vmatpush.msra.mxu0 0.0
      %4549 = vmatpush.msra.mxu0 %v4532
      %4550 = vmatmul.f32.gmra.mxu0 %v4436
      %v4551 = vpop.f32.mrf.mxu0
      %v4552 = vadd.f32 0.0, %v4551
      %4553 = vmatmul.f32.gmra.mxu0 %v4439
      %v4554 = vpop.f32.mrf.mxu0
      %v4555 = vadd.f32 0.0, %v4554
      %4556 = vmatmul.f32.gmra.mxu0 %v4442
      %v4557 = vpop.f32.mrf.mxu0
      %v4558 = vadd.f32 0.0, %v4557
      %4559 = vmatmul.f32.gmra.mxu0 %v4445
      %v4560 = vpop.f32.mrf.mxu0
      %v4561 = vadd.f32 0.0, %v4560
      %4562 = vmatmul.f32.gmra.mxu0 %v4448
      %v4563 = vpop.f32.mrf.mxu0
      %v4564 = vadd.f32 0.0, %v4563
      %4565 = vmatmul.f32.gmra.mxu0 %v4451
      %v4566 = vpop.f32.mrf.mxu0
      %v4567 = vadd.f32 0.0, %v4566
      %4568 = vmatmul.f32.gmra.mxu0 %v4454
      %v4569 = vpop.f32.mrf.mxu0
      %v4570 = vadd.f32 0.0, %v4569
      %4571 = vmatmul.f32.gmra.mxu0 %v4457
      %v4572 = vpop.f32.mrf.mxu0
      %v4573 = vadd.f32 0.0, %v4572
      %4574 = vmatmul.f32.gmra.mxu0 %v4460
      %v4575 = vpop.f32.mrf.mxu0
      %v4576 = vadd.f32 0.0, %v4575
      %4577 = vmatmul.f32.gmra.mxu0 %v4463
      %v4578 = vpop.f32.mrf.mxu0
      %v4579 = vadd.f32 0.0, %v4578
      %4580 = vmatmul.f32.gmra.mxu0 %v4466
      %v4581 = vpop.f32.mrf.mxu0
      %v4582 = vadd.f32 0.0, %v4581
      %4583 = vmatmul.f32.gmra.mxu0 %v4469
      %v4584 = vpop.f32.mrf.mxu0
      %v4585 = vadd.f32 0.0, %v4584
      %4586 = vmatmul.f32.gmra.mxu0 %v4472
      %v4587 = vpop.f32.mrf.mxu0
      %v4588 = vadd.f32 0.0, %v4587
      %4589 = vmatmul.f32.gmra.mxu0 %v4475
      %v4590 = vpop.f32.mrf.mxu0
      %v4591 = vadd.f32 0.0, %v4590
      %4592 = vmatmul.f32.gmra.mxu0 %v4478
      %v4593 = vpop.f32.mrf.mxu0
      %v4594 = vadd.f32 0.0, %v4593
      %4595 = vmatmul.f32.gmra.mxu0 %v4481
      %v4596 = vpop.f32.mrf.mxu0
      %v4597 = vadd.f32 0.0, %v4596
      %4598 = vmatmul.f32.gmra.mxu0 %v4484
      %v4599 = vpop.f32.mrf.mxu0
      %v4600 = vadd.f32 0.0, %v4599
      %4601 = vmatmul.f32.gmra.mxu0 %v4487
      %v4602 = vpop.f32.mrf.mxu0
      %v4603 = vadd.f32 0.0, %v4602
      %4604 = vmatmul.f32.gmra.mxu0 %v4490
      %v4605 = vpop.f32.mrf.mxu0
      %v4606 = vadd.f32 0.0, %v4605
      %4607 = vmatmul.f32.gmra.mxu0 %v4493
      %v4608 = vpop.f32.mrf.mxu0
      %v4609 = vadd.f32 0.0, %v4608
      %4610 = vmatmul.f32.gmra.mxu0 %v4496
      %v4611 = vpop.f32.mrf.mxu0
      %v4612 = vadd.f32 0.0, %v4611
      %4613 = vmatmul.f32.gmra.mxu0 %v4499
      %v4614 = vpop.f32.mrf.mxu0
      %v4615 = vadd.f32 0.0, %v4614
      %4616 = vmatmul.f32.gmra.mxu0 %v4502
      %v4617 = vpop.f32.mrf.mxu0
      %v4618 = vadd.f32 0.0, %v4617
      %4619 = vmatmul.f32.gmra.mxu0 %v4505
      %v4620 = vpop.f32.mrf.mxu0
      %v4621 = vadd.f32 0.0, %v4620
      %4622 = vmatmul.f32.gmra.mxu0 %v4508
      %v4623 = vpop.f32.mrf.mxu0
      %v4624 = vadd.f32 0.0, %v4623
      %4625 = vmatmul.f32.gmra.mxu0 %v4511
      %v4626 = vpop.f32.mrf.mxu0
      %v4627 = vadd.f32 0.0, %v4626
      %4628 = vmatmul.f32.gmra.mxu0 %v4514
      %v4629 = vpop.f32.mrf.mxu0
      %v4630 = vadd.f32 0.0, %v4629
      %4631 = vmatmul.f32.gmra.mxu0 %v4517
      %v4632 = vpop.f32.mrf.mxu0
      %v4633 = vadd.f32 0.0, %v4632
      %4634 = vmatmul.f32.gmra.mxu0 %v4520
      %v4635 = vpop.f32.mrf.mxu0
      %v4636 = vadd.f32 0.0, %v4635
      %4637 = vmatmul.f32.gmra.mxu0 %v4523
      %v4638 = vpop.f32.mrf.mxu0
      %v4639 = vadd.f32 0.0, %v4638
      %4640 = vmatmul.f32.gmra.mxu0 %v4526
      %v4641 = vpop.f32.mrf.mxu0
      %v4642 = vadd.f32 0.0, %v4641
      %4643 = vmatmul.f32.gmra.mxu0 %v4529
      %v4644 = vpop.f32.mrf.mxu0
      %v4645 = vadd.f32 0.0, %v4644
      %4646 = vdwg.mxu0
      %v4647 = vadd.f32 %v4368, %v4552
      %v4648 = vadd.f32 %v4369, %v4555
      %v4649 = vadd.f32 %v4370, %v4558
      %v4650 = vadd.f32 %v4371, %v4561
      %v4651 = vadd.f32 %v4372, %v4564
      %v4652 = vadd.f32 %v4373, %v4567
      %v4653 = vadd.f32 %v4374, %v4570
      %v4654 = vadd.f32 %v4375, %v4573
      %v4655 = vadd.f32 %v4376, %v4576
      %v4656 = vadd.f32 %v4377, %v4579
      %v4657 = vadd.f32 %v4378, %v4582
      %v4658 = vadd.f32 %v4379, %v4585
      %v4659 = vadd.f32 %v4380, %v4588
      %v4660 = vadd.f32 %v4381, %v4591
      %v4661 = vadd.f32 %v4382, %v4594
      %v4662 = vadd.f32 %v4383, %v4597
      %v4663 = vadd.f32 %v4384, %v4600
      %v4664 = vadd.f32 %v4385, %v4603
      %v4665 = vadd.f32 %v4386, %v4606
      %v4666 = vadd.f32 %v4387, %v4609
      %v4667 = vadd.f32 %v4388, %v4612
      %v4668 = vadd.f32 %v4389, %v4615
      %v4669 = vadd.f32 %v4390, %v4618
      %v4670 = vadd.f32 %v4391, %v4621
      %v4671 = vadd.f32 %v4392, %v4624
      %v4672 = vadd.f32 %v4393, %v4627
      %v4673 = vadd.f32 %v4394, %v4630
      %v4674 = vadd.f32 %v4395, %v4633
      %v4675 = vadd.f32 %v4396, %v4636
      %v4676 = vadd.f32 %v4397, %v4639
      %v4677 = vadd.f32 %v4398, %v4642
      %v4678 = vadd.f32 %v4399, %v4645
      %v4679 = vld [vmem:[%s4400 + $0x1] sm:$0xff]
      %v4680 = vld [vmem:[%s4400 + $0x9] sm:$0xff]
      %v4681 = vld [vmem:[%s4400 + $0x19] sm:$0xff]
      %v4682 = vld [vmem:[%s4400 + $0x21] sm:$0xff]
      %v4683 = vld [vmem:[%s4400 + $0x31] sm:$0xff]
      %v4684 = vld [vmem:[%s4400 + $0x39] sm:$0xff]
      %v4685 = vld [vmem:[%s4400 + $0x49] sm:$0xff]
      %v4686 = vld [vmem:[%s4400 + $0x51] sm:$0xff]
      %v4687 = vld [vmem:[%s4400 + $0x61] sm:$0xff]
      %v4688 = vld [vmem:[%s4400 + $0x69] sm:$0xff]
      %v4689 = vld [vmem:[%s4400 + $0x79] sm:$0xff]
      %v4690 = vld [vmem:[%s4400 + $0x81] sm:$0xff]
      %v4691 = vld [vmem:[%s4400 + $0x91] sm:$0xff]
      %v4692 = vld [vmem:[%s4400 + $0x99] sm:$0xff]
      %v4693 = vld [vmem:[%s4400 + $0xa9] sm:$0xff]
      %v4694 = vld [vmem:[%s4400 + $0xb1] sm:$0xff]
      %v4695 = vld [vmem:[%s4400 + $0xc1] sm:$0xff]
      %v4696 = vld [vmem:[%s4400 + $0xc9] sm:$0xff]
      %v4697 = vld [vmem:[%s4400 + $0xd9] sm:$0xff]
      %v4698 = vld [vmem:[%s4400 + $0xe1] sm:$0xff]
      %v4699 = vld [vmem:[%s4400 + $0xf1] sm:$0xff]
      %v4700 = vld [vmem:[%s4400 + $0xf9] sm:$0xff]
      %v4701 = vld [vmem:[%s4400 + $0x109] sm:$0xff]
      %v4702 = vld [vmem:[%s4400 + $0x111] sm:$0xff]
      %v4703 = vld [vmem:[%s4400 + $0x121] sm:$0xff]
      %v4704 = vld [vmem:[%s4400 + $0x129] sm:$0xff]
      %v4705 = vld [vmem:[%s4400 + $0x139] sm:$0xff]
      %v4706 = vld [vmem:[%s4400 + $0x141] sm:$0xff]
      %v4707 = vld [vmem:[%s4400 + $0x151] sm:$0xff]
      %v4708 = vld [vmem:[%s4400 + $0x159] sm:$0xff]
      %v4709 = vld [vmem:[%s4400 + $0x169] sm:$0xff]
      %v4710 = vld [vmem:[%s4400 + $0x171] sm:$0xff]
      %s4711 = scalar_lea.vmem %s2, 28
      %v4712 = vld [vmem:[%s4711] sm:$0xf]
      %v4714 = vsel %vm171, %v4679, 0
      %v4717 = vsel %vm171, %v4680, 0
      %v4720 = vsel %vm171, %v4681, 0
      %v4723 = vsel %vm171, %v4682, 0
      %v4726 = vsel %vm171, %v4683, 0
      %v4729 = vsel %vm171, %v4684, 0
      %v4732 = vsel %vm171, %v4685, 0
      %v4735 = vsel %vm171, %v4686, 0
      %v4738 = vsel %vm171, %v4687, 0
      %v4741 = vsel %vm171, %v4688, 0
      %v4744 = vsel %vm171, %v4689, 0
      %v4747 = vsel %vm171, %v4690, 0
      %v4750 = vsel %vm171, %v4691, 0
      %v4753 = vsel %vm171, %v4692, 0
      %v4756 = vsel %vm171, %v4693, 0
      %v4759 = vsel %vm171, %v4694, 0
      %v4762 = vsel %vm171, %v4695, 0
      %v4765 = vsel %vm171, %v4696, 0
      %v4768 = vsel %vm171, %v4697, 0
      %v4771 = vsel %vm171, %v4698, 0
      %v4774 = vsel %vm171, %v4699, 0
      %v4777 = vsel %vm171, %v4700, 0
      %v4780 = vsel %vm171, %v4701, 0
      %v4783 = vsel %vm171, %v4702, 0
      %v4786 = vsel %vm171, %v4703, 0
      %v4789 = vsel %vm171, %v4704, 0
      %v4792 = vsel %vm171, %v4705, 0
      %v4795 = vsel %vm171, %v4706, 0
      %v4798 = vsel %vm171, %v4707, 0
      %v4801 = vsel %vm171, %v4708, 0
      %v4804 = vsel %vm171, %v4709, 0
      %v4807 = vsel %vm171, %v4710, 0
      %v4810 = vsel %vm488, %v4712, 0
      %4812 = vmatpush.msra.mxu0 0.0
      %4813 = vmatpush.msra.mxu0 0.0
      %4814 = vmatpush.msra.mxu0 0.0
      %4815 = vmatpush.msra.mxu0 0.0
      %4816 = vmatpush.msra.mxu0 0.0
      %4817 = vmatpush.msra.mxu0 0.0
      %4818 = vmatpush.msra.mxu0 0.0
      %4819 = vmatpush.msra.mxu0 0.0
      %4820 = vmatpush.msra.mxu0 0.0
      %4821 = vmatpush.msra.mxu0 0.0
      %4822 = vmatpush.msra.mxu0 0.0
      %4823 = vmatpush.msra.mxu0 0.0
      %4824 = vmatpush.msra.mxu0 0.0
      %4825 = vmatpush.msra.mxu0 0.0
      %4826 = vmatpush.msra.mxu0 0.0
      %4827 = vmatpush.msra.mxu0 %v4810
      %4828 = vmatmul.f32.gmra.mxu0 %v4714
      %v4829 = vpop.f32.mrf.mxu0
      %v4830 = vadd.f32 0.0, %v4829
      %4831 = vmatmul.f32.gmra.mxu0 %v4717
      %v4832 = vpop.f32.mrf.mxu0
      %v4833 = vadd.f32 0.0, %v4832
      %4834 = vmatmul.f32.gmra.mxu0 %v4720
      %v4835 = vpop.f32.mrf.mxu0
      %v4836 = vadd.f32 0.0, %v4835
      %4837 = vmatmul.f32.gmra.mxu0 %v4723
      %v4838 = vpop.f32.mrf.mxu0
      %v4839 = vadd.f32 0.0, %v4838
      %4840 = vmatmul.f32.gmra.mxu0 %v4726
      %v4841 = vpop.f32.mrf.mxu0
      %v4842 = vadd.f32 0.0, %v4841
      %4843 = vmatmul.f32.gmra.mxu0 %v4729
      %v4844 = vpop.f32.mrf.mxu0
      %v4845 = vadd.f32 0.0, %v4844
      %4846 = vmatmul.f32.gmra.mxu0 %v4732
      %v4847 = vpop.f32.mrf.mxu0
      %v4848 = vadd.f32 0.0, %v4847
      %4849 = vmatmul.f32.gmra.mxu0 %v4735
      %v4850 = vpop.f32.mrf.mxu0
      %v4851 = vadd.f32 0.0, %v4850
      %4852 = vmatmul.f32.gmra.mxu0 %v4738
      %v4853 = vpop.f32.mrf.mxu0
      %v4854 = vadd.f32 0.0, %v4853
      %4855 = vmatmul.f32.gmra.mxu0 %v4741
      %v4856 = vpop.f32.mrf.mxu0
      %v4857 = vadd.f32 0.0, %v4856
      %4858 = vmatmul.f32.gmra.mxu0 %v4744
      %v4859 = vpop.f32.mrf.mxu0
      %v4860 = vadd.f32 0.0, %v4859
      %4861 = vmatmul.f32.gmra.mxu0 %v4747
      %v4862 = vpop.f32.mrf.mxu0
      %v4863 = vadd.f32 0.0, %v4862
      %4864 = vmatmul.f32.gmra.mxu0 %v4750
      %v4865 = vpop.f32.mrf.mxu0
      %v4866 = vadd.f32 0.0, %v4865
      %4867 = vmatmul.f32.gmra.mxu0 %v4753
      %v4868 = vpop.f32.mrf.mxu0
      %v4869 = vadd.f32 0.0, %v4868
      %4870 = vmatmul.f32.gmra.mxu0 %v4756
      %v4871 = vpop.f32.mrf.mxu0
      %v4872 = vadd.f32 0.0, %v4871
      %4873 = vmatmul.f32.gmra.mxu0 %v4759
      %v4874 = vpop.f32.mrf.mxu0
      %v4875 = vadd.f32 0.0, %v4874
      %4876 = vmatmul.f32.gmra.mxu0 %v4762
      %v4877 = vpop.f32.mrf.mxu0
      %v4878 = vadd.f32 0.0, %v4877
      %4879 = vmatmul.f32.gmra.mxu0 %v4765
      %v4880 = vpop.f32.mrf.mxu0
      %v4881 = vadd.f32 0.0, %v4880
      %4882 = vmatmul.f32.gmra.mxu0 %v4768
      %v4883 = vpop.f32.mrf.mxu0
      %v4884 = vadd.f32 0.0, %v4883
      %4885 = vmatmul.f32.gmra.mxu0 %v4771
      %v4886 = vpop.f32.mrf.mxu0
      %v4887 = vadd.f32 0.0, %v4886
      %4888 = vmatmul.f32.gmra.mxu0 %v4774
      %v4889 = vpop.f32.mrf.mxu0
      %v4890 = vadd.f32 0.0, %v4889
      %4891 = vmatmul.f32.gmra.mxu0 %v4777
      %v4892 = vpop.f32.mrf.mxu0
      %v4893 = vadd.f32 0.0, %v4892
      %4894 = vmatmul.f32.gmra.mxu0 %v4780
      %v4895 = vpop.f32.mrf.mxu0
      %v4896 = vadd.f32 0.0, %v4895
      %4897 = vmatmul.f32.gmra.mxu0 %v4783
      %v4898 = vpop.f32.mrf.mxu0
      %v4899 = vadd.f32 0.0, %v4898
      %4900 = vmatmul.f32.gmra.mxu0 %v4786
      %v4901 = vpop.f32.mrf.mxu0
      %v4902 = vadd.f32 0.0, %v4901
      %4903 = vmatmul.f32.gmra.mxu0 %v4789
      %v4904 = vpop.f32.mrf.mxu0
      %v4905 = vadd.f32 0.0, %v4904
      %4906 = vmatmul.f32.gmra.mxu0 %v4792
      %v4907 = vpop.f32.mrf.mxu0
      %v4908 = vadd.f32 0.0, %v4907
      %4909 = vmatmul.f32.gmra.mxu0 %v4795
      %v4910 = vpop.f32.mrf.mxu0
      %v4911 = vadd.f32 0.0, %v4910
      %4912 = vmatmul.f32.gmra.mxu0 %v4798
      %v4913 = vpop.f32.mrf.mxu0
      %v4914 = vadd.f32 0.0, %v4913
      %4915 = vmatmul.f32.gmra.mxu0 %v4801
      %v4916 = vpop.f32.mrf.mxu0
      %v4917 = vadd.f32 0.0, %v4916
      %4918 = vmatmul.f32.gmra.mxu0 %v4804
      %v4919 = vpop.f32.mrf.mxu0
      %v4920 = vadd.f32 0.0, %v4919
      %4921 = vmatmul.f32.gmra.mxu0 %v4807
      %v4922 = vpop.f32.mrf.mxu0
      %v4923 = vadd.f32 0.0, %v4922
      %4924 = vdwg.mxu0
      %v4925 = vadd.f32 %v4647, %v4830
      %v4926 = vadd.f32 %v4648, %v4833
      %v4927 = vadd.f32 %v4649, %v4836
      %v4928 = vadd.f32 %v4650, %v4839
      %v4929 = vadd.f32 %v4651, %v4842
      %v4930 = vadd.f32 %v4652, %v4845
      %v4931 = vadd.f32 %v4653, %v4848
      %v4932 = vadd.f32 %v4654, %v4851
      %v4933 = vadd.f32 %v4655, %v4854
      %v4934 = vadd.f32 %v4656, %v4857
      %v4935 = vadd.f32 %v4657, %v4860
      %v4936 = vadd.f32 %v4658, %v4863
      %v4937 = vadd.f32 %v4659, %v4866
      %v4938 = vadd.f32 %v4660, %v4869
      %v4939 = vadd.f32 %v4661, %v4872
      %v4940 = vadd.f32 %v4662, %v4875
      %v4941 = vadd.f32 %v4663, %v4878
      %v4942 = vadd.f32 %v4664, %v4881
      %v4943 = vadd.f32 %v4665, %v4884
      %v4944 = vadd.f32 %v4666, %v4887
      %v4945 = vadd.f32 %v4667, %v4890
      %v4946 = vadd.f32 %v4668, %v4893
      %v4947 = vadd.f32 %v4669, %v4896
      %v4948 = vadd.f32 %v4670, %v4899
      %v4949 = vadd.f32 %v4671, %v4902
      %v4950 = vadd.f32 %v4672, %v4905
      %v4951 = vadd.f32 %v4673, %v4908
      %v4952 = vadd.f32 %v4674, %v4911
      %v4953 = vadd.f32 %v4675, %v4914
      %v4954 = vadd.f32 %v4676, %v4917
      %v4955 = vadd.f32 %v4677, %v4920
      %v4956 = vadd.f32 %v4678, %v4923
      %v4957 = vld [vmem:[%s4400 + $0x2] sm:$0xff]
      %v4958 = vld [vmem:[%s4400 + $0xa] sm:$0xff]
      %v4959 = vld [vmem:[%s4400 + $0x1a] sm:$0xff]
      %v4960 = vld [vmem:[%s4400 + $0x22] sm:$0xff]
      %v4961 = vld [vmem:[%s4400 + $0x32] sm:$0xff]
      %v4962 = vld [vmem:[%s4400 + $0x3a] sm:$0xff]
      %v4963 = vld [vmem:[%s4400 + $0x4a] sm:$0xff]
      %v4964 = vld [vmem:[%s4400 + $0x52] sm:$0xff]
      %v4965 = vld [vmem:[%s4400 + $0x62] sm:$0xff]
      %v4966 = vld [vmem:[%s4400 + $0x6a] sm:$0xff]
      %v4967 = vld [vmem:[%s4400 + $0x7a] sm:$0xff]
      %v4968 = vld [vmem:[%s4400 + $0x82] sm:$0xff]
      %v4969 = vld [vmem:[%s4400 + $0x92] sm:$0xff]
      %v4970 = vld [vmem:[%s4400 + $0x9a] sm:$0xff]
      %v4971 = vld [vmem:[%s4400 + $0xaa] sm:$0xff]
      %v4972 = vld [vmem:[%s4400 + $0xb2] sm:$0xff]
      %v4973 = vld [vmem:[%s4400 + $0xc2] sm:$0xff]
      %v4974 = vld [vmem:[%s4400 + $0xca] sm:$0xff]
      %v4975 = vld [vmem:[%s4400 + $0xda] sm:$0xff]
      %v4976 = vld [vmem:[%s4400 + $0xe2] sm:$0xff]
      %v4977 = vld [vmem:[%s4400 + $0xf2] sm:$0xff]
      %v4978 = vld [vmem:[%s4400 + $0xfa] sm:$0xff]
      %v4979 = vld [vmem:[%s4400 + $0x10a] sm:$0xff]
      %v4980 = vld [vmem:[%s4400 + $0x112] sm:$0xff]
      %v4981 = vld [vmem:[%s4400 + $0x122] sm:$0xff]
      %v4982 = vld [vmem:[%s4400 + $0x12a] sm:$0xff]
      %v4983 = vld [vmem:[%s4400 + $0x13a] sm:$0xff]
      %v4984 = vld [vmem:[%s4400 + $0x142] sm:$0xff]
      %v4985 = vld [vmem:[%s4400 + $0x152] sm:$0xff]
      %v4986 = vld [vmem:[%s4400 + $0x15a] sm:$0xff]
      %v4987 = vld [vmem:[%s4400 + $0x16a] sm:$0xff]
      %v4988 = vld [vmem:[%s4400 + $0x172] sm:$0xff]
      %s4989 = scalar_lea.vmem %s2, 32
      %v4990 = vld [vmem:[%s4989] sm:$0xf]
      %v4992 = vsel %vm171, %v4957, 0
      %v4995 = vsel %vm171, %v4958, 0
      %v4998 = vsel %vm171, %v4959, 0
      %v5001 = vsel %vm171, %v4960, 0
      %v5004 = vsel %vm171, %v4961, 0
      %v5007 = vsel %vm171, %v4962, 0
      %v5010 = vsel %vm171, %v4963, 0
      %v5013 = vsel %vm171, %v4964, 0
      %v5016 = vsel %vm171, %v4965, 0
      %v5019 = vsel %vm171, %v4966, 0
      %v5022 = vsel %vm171, %v4967, 0
      %v5025 = vsel %vm171, %v4968, 0
      %v5028 = vsel %vm171, %v4969, 0
      %v5031 = vsel %vm171, %v4970, 0
      %v5034 = vsel %vm171, %v4971, 0
      %v5037 = vsel %vm171, %v4972, 0
      %v5040 = vsel %vm171, %v4973, 0
      %v5043 = vsel %vm171, %v4974, 0
      %v5046 = vsel %vm171, %v4975, 0
      %v5049 = vsel %vm171, %v4976, 0
      %v5052 = vsel %vm171, %v4977, 0
      %v5055 = vsel %vm171, %v4978, 0
      %v5058 = vsel %vm171, %v4979, 0
      %v5061 = vsel %vm171, %v4980, 0
      %v5064 = vsel %vm171, %v4981, 0
      %v5067 = vsel %vm171, %v4982, 0
      %v5070 = vsel %vm171, %v4983, 0
      %v5073 = vsel %vm171, %v4984, 0
      %v5076 = vsel %vm171, %v4985, 0
      %v5079 = vsel %vm171, %v4986, 0
      %v5082 = vsel %vm171, %v4987, 0
      %v5085 = vsel %vm171, %v4988, 0
      %v5088 = vsel %vm488, %v4990, 0
      %5090 = vmatpush.msra.mxu0 0.0
      %5091 = vmatpush.msra.mxu0 0.0
      %5092 = vmatpush.msra.mxu0 0.0
      %5093 = vmatpush.msra.mxu0 0.0
      %5094 = vmatpush.msra.mxu0 0.0
      %5095 = vmatpush.msra.mxu0 0.0
      %5096 = vmatpush.msra.mxu0 0.0
      %5097 = vmatpush.msra.mxu0 0.0
      %5098 = vmatpush.msra.mxu0 0.0
      %5099 = vmatpush.msra.mxu0 0.0
      %5100 = vmatpush.msra.mxu0 0.0
      %5101 = vmatpush.msra.mxu0 0.0
      %5102 = vmatpush.msra.mxu0 0.0
      %5103 = vmatpush.msra.mxu0 0.0
      %5104 = vmatpush.msra.mxu0 0.0
      %5105 = vmatpush.msra.mxu0 %v5088
      %5106 = vmatmul.f32.gmra.mxu0 %v4992
      %v5107 = vpop.f32.mrf.mxu0
      %v5108 = vadd.f32 0.0, %v5107
      %5109 = vmatmul.f32.gmra.mxu0 %v4995
      %v5110 = vpop.f32.mrf.mxu0
      %v5111 = vadd.f32 0.0, %v5110
      %5112 = vmatmul.f32.gmra.mxu0 %v4998
      %v5113 = vpop.f32.mrf.mxu0
      %v5114 = vadd.f32 0.0, %v5113
      %5115 = vmatmul.f32.gmra.mxu0 %v5001
      %v5116 = vpop.f32.mrf.mxu0
      %v5117 = vadd.f32 0.0, %v5116
      %5118 = vmatmul.f32.gmra.mxu0 %v5004
      %v5119 = vpop.f32.mrf.mxu0
      %v5120 = vadd.f32 0.0, %v5119
      %5121 = vmatmul.f32.gmra.mxu0 %v5007
      %v5122 = vpop.f32.mrf.mxu0
      %v5123 = vadd.f32 0.0, %v5122
      %5124 = vmatmul.f32.gmra.mxu0 %v5010
      %v5125 = vpop.f32.mrf.mxu0
      %v5126 = vadd.f32 0.0, %v5125
      %5127 = vmatmul.f32.gmra.mxu0 %v5013
      %v5128 = vpop.f32.mrf.mxu0
      %v5129 = vadd.f32 0.0, %v5128
      %5130 = vmatmul.f32.gmra.mxu0 %v5016
      %v5131 = vpop.f32.mrf.mxu0
      %v5132 = vadd.f32 0.0, %v5131
      %5133 = vmatmul.f32.gmra.mxu0 %v5019
      %v5134 = vpop.f32.mrf.mxu0
      %v5135 = vadd.f32 0.0, %v5134
      %5136 = vmatmul.f32.gmra.mxu0 %v5022
      %v5137 = vpop.f32.mrf.mxu0
      %v5138 = vadd.f32 0.0, %v5137
      %5139 = vmatmul.f32.gmra.mxu0 %v5025
      %v5140 = vpop.f32.mrf.mxu0
      %v5141 = vadd.f32 0.0, %v5140
      %5142 = vmatmul.f32.gmra.mxu0 %v5028
      %v5143 = vpop.f32.mrf.mxu0
      %v5144 = vadd.f32 0.0, %v5143
      %5145 = vmatmul.f32.gmra.mxu0 %v5031
      %v5146 = vpop.f32.mrf.mxu0
      %v5147 = vadd.f32 0.0, %v5146
      %5148 = vmatmul.f32.gmra.mxu0 %v5034
      %v5149 = vpop.f32.mrf.mxu0
      %v5150 = vadd.f32 0.0, %v5149
      %5151 = vmatmul.f32.gmra.mxu0 %v5037
      %v5152 = vpop.f32.mrf.mxu0
      %v5153 = vadd.f32 0.0, %v5152
      %5154 = vmatmul.f32.gmra.mxu0 %v5040
      %v5155 = vpop.f32.mrf.mxu0
      %v5156 = vadd.f32 0.0, %v5155
      %5157 = vmatmul.f32.gmra.mxu0 %v5043
      %v5158 = vpop.f32.mrf.mxu0
      %v5159 = vadd.f32 0.0, %v5158
      %5160 = vmatmul.f32.gmra.mxu0 %v5046
      %v5161 = vpop.f32.mrf.mxu0
      %v5162 = vadd.f32 0.0, %v5161
      %5163 = vmatmul.f32.gmra.mxu0 %v5049
      %v5164 = vpop.f32.mrf.mxu0
      %v5165 = vadd.f32 0.0, %v5164
      %5166 = vmatmul.f32.gmra.mxu0 %v5052
      %v5167 = vpop.f32.mrf.mxu0
      %v5168 = vadd.f32 0.0, %v5167
      %5169 = vmatmul.f32.gmra.mxu0 %v5055
      %v5170 = vpop.f32.mrf.mxu0
      %v5171 = vadd.f32 0.0, %v5170
      %5172 = vmatmul.f32.gmra.mxu0 %v5058
      %v5173 = vpop.f32.mrf.mxu0
      %v5174 = vadd.f32 0.0, %v5173
      %5175 = vmatmul.f32.gmra.mxu0 %v5061
      %v5176 = vpop.f32.mrf.mxu0
      %v5177 = vadd.f32 0.0, %v5176
      %5178 = vmatmul.f32.gmra.mxu0 %v5064
      %v5179 = vpop.f32.mrf.mxu0
      %v5180 = vadd.f32 0.0, %v5179
      %5181 = vmatmul.f32.gmra.mxu0 %v5067
      %v5182 = vpop.f32.mrf.mxu0
      %v5183 = vadd.f32 0.0, %v5182
      %5184 = vmatmul.f32.gmra.mxu0 %v5070
      %v5185 = vpop.f32.mrf.mxu0
      %v5186 = vadd.f32 0.0, %v5185
      %5187 = vmatmul.f32.gmra.mxu0 %v5073
      %v5188 = vpop.f32.mrf.mxu0
      %v5189 = vadd.f32 0.0, %v5188
      %5190 = vmatmul.f32.gmra.mxu0 %v5076
      %v5191 = vpop.f32.mrf.mxu0
      %v5192 = vadd.f32 0.0, %v5191
      %5193 = vmatmul.f32.gmra.mxu0 %v5079
      %v5194 = vpop.f32.mrf.mxu0
      %v5195 = vadd.f32 0.0, %v5194
      %5196 = vmatmul.f32.gmra.mxu0 %v5082
      %v5197 = vpop.f32.mrf.mxu0
      %v5198 = vadd.f32 0.0, %v5197
      %5199 = vmatmul.f32.gmra.mxu0 %v5085
      %v5200 = vpop.f32.mrf.mxu0
      %v5201 = vadd.f32 0.0, %v5200
      %5202 = vdwg.mxu0
      %v5203 = vadd.f32 %v4925, %v5108
      %v5204 = vadd.f32 %v4926, %v5111
      %v5205 = vadd.f32 %v4927, %v5114
      %v5206 = vadd.f32 %v4928, %v5117
      %v5207 = vadd.f32 %v4929, %v5120
      %v5208 = vadd.f32 %v4930, %v5123
      %v5209 = vadd.f32 %v4931, %v5126
      %v5210 = vadd.f32 %v4932, %v5129
      %v5211 = vadd.f32 %v4933, %v5132
      %v5212 = vadd.f32 %v4934, %v5135
      %v5213 = vadd.f32 %v4935, %v5138
      %v5214 = vadd.f32 %v4936, %v5141
      %v5215 = vadd.f32 %v4937, %v5144
      %v5216 = vadd.f32 %v4938, %v5147
      %v5217 = vadd.f32 %v4939, %v5150
      %v5218 = vadd.f32 %v4940, %v5153
      %v5219 = vadd.f32 %v4941, %v5156
      %v5220 = vadd.f32 %v4942, %v5159
      %v5221 = vadd.f32 %v4943, %v5162
      %v5222 = vadd.f32 %v4944, %v5165
      %v5223 = vadd.f32 %v4945, %v5168
      %v5224 = vadd.f32 %v4946, %v5171
      %v5225 = vadd.f32 %v4947, %v5174
      %v5226 = vadd.f32 %v4948, %v5177
      %v5227 = vadd.f32 %v4949, %v5180
      %v5228 = vadd.f32 %v4950, %v5183
      %v5229 = vadd.f32 %v4951, %v5186
      %v5230 = vadd.f32 %v4952, %v5189
      %v5231 = vadd.f32 %v4953, %v5192
      %v5232 = vadd.f32 %v4954, %v5195
      %v5233 = vadd.f32 %v4955, %v5198
      %v5234 = vadd.f32 %v4956, %v5201
      %v5235 = vld [vmem:[%s165] sm:$0xff]
      %v5236 = vld [vmem:[%s165 + $0x8] sm:$0xff]
      %v5237 = vld [vmem:[%s165 + $0x10] sm:$0xff]
      %v5238 = vld [vmem:[%s165 + $0x18] sm:$0xff]
      %v5239 = vld [vmem:[%s165 + $0x20] sm:$0xff]
      %v5240 = vld [vmem:[%s165 + $0x28] sm:$0xff]
      %v5241 = vld [vmem:[%s165 + $0x30] sm:$0xff]
      %v5242 = vld [vmem:[%s165 + $0x38] sm:$0xff]
      %v5243 = vld [vmem:[%s165 + $0x40] sm:$0xff]
      %v5244 = vld [vmem:[%s165 + $0x48] sm:$0xff]
      %v5245 = vld [vmem:[%s165 + $0x50] sm:$0xff]
      %v5246 = vld [vmem:[%s165 + $0x58] sm:$0xff]
      %v5247 = vld [vmem:[%s165 + $0x60] sm:$0xff]
      %v5248 = vld [vmem:[%s165 + $0x68] sm:$0xff]
      %v5249 = vld [vmem:[%s165 + $0x70] sm:$0xff]
      %v5250 = vld [vmem:[%s165 + $0x78] sm:$0xff]
      %v5251 = vld [vmem:[%s165 + $0x80] sm:$0xff]
      %v5252 = vld [vmem:[%s165 + $0x88] sm:$0xff]
      %v5253 = vld [vmem:[%s165 + $0x90] sm:$0xff]
      %v5254 = vld [vmem:[%s165 + $0x98] sm:$0xff]
      %v5255 = vld [vmem:[%s165 + $0xa0] sm:$0xff]
      %v5256 = vld [vmem:[%s165 + $0xa8] sm:$0xff]
      %v5257 = vld [vmem:[%s165 + $0xb0] sm:$0xff]
      %v5258 = vld [vmem:[%s165 + $0xb8] sm:$0xff]
      %v5259 = vld [vmem:[%s165 + $0xc0] sm:$0xff]
      %v5260 = vld [vmem:[%s165 + $0xc8] sm:$0xff]
      %v5261 = vld [vmem:[%s165 + $0xd0] sm:$0xff]
      %v5262 = vld [vmem:[%s165 + $0xd8] sm:$0xff]
      %v5263 = vld [vmem:[%s165 + $0xe0] sm:$0xff]
      %v5264 = vld [vmem:[%s165 + $0xe8] sm:$0xff]
      %v5265 = vld [vmem:[%s165 + $0xf0] sm:$0xff]
      %v5266 = vld [vmem:[%s165 + $0xf8] sm:$0xff]
      %v5267 = vadd.f32 %v5203, %v5235
      %v5268 = vadd.f32 %v5204, %v5236
      %v5269 = vadd.f32 %v5205, %v5237
      %v5270 = vadd.f32 %v5206, %v5238
      %v5271 = vadd.f32 %v5207, %v5239
      %v5272 = vadd.f32 %v5208, %v5240
      %v5273 = vadd.f32 %v5209, %v5241
      %v5274 = vadd.f32 %v5210, %v5242
      %v5275 = vadd.f32 %v5211, %v5243
      %v5276 = vadd.f32 %v5212, %v5244
      %v5277 = vadd.f32 %v5213, %v5245
      %v5278 = vadd.f32 %v5214, %v5246
      %v5279 = vadd.f32 %v5215, %v5247
      %v5280 = vadd.f32 %v5216, %v5248
      %v5281 = vadd.f32 %v5217, %v5249
      %v5282 = vadd.f32 %v5218, %v5250
      %v5283 = vadd.f32 %v5219, %v5251
      %v5284 = vadd.f32 %v5220, %v5252
      %v5285 = vadd.f32 %v5221, %v5253
      %v5286 = vadd.f32 %v5222, %v5254
      %v5287 = vadd.f32 %v5223, %v5255
      %v5288 = vadd.f32 %v5224, %v5256
      %v5289 = vadd.f32 %v5225, %v5257
      %v5290 = vadd.f32 %v5226, %v5258
      %v5291 = vadd.f32 %v5227, %v5259
      %v5292 = vadd.f32 %v5228, %v5260
      %v5293 = vadd.f32 %v5229, %v5261
      %v5294 = vadd.f32 %v5230, %v5262
      %v5295 = vadd.f32 %v5231, %v5263
      %v5296 = vadd.f32 %v5232, %v5264
      %v5297 = vadd.f32 %v5233, %v5265
      %v5298 = vadd.f32 %v5234, %v5266
      %v5299 = vmax.f32 %v5267, 0.0
      %v5300 = vmax.f32 %v5268, 0.0
      %v5301 = vmax.f32 %v5269, 0.0
      %v5302 = vmax.f32 %v5270, 0.0
      %v5303 = vmax.f32 %v5271, 0.0
      %v5304 = vmax.f32 %v5272, 0.0
      %v5305 = vmax.f32 %v5273, 0.0
      %v5306 = vmax.f32 %v5274, 0.0
      %v5307 = vmax.f32 %v5275, 0.0
      %v5308 = vmax.f32 %v5276, 0.0
      %v5309 = vmax.f32 %v5277, 0.0
      %v5310 = vmax.f32 %v5278, 0.0
      %v5311 = vmax.f32 %v5279, 0.0
      %v5312 = vmax.f32 %v5280, 0.0
      %v5313 = vmax.f32 %v5281, 0.0
      %v5314 = vmax.f32 %v5282, 0.0
      %v5315 = vmax.f32 %v5283, 0.0
      %v5316 = vmax.f32 %v5284, 0.0
      %v5317 = vmax.f32 %v5285, 0.0
      %v5318 = vmax.f32 %v5286, 0.0
      %v5319 = vmax.f32 %v5287, 0.0
      %v5320 = vmax.f32 %v5288, 0.0
      %v5321 = vmax.f32 %v5289, 0.0
      %v5322 = vmax.f32 %v5290, 0.0
      %v5323 = vmax.f32 %v5291, 0.0
      %v5324 = vmax.f32 %v5292, 0.0
      %v5325 = vmax.f32 %v5293, 0.0
      %v5326 = vmax.f32 %v5294, 0.0
      %v5327 = vmax.f32 %v5295, 0.0
      %v5328 = vmax.f32 %v5296, 0.0
      %v5329 = vmax.f32 %v5297, 0.0
      %v5330 = vmax.f32 %v5298, 0.0
      %5331 = vst.msk [vmem:[%s170] sm:$0xff] %vm171, %v5299
      %5332 = vst.msk [vmem:[%s170 + $0x8] sm:$0xff] %vm171, %v5300
      %5333 = vst.msk [vmem:[%s170 + $0x10] sm:$0xff] %vm171, %v5301
      %5334 = vst.msk [vmem:[%s170 + $0x18] sm:$0xff] %vm171, %v5302
      %5335 = vst.msk [vmem:[%s170 + $0x20] sm:$0xff] %vm171, %v5303
      %5336 = vst.msk [vmem:[%s170 + $0x28] sm:$0xff] %vm171, %v5304
      %5337 = vst.msk [vmem:[%s170 + $0x30] sm:$0xff] %vm171, %v5305
      %5338 = vst.msk [vmem:[%s170 + $0x38] sm:$0xff] %vm171, %v5306
      %5339 = vst.msk [vmem:[%s170 + $0x40] sm:$0xff] %vm171, %v5307
      %5340 = vst.msk [vmem:[%s170 + $0x48] sm:$0xff] %vm171, %v5308
      %5341 = vst.msk [vmem:[%s170 + $0x50] sm:$0xff] %vm171, %v5309
      %5342 = vst.msk [vmem:[%s170 + $0x58] sm:$0xff] %vm171, %v5310
      %5343 = vst.msk [vmem:[%s170 + $0x60] sm:$0xff] %vm171, %v5311
      %5344 = vst.msk [vmem:[%s170 + $0x68] sm:$0xff] %vm171, %v5312
      %5345 = vst.msk [vmem:[%s170 + $0x70] sm:$0xff] %vm171, %v5313
      %5346 = vst.msk [vmem:[%s170 + $0x78] sm:$0xff] %vm171, %v5314
      %5347 = vst.msk [vmem:[%s170 + $0x80] sm:$0xff] %vm171, %v5315
      %5348 = vst.msk [vmem:[%s170 + $0x88] sm:$0xff] %vm171, %v5316
      %5349 = vst.msk [vmem:[%s170 + $0x90] sm:$0xff] %vm171, %v5317
      %5350 = vst.msk [vmem:[%s170 + $0x98] sm:$0xff] %vm171, %v5318
      %5351 = vst.msk [vmem:[%s170 + $0xa0] sm:$0xff] %vm171, %v5319
      %5352 = vst.msk [vmem:[%s170 + $0xa8] sm:$0xff] %vm171, %v5320
      %5353 = vst.msk [vmem:[%s170 + $0xb0] sm:$0xff] %vm171, %v5321
      %5354 = vst.msk [vmem:[%s170 + $0xb8] sm:$0xff] %vm171, %v5322
      %5355 = vst.msk [vmem:[%s170 + $0xc0] sm:$0xff] %vm171, %v5323
      %5356 = vst.msk [vmem:[%s170 + $0xc8] sm:$0xff] %vm171, %v5324
      %5357 = vst.msk [vmem:[%s170 + $0xd0] sm:$0xff] %vm171, %v5325
      %5358 = vst.msk [vmem:[%s170 + $0xd8] sm:$0xff] %vm171, %v5326
      %5359 = vst.msk [vmem:[%s170 + $0xe0] sm:$0xff] %vm171, %v5327
      %5360 = vst.msk [vmem:[%s170 + $0xe8] sm:$0xff] %vm171, %v5328
      %5361 = vst.msk [vmem:[%s170 + $0xf0] sm:$0xff] %vm171, %v5329
      %5362 = vst.msk [vmem:[%s170 + $0xf8] sm:$0xff] %vm171, %v5330
      %p5363 = scmp.lt.s32.totalorder %s14, 1
      %s5364 = scalar_select %p5363, %s14, 1
      %s5365 = smul.addr %s5364, 32
      %s5366 = smul.addr %s5365, 8
      %s5367 = scalar_lea.vmem %s3, %s5366
      // Predicated region
      $region33: #{tpu_custom_call.1} parent=31 // pred_check
        %p5368 = pneg %p100
      $region34: #{tpu_custom_call.1} parent=31 // pred_check_branch
        %5370 = sbr.rel (%p5368) target = $region36
      $region35: #{tpu_custom_call.1} parent=31 // pred_region
        _
      $region36: #{tpu_custom_call.1} parent=31 // pred_fallthru
        _
    $region32: #{tpu_custom_call.1} parent=5 // pred_fallthru
      _
    %p5371 = scmp.le.s32.totalorder 2, %s9
    // Predicated region
    $region37: #{tpu_custom_call.1} parent=5 // pred_check
      %p5372 = pneg %p5371
    $region38: #{tpu_custom_call.1} parent=5 // pred_check_branch
      %5374 = sbr.rel (%p5372) target = $region40
    $region39: #{tpu_custom_call.1} parent=5 // pred_region
      %s5375 = ssub.s32 %s9, 2
      // Predicated region
      $region41: #{tpu_custom_call.1} parent=39 // pred_check
        %p5376 = pneg %p106
      $region42: #{tpu_custom_call.1} parent=39 // pred_check_branch
        %5378 = sbr.rel (%p5376) target = $region44
      $region43: #{tpu_custom_call.1} parent=39 // pred_region
        %p5379 = scmp.lt.s32.totalorder %s15, 1
        %s5380 = scalar_select %p5379, %s15, 1
        %s5381 = smul.addr %s5380, 32
        %s5382 = smul.addr %s5381, 8
        %s5383 = scalar_lea.vmem %s3, %s5382
      $region44: #{tpu_custom_call.1} parent=39 // pred_fallthru
        _
    $region40: #{tpu_custom_call.1} parent=5 // pred_fallthru
      _
  $region6: #{tpu_custom_call.1} parent=0 // loop_footer
    %s13 = sadd.s32 1, %s9
  $region7: #{tpu_custom_call.1} parent=0 // loop_footer_branch
    %8 = sbr.rel target = $region3
  $region8: #{tpu_custom_call.1} parent=0 // loop_exit
    _

</llo_original>
